<compile_context>
chip_gen: v7x
topology: tpu7x:2x2x1
jax: 0.10.0
libtpu: 0.0.40
codegen_flags: <defaults>
</compile_context>

<pallas_src>
import functools

import numpy as np
import jax
import jax.numpy as jnp
from jax.experimental import pallas as pl
from jax.experimental.pallas import tpu as pltpu


# ----------------------------------------------------------------------------
# Pallas kernels
# ----------------------------------------------------------------------------

def _bilstm_layer_kernel(valid_ref, x_ref,
                         wih_f_ref, whh_f_ref, b_f_ref,
                         wih_b_ref, whh_b_ref, b_b_ref,
                         out_ref,
                         xg_f_ref, xg_b_ref,
                         *, seq_len, batch):
    """One fused bidirectional LSTM layer, whole sequence resident in VMEM.

    valid_ref: (T*B, 1) f32    1.0 where t < length[b], else 0.0
    x_ref:     (T*B, D) bf16   time-major flattened layer input
    wih_*:     (D, 4H)  bf16   W_ih^T per direction, gate order (i, f, o, g)
    whh_*:     (H, 4H)  bf16   W_hh^T per direction, gate order (i, f, o, g)
    b_*:       (1, 4H)  f32    b_ih + b_hh per direction
    out_ref:   (T*B, 2H) bf16  [:, :H]=fwd, [:, H:]=bwd, zero past length
    xg_*_ref:  (T*B, 4H) f32   VMEM scratch for the hoisted X @ Wih + b
    """
    T, B = seq_len, batch
    H = whh_f_ref.shape[0]

    # ---- hoisted input->gates projection: one big MXU matmul per direction.
    x = x_ref[...]                                             # (T*B, D) bf16
    xg_f_ref[...] = (jnp.dot(x, wih_f_ref[...],
                             preferred_element_type=jnp.float32) + b_f_ref[...])
    xg_b_ref[...] = (jnp.dot(x, wih_b_ref[...],
                             preferred_element_type=jnp.float32) + b_b_ref[...])

    valid = valid_ref[...]                                     # (T*B, 1) f32

    def cell(xg_t, h, c, whh_ref):
        # Whh read from VMEM per step (streamed), h carried in f32.
        gates = xg_t + jnp.dot(h.astype(jnp.bfloat16), whh_ref[...],
                               preferred_element_type=jnp.float32)   # (B, 4H)
        sig = jax.nn.sigmoid(gates[:, 0:3 * H])     # i, f, o in one EUP slab
        g_g = jnp.tanh(gates[:, 3 * H:4 * H])
        i_g = sig[:, 0:H]
        f_g = sig[:, H:2 * H]
        o_g = sig[:, 2 * H:3 * H]
        c_new = f_g * c + i_g * g_g
        h_new = o_g * jnp.tanh(c_new)
        return h_new, c_new

    zeros = jnp.zeros((B, H), jnp.float32)
    h_f, c_f = zeros, zeros
    h_b, c_b = zeros, zeros

    # T is small & static -> trace-time unroll (full LLO visibility).
    # TODO(synk): switch to lax.fori_loop(unroll=2..4) for long sequences.
    for s in range(T):
        t_f = s
        t_b = T - 1 - s
        r_f = t_f * B                     # static, sublane-aligned row offset
        r_b = t_b * B

        # Forward: state may evolve through padded steps (bias-only gates);
        # only the output write is masked, matching pad_packed_sequence.
        h_f, c_f = cell(xg_f_ref[r_f:r_f + B, :], h_f, c_f, whh_f_ref)
        out_ref[r_f:r_f + B, 0:H] = (h_f * valid[r_f:r_f + B, :]
                                     ).astype(out_ref.dtype)

        # Backward: state frozen at zero until t_b < length[b], which
        # reproduces PackedSequence backward processing exactly.
        h_b_new, c_b_new = cell(xg_b_ref[r_b:r_b + B, :], h_b, c_b, whh_b_ref)
        m_b = valid[r_b:r_b + B, :]                            # (B, 1) f32
        h_b = h_b_new * m_b + h_b * (1.0 - m_b)
        c_b = c_b_new * m_b + c_b * (1.0 - m_b)
        out_ref[r_b:r_b + B, H:2 * H] = h_b.astype(out_ref.dtype)  # 0 if inactive


def _fc_relu_loss_kernel(valid_ref, h_ref, w_ref, b_ref, yt_ref, chm_ref,
                         pred_ref, loss_ref):
    """Fused fc1 + ReLU + masked-L1 loss sum (single flattened MXU pass).

    valid_ref: (T*B, 1)  f32    time-validity mask
    h_ref:     (T*B, 2H) bf16   final LSTM layer output (already masked)
    w_ref:     (2H, Op)  bf16   fc1 weight^T, zero-padded to Op=128 columns
    b_ref:     (1, Op)   f32    fc1 bias, zero-padded
    yt_ref:    (T*B, Op) f32    truth, loss channels in [:, :C], rest zero
    chm_ref:   (1, Op)   f32    channel mask: 1.0 for loss channels, else 0.0
    pred_ref:  (T*B, Op) f32    predictions = ReLU(h @ W^T + b) (unmasked)
    loss_ref:  (1, 1) SMEM f32  sum over |pred * mask - truth|
    """
    y = (jnp.dot(h_ref[...], w_ref[...], preferred_element_type=jnp.float32)
         + b_ref[...])
    y = jnp.maximum(y, 0.0)                                    # (T*B, Op)
    pred_ref[...] = y
    masked = y * valid_ref[...] * chm_ref[...]                 # mask preds only
    loss_ref[0, 0] = jnp.sum(jnp.abs(masked - yt_ref[...]))


# ----------------------------------------------------------------------------
# Kernel wrappers
# ----------------------------------------------------------------------------

_VMEM = pl.BlockSpec(memory_space=pltpu.MemorySpace.VMEM)
_SMEM = pl.BlockSpec(memory_space=pltpu.MemorySpace.SMEM)
_CPARAMS = pltpu.CompilerParams(vmem_limit_bytes=32 * 1024 * 1024)


def _run_bilstm_layer(x_flat, valid_flat, layer_params, T, B_pad, H):
    kernel = functools.partial(_bilstm_layer_kernel, seq_len=T, batch=B_pad)
    return pl.pallas_call(
        kernel,
        out_shape=jax.ShapeDtypeStruct((T * B_pad, 2 * H), jnp.bfloat16),
        in_specs=[_VMEM] * 8,
        out_specs=_VMEM,
        scratch_shapes=[pltpu.VMEM((T * B_pad, 4 * H), jnp.float32),
                        pltpu.VMEM((T * B_pad, 4 * H), jnp.float32)],
        compiler_params=_CPARAMS,
    )(valid_flat, x_flat,
      layer_params["fwd"]["w_ih_t"], layer_params["fwd"]["w_hh_t"],
      layer_params["fwd"]["b"],
      layer_params["bwd"]["w_ih_t"], layer_params["bwd"]["w_hh_t"],
      layer_params["bwd"]["b"])


def _run_fc_relu_loss(h_flat, valid_flat, fc_w_t, fc_b, yt_flat, ch_mask):
    TB = h_flat.shape[0]
    O_pad = fc_w_t.shape[1]
    return pl.pallas_call(
        _fc_relu_loss_kernel,
        out_shape=(jax.ShapeDtypeStruct((TB, O_pad), jnp.float32),
                   jax.ShapeDtypeStruct((1, 1), jnp.float32)),
        in_specs=[_VMEM] * 6,
        out_specs=(_VMEM, _SMEM),
        compiler_params=_CPARAMS,
    )(valid_flat, h_flat, fc_w_t, fc_b, yt_flat, ch_mask)


# ----------------------------------------------------------------------------
# Full forward (PackedSequence emulated with padded input + lengths)
# ----------------------------------------------------------------------------

def bilstm_linear_forward(x_padded, lengths, padded_y_truth, pep_types, params,
                          n_layers, hidden_dim):
    """Equivalent of BiLSTMLinearPredictor.forward.

    Returns (predictions (B, T, output_dim), loss scalar).
    """
    B, T, _ = x_padded.shape
    out_dim = params["output_dim"]
    O_pad = params["fc_w_t"].shape[1]

    # Pad batch to a sublane multiple; padded rows get length 0 (fully masked).
    B_pad = ((B + 7) // 8) * 8
    pad_b = B_pad - B
    x_p = jnp.pad(x_padded, ((0, pad_b), (0, 0), (0, 0)))
    lens_p = jnp.pad(lengths.astype(jnp.int32), (0, pad_b))

    # One transpose + flatten to (T*B_pad, D); bf16 MXU input.
    x_flat = jnp.transpose(x_p, (1, 0, 2)).reshape(T * B_pad, -1
                                                   ).astype(jnp.bfloat16)

    # Validity mask computed once, in plain JAX (shared by every kernel).
    valid = (jnp.arange(T, dtype=jnp.int32)[:, None] < lens_p[None, :])
    valid_flat = valid.astype(jnp.float32).reshape(T * B_pad, 1)

    h = x_flat
    for l in range(n_layers):
        h = _run_bilstm_layer(h, valid_flat, params["lstm"][l], T, B_pad,
                              hidden_dim)
        # TODO(synk): inter-layer dropout skipped (inference / dropout=0.0)

    # mask_mae_loss channel selection (pep_types is a static Python list).
    C = padded_y_truth.shape[-1] if pep_types[0] == 2 else 4
    yt = jnp.pad(padded_y_truth[:, :, :C].astype(jnp.float32),
                 ((0, pad_b), (0, 0), (0, O_pad - C)))
    yt_flat = jnp.transpose(yt, (1, 0, 2)).reshape(T * B_pad, O_pad)
    ch_mask = (jnp.arange(O_pad) < C).astype(jnp.float32).reshape(1, O_pad)

    pred_flat, loss_sum = _run_fc_relu_loss(h, valid_flat,
                                            params["fc_w_t"], params["fc_b"],
                                            yt_flat, ch_mask)

    predictions = jnp.transpose(
        pred_flat.reshape(T, B_pad, O_pad)[:, :B, :out_dim], (1, 0, 2))
    # F.l1_loss default reduction='mean' over every element of (B, T, C).
    loss = loss_sum[0, 0] / jnp.float32(B * T * C)
    return predictions, loss


# ----------------------------------------------------------------------------
# Deterministic parameter construction (PyTorch-style shapes)
# ----------------------------------------------------------------------------

def make_params(key, input_dim, hidden_dim, output_dim, n_layers):
    keys = jax.random.split(key, 8 * n_layers + 2)
    ki = 0
    H = hidden_dim

    def unif(shape, k):
        nonlocal ki
        v = jax.random.uniform(keys[ki], shape, jnp.float32, -k, k)
        ki += 1
        return v

    def reorder_gates(w):
        # PyTorch gate row order (i, f, g, o) -> kernel order (i, f, o, g)
        return jnp.concatenate([w[0:H], w[H:2 * H], w[3 * H:4 * H],
                                w[2 * H:3 * H]], axis=0)

    k_lstm = 1.0 / np.sqrt(H)
    params = {"lstm": []}
    for l in range(n_layers):
        d_in = input_dim if l == 0 else 2 * H
        layer = {}
        for dname in ("fwd", "bwd"):
            w_ih = unif((4 * H, d_in), k_lstm)
            w_hh = unif((4 * H, H), k_lstm)
            b_ih = unif((4 * H,), k_lstm)
            b_hh = unif((4 * H,), k_lstm)
            layer[dname] = dict(
                w_ih_t=jnp.transpose(reorder_gates(w_ih)).astype(jnp.bfloat16),
                w_hh_t=jnp.transpose(reorder_gates(w_hh)).astype(jnp.bfloat16),
                b=reorder_gates(b_ih + b_hh).reshape(1, 4 * H),   # f32
            )
        params["lstm"].append(layer)

    k_fc = 1.0 / np.sqrt(2 * H)
    fc_w = unif((output_dim, 2 * H), k_fc)
    fc_b = unif((output_dim,), k_fc)
    O_pad = ((output_dim + 127) // 128) * 128      # lane-dense fc output
    fc_w_t = jnp.pad(jnp.transpose(fc_w), ((0, 0), (0, O_pad - output_dim)))
    params["fc_w_t"] = fc_w_t.astype(jnp.bfloat16)            # (2H, O_pad)
    params["fc_b"] = jnp.pad(fc_b, (0, O_pad - output_dim)
                             ).reshape(1, O_pad)              # (1, O_pad) f32
    params["output_dim"] = output_dim
    return params


# ----------------------------------------------------------------------------
# Main
# ----------------------------------------------------------------------------

if __name__ == "__main__":
    B, T = 2, 8
    # hidden_dim=128 keeps gate slices and the 2H output slab 128-lane aligned.
    INPUT_DIM, HIDDEN, OUT_DIM, N_LAYERS = 8, 128, 8, 2

    key = jax.random.PRNGKey(0)
    kp, kx, ky = jax.random.split(key, 3)

    params = make_params(kp, INPUT_DIM, HIDDEN, OUT_DIM, N_LAYERS)

    lengths = jnp.array([8, 5], dtype=jnp.int32)
    valid = (jnp.arange(T)[None, :] < lengths[:, None]).astype(jnp.float32)

    # padded inputs / targets (zeros past each sequence length, like packing)
    x_padded = jax.random.normal(kx, (B, T, INPUT_DIM), jnp.float32) * valid[:, :, None]
    padded_y_truth = jax.random.normal(ky, (B, T, OUT_DIM), jnp.float32) * valid[:, :, None]
    pep_types = [0, 0]   # != 2 -> loss uses first 4 output channels

    predictions, loss = bilstm_linear_forward(
        x_padded, lengths, padded_y_truth, pep_types, params,
        n_layers=N_LAYERS, hidden_dim=HIDDEN)

    jax.block_until_ready((predictions, loss))
    assert predictions.shape == (B, T, OUT_DIM)
    assert bool(jnp.isfinite(loss)) and bool(jnp.all(jnp.isfinite(predictions)))
    print("KERNEL_OK")
</pallas_src>

<mosaic_0001>
module attributes {stable_mosaic.version = 11 : i64} {
  func.func @_bilstm_layer_kernel(%arg0: memref<64x1xf32, #tpu.memory_space<vmem>>, %arg1: memref<64x8xbf16, #tpu.memory_space<vmem>>, %arg2: memref<8x512xbf16, #tpu.memory_space<vmem>>, %arg3: memref<128x512xbf16, #tpu.memory_space<vmem>>, %arg4: memref<1x512xf32, #tpu.memory_space<vmem>>, %arg5: memref<8x512xbf16, #tpu.memory_space<vmem>>, %arg6: memref<128x512xbf16, #tpu.memory_space<vmem>>, %arg7: memref<1x512xf32, #tpu.memory_space<vmem>>, %arg8: memref<64x256xbf16, #tpu.memory_space<vmem>>, %arg9: memref<64x512xf32, #tpu.memory_space<vmem>>, %arg10: memref<64x512xf32, #tpu.memory_space<vmem>>) attributes {dimension_semantics = [], scalar_prefetch = 0 : i64, scratch_operands = 2 : i64, tpu.core_type = #tpu.core_type<tc>} {
    %c0 = arith.constant 0 : index
    %c0_0 = arith.constant 0 : index
    %0 = vector.load %arg1[%c0, %c0_0] : memref<64x8xbf16, #tpu.memory_space<vmem>>, vector<64x8xbf16>
    %c0_1 = arith.constant 0 : index
    %c0_2 = arith.constant 0 : index
    %1 = vector.load %arg2[%c0_1, %c0_2] : memref<8x512xbf16, #tpu.memory_space<vmem>>, vector<8x512xbf16>
    %cst = arith.constant dense<0.000000e+00> : vector<64x512xf32>
    %2 = tpu.matmul %0, %1, %cst {dimension_numbers = #tpu.dot_dimension_numbers<[1], [0], [0], [1], [0, 0, 1, 1], [], []>} : vector<64x8xbf16>, vector<8x512xbf16>, vector<64x512xf32> -> vector<64x512xf32>
    %c0_3 = arith.constant 0 : index
    %c0_4 = arith.constant 0 : index
    %3 = vector.load %arg4[%c0_3, %c0_4] : memref<1x512xf32, #tpu.memory_space<vmem>>, vector<1x512xf32>
    %4 = vector.broadcast %3 : vector<1x512xf32> to vector<64x512xf32>
    %5 = arith.addf %2, %4 : vector<64x512xf32>
    %c0_5 = arith.constant 0 : index
    %c0_6 = arith.constant 0 : index
    %6 = vector.load %arg9[%c0_5, %c0_6] : memref<64x512xf32, #tpu.memory_space<vmem>>, vector<64x512xf32>
    tpu.vector_store %arg9[%c0_5, %c0_6], %5 {strides = array<i32>} : memref<64x512xf32, #tpu.memory_space<vmem>>, vector<64x512xf32>,
    %c0_7 = arith.constant 0 : index
    %c0_8 = arith.constant 0 : index
    %7 = vector.load %arg5[%c0_7, %c0_8] : memref<8x512xbf16, #tpu.memory_space<vmem>>, vector<8x512xbf16>
    %cst_9 = arith.constant dense<0.000000e+00> : vector<64x512xf32>
    %8 = tpu.matmul %0, %7, %cst_9 {dimension_numbers = #tpu.dot_dimension_numbers<[1], [0], [0], [1], [0, 0, 1, 1], [], []>} : vector<64x8xbf16>, vector<8x512xbf16>, vector<64x512xf32> -> vector<64x512xf32>
    %c0_10 = arith.constant 0 : index
    %c0_11 = arith.constant 0 : index
    %9 = vector.load %arg7[%c0_10, %c0_11] : memref<1x512xf32, #tpu.memory_space<vmem>>, vector<1x512xf32>
    %10 = vector.broadcast %9 : vector<1x512xf32> to vector<64x512xf32>
    %11 = arith.addf %8, %10 : vector<64x512xf32>
    %c0_12 = arith.constant 0 : index
    %c0_13 = arith.constant 0 : index
    %12 = vector.load %arg10[%c0_12, %c0_13] : memref<64x512xf32, #tpu.memory_space<vmem>>, vector<64x512xf32>
    tpu.vector_store %arg10[%c0_12, %c0_13], %11 {strides = array<i32>} : memref<64x512xf32, #tpu.memory_space<vmem>>, vector<64x512xf32>,
    %c0_14 = arith.constant 0 : index
    %c0_15 = arith.constant 0 : index
    %13 = vector.load %arg0[%c0_14, %c0_15] : memref<64x1xf32, #tpu.memory_space<vmem>>, vector<64x1xf32>
    %cst_16 = arith.constant 0.000000e+00 : f32
    %14 = vector.broadcast %cst_16 : f32 to vector<8x128xf32>
    %c0_17 = arith.constant 0 : index
    %c0_18 = arith.constant 0 : index
    %15 = vector.load %arg9[%c0_17, %c0_18] : memref<64x512xf32, #tpu.memory_space<vmem>>, vector<8x512xf32>
    %16 = arith.truncf %14 : vector<8x128xf32> to vector<8x128xbf16>
    %c0_19 = arith.constant 0 : index
    %c0_20 = arith.constant 0 : index
    %17 = vector.load %arg3[%c0_19, %c0_20] : memref<128x512xbf16, #tpu.memory_space<vmem>>, vector<128x512xbf16>
    %cst_21 = arith.constant dense<0.000000e+00> : vector<8x512xf32>
    %18 = tpu.matmul %16, %17, %cst_21 {dimension_numbers = #tpu.dot_dimension_numbers<[1], [0], [0], [1], [0, 0, 1, 1], [], []>} : vector<8x128xbf16>, vector<128x512xbf16>, vector<8x512xf32> -> vector<8x512xf32>
    %19 = arith.addf %15, %18 : vector<8x512xf32>
    %20 = vector.extract_strided_slice %19 {offsets = [0, 0], sizes = [8, 384], strides = [1, 1]} : vector<8x512xf32> to vector<8x384xf32>
    %21 = arith.negf %20 : vector<8x384xf32>
    %22 = math.exp %21 : vector<8x384xf32>
    %cst_22 = arith.constant 1.000000e+00 : f32
    %23 = vector.broadcast %cst_22 : f32 to vector<8x384xf32>
    %24 = arith.addf %23, %22 : vector<8x384xf32>
    %25 = arith.divf %23, %24 : vector<8x384xf32>
    %26 = vector.extract_strided_slice %19 {offsets = [0, 384], sizes = [8, 128], strides = [1, 1]} : vector<8x512xf32> to vector<8x128xf32>
    %27 = math.tanh %26 : vector<8x128xf32>
    %28 = vector.extract_strided_slice %25 {offsets = [0, 0], sizes = [8, 128], strides = [1, 1]} : vector<8x384xf32> to vector<8x128xf32>
    %29 = vector.extract_strided_slice %25 {offsets = [0, 128], sizes = [8, 128], strides = [1, 1]} : vector<8x384xf32> to vector<8x128xf32>
    %30 = vector.extract_strided_slice %25 {offsets = [0, 256], sizes = [8, 128], strides = [1, 1]} : vector<8x384xf32> to vector<8x128xf32>
    %31 = arith.mulf %29, %14 : vector<8x128xf32>
    %32 = arith.mulf %28, %27 : vector<8x128xf32>
    %33 = arith.addf %31, %32 : vector<8x128xf32>
    %34 = math.tanh %33 : vector<8x128xf32>
    %35 = arith.mulf %30, %34 : vector<8x128xf32>
    %36 = vector.extract_strided_slice %13 {offsets = [0, 0], sizes = [8, 1], strides = [1, 1]} : vector<64x1xf32> to vector<8x1xf32>
    %37 = vector.broadcast %36 : vector<8x1xf32> to vector<8x128xf32>
    %38 = arith.mulf %35, %37 : vector<8x128xf32>
    %39 = arith.truncf %38 : vector<8x128xf32> to vector<8x128xbf16>
    %c0_23 = arith.constant 0 : index
    %c0_24 = arith.constant 0 : index
    %40 = vector.load %arg8[%c0_23, %c0_24] : memref<64x256xbf16, #tpu.memory_space<vmem>>, vector<8x128xbf16>
    tpu.vector_store %arg8[%c0_23, %c0_24], %39 {strides = array<i32>} : memref<64x256xbf16, #tpu.memory_space<vmem>>, vector<8x128xbf16>,
    %c56 = arith.constant 56 : index
    %c0_25 = arith.constant 0 : index
    %41 = vector.load %arg10[%c56, %c0_25] : memref<64x512xf32, #tpu.memory_space<vmem>>, vector<8x512xf32>
    %42 = arith.truncf %14 : vector<8x128xf32> to vector<8x128xbf16>
    %c0_26 = arith.constant 0 : index
    %c0_27 = arith.constant 0 : index
    %43 = vector.load %arg6[%c0_26, %c0_27] : memref<128x512xbf16, #tpu.memory_space<vmem>>, vector<128x512xbf16>
    %cst_28 = arith.constant dense<0.000000e+00> : vector<8x512xf32>
    %44 = tpu.matmul %42, %43, %cst_28 {dimension_numbers = #tpu.dot_dimension_numbers<[1], [0], [0], [1], [0, 0, 1, 1], [], []>} : vector<8x128xbf16>, vector<128x512xbf16>, vector<8x512xf32> -> vector<8x512xf32>
    %45 = arith.addf %41, %44 : vector<8x512xf32>
    %46 = vector.extract_strided_slice %45 {offsets = [0, 0], sizes = [8, 384], strides = [1, 1]} : vector<8x512xf32> to vector<8x384xf32>
    %47 = arith.negf %46 : vector<8x384xf32>
    %48 = math.exp %47 : vector<8x384xf32>
    %cst_29 = arith.constant 1.000000e+00 : f32
    %49 = vector.broadcast %cst_29 : f32 to vector<8x384xf32>
    %50 = arith.addf %49, %48 : vector<8x384xf32>
    %51 = arith.divf %49, %50 : vector<8x384xf32>
    %52 = vector.extract_strided_slice %45 {offsets = [0, 384], sizes = [8, 128], strides = [1, 1]} : vector<8x512xf32> to vector<8x128xf32>
    %53 = math.tanh %52 : vector<8x128xf32>
    %54 = vector.extract_strided_slice %51 {offsets = [0, 0], sizes = [8, 128], strides = [1, 1]} : vector<8x384xf32> to vector<8x128xf32>
    %55 = vector.extract_strided_slice %51 {offsets = [0, 128], sizes = [8, 128], strides = [1, 1]} : vector<8x384xf32> to vector<8x128xf32>
    %56 = vector.extract_strided_slice %51 {offsets = [0, 256], sizes = [8, 128], strides = [1, 1]} : vector<8x384xf32> to vector<8x128xf32>
    %57 = arith.mulf %55, %14 : vector<8x128xf32>
    %58 = arith.mulf %54, %53 : vector<8x128xf32>
    %59 = arith.addf %57, %58 : vector<8x128xf32>
    %60 = math.tanh %59 : vector<8x128xf32>
    %61 = arith.mulf %56, %60 : vector<8x128xf32>
    %62 = vector.extract_strided_slice %13 {offsets = [56, 0], sizes = [8, 1], strides = [1, 1]} : vector<64x1xf32> to vector<8x1xf32>
    %63 = vector.broadcast %62 : vector<8x1xf32> to vector<8x128xf32>
    %64 = arith.mulf %61, %63 : vector<8x128xf32>
    %cst_30 = arith.constant 1.000000e+00 : f32
    %65 = vector.broadcast %cst_30 : f32 to vector<8x1xf32>
    %66 = arith.subf %65, %62 : vector<8x1xf32>
    %67 = vector.broadcast %66 : vector<8x1xf32> to vector<8x128xf32>
    %68 = arith.mulf %14, %67 : vector<8x128xf32>
    %69 = arith.addf %64, %68 : vector<8x128xf32>
    %70 = vector.broadcast %62 : vector<8x1xf32> to vector<8x128xf32>
    %71 = arith.mulf %59, %70 : vector<8x128xf32>
    %cst_31 = arith.constant 1.000000e+00 : f32
    %72 = vector.broadcast %cst_31 : f32 to vector<8x1xf32>
    %73 = arith.subf %72, %62 : vector<8x1xf32>
    %74 = vector.broadcast %73 : vector<8x1xf32> to vector<8x128xf32>
    %75 = arith.mulf %14, %74 : vector<8x128xf32>
    %76 = arith.addf %71, %75 : vector<8x128xf32>
    %77 = arith.truncf %69 : vector<8x128xf32> to vector<8x128xbf16>
    %c56_32 = arith.constant 56 : index
    %c128 = arith.constant 128 : index
    %78 = vector.load %arg8[%c56_32, %c128] : memref<64x256xbf16, #tpu.memory_space<vmem>>, vector<8x128xbf16>
    tpu.vector_store %arg8[%c56_32, %c128], %77 {strides = array<i32>} : memref<64x256xbf16, #tpu.memory_space<vmem>>, vector<8x128xbf16>,
    %c8 = arith.constant 8 : index
    %c0_33 = arith.constant 0 : index
    %79 = vector.load %arg9[%c8, %c0_33] : memref<64x512xf32, #tpu.memory_space<vmem>>, vector<8x512xf32>
    %80 = arith.truncf %35 : vector<8x128xf32> to vector<8x128xbf16>
    %c0_34 = arith.constant 0 : index
    %c0_35 = arith.constant 0 : index
    %81 = vector.load %arg3[%c0_34, %c0_35] : memref<128x512xbf16, #tpu.memory_space<vmem>>, vector<128x512xbf16>
    %cst_36 = arith.constant dense<0.000000e+00> : vector<8x512xf32>
    %82 = tpu.matmul %80, %81, %cst_36 {dimension_numbers = #tpu.dot_dimension_numbers<[1], [0], [0], [1], [0, 0, 1, 1], [], []>} : vector<8x128xbf16>, vector<128x512xbf16>, vector<8x512xf32> -> vector<8x512xf32>
    %83 = arith.addf %79, %82 : vector<8x512xf32>
    %84 = vector.extract_strided_slice %83 {offsets = [0, 0], sizes = [8, 384], strides = [1, 1]} : vector<8x512xf32> to vector<8x384xf32>
    %85 = arith.negf %84 : vector<8x384xf32>
    %86 = math.exp %85 : vector<8x384xf32>
    %cst_37 = arith.constant 1.000000e+00 : f32
    %87 = vector.broadcast %cst_37 : f32 to vector<8x384xf32>
    %88 = arith.addf %87, %86 : vector<8x384xf32>
    %89 = arith.divf %87, %88 : vector<8x384xf32>
    %90 = vector.extract_strided_slice %83 {offsets = [0, 384], sizes = [8, 128], strides = [1, 1]} : vector<8x512xf32> to vector<8x128xf32>
    %91 = math.tanh %90 : vector<8x128xf32>
    %92 = vector.extract_strided_slice %89 {offsets = [0, 0], sizes = [8, 128], strides = [1, 1]} : vector<8x384xf32> to vector<8x128xf32>
    %93 = vector.extract_strided_slice %89 {offsets = [0, 128], sizes = [8, 128], strides = [1, 1]} : vector<8x384xf32> to vector<8x128xf32>
    %94 = vector.extract_strided_slice %89 {offsets = [0, 256], sizes = [8, 128], strides = [1, 1]} : vector<8x384xf32> to vector<8x128xf32>
    %95 = arith.mulf %93, %33 : vector<8x128xf32>
    %96 = arith.mulf %92, %91 : vector<8x128xf32>
    %97 = arith.addf %95, %96 : vector<8x128xf32>
    %98 = math.tanh %97 : vector<8x128xf32>
    %99 = arith.mulf %94, %98 : vector<8x128xf32>
    %100 = vector.extract_strided_slice %13 {offsets = [8, 0], sizes = [8, 1], strides = [1, 1]} : vector<64x1xf32> to vector<8x1xf32>
    %101 = vector.broadcast %100 : vector<8x1xf32> to vector<8x128xf32>
    %102 = arith.mulf %99, %101 : vector<8x128xf32>
    %103 = arith.truncf %102 : vector<8x128xf32> to vector<8x128xbf16>
    %c8_38 = arith.constant 8 : index
    %c0_39 = arith.constant 0 : index
    %104 = vector.load %arg8[%c8_38, %c0_39] : memref<64x256xbf16, #tpu.memory_space<vmem>>, vector<8x128xbf16>
    tpu.vector_store %arg8[%c8_38, %c0_39], %103 {strides = array<i32>} : memref<64x256xbf16, #tpu.memory_space<vmem>>, vector<8x128xbf16>,
    %c48 = arith.constant 48 : index
    %c0_40 = arith.constant 0 : index
    %105 = vector.load %arg10[%c48, %c0_40] : memref<64x512xf32, #tpu.memory_space<vmem>>, vector<8x512xf32>
    %106 = arith.truncf %69 : vector<8x128xf32> to vector<8x128xbf16>
    %c0_41 = arith.constant 0 : index
    %c0_42 = arith.constant 0 : index
    %107 = vector.load %arg6[%c0_41, %c0_42] : memref<128x512xbf16, #tpu.memory_space<vmem>>, vector<128x512xbf16>
    %cst_43 = arith.constant dense<0.000000e+00> : vector<8x512xf32>
    %108 = tpu.matmul %106, %107, %cst_43 {dimension_numbers = #tpu.dot_dimension_numbers<[1], [0], [0], [1], [0, 0, 1, 1], [], []>} : vector<8x128xbf16>, vector<128x512xbf16>, vector<8x512xf32> -> vector<8x512xf32>
    %109 = arith.addf %105, %108 : vector<8x512xf32>
    %110 = vector.extract_strided_slice %109 {offsets = [0, 0], sizes = [8, 384], strides = [1, 1]} : vector<8x512xf32> to vector<8x384xf32>
    %111 = arith.negf %110 : vector<8x384xf32>
    %112 = math.exp %111 : vector<8x384xf32>
    %cst_44 = arith.constant 1.000000e+00 : f32
    %113 = vector.broadcast %cst_44 : f32 to vector<8x384xf32>
    %114 = arith.addf %113, %112 : vector<8x384xf32>
    %115 = arith.divf %113, %114 : vector<8x384xf32>
    %116 = vector.extract_strided_slice %109 {offsets = [0, 384], sizes = [8, 128], strides = [1, 1]} : vector<8x512xf32> to vector<8x128xf32>
    %117 = math.tanh %116 : vector<8x128xf32>
    %118 = vector.extract_strided_slice %115 {offsets = [0, 0], sizes = [8, 128], strides = [1, 1]} : vector<8x384xf32> to vector<8x128xf32>
    %119 = vector.extract_strided_slice %115 {offsets = [0, 128], sizes = [8, 128], strides = [1, 1]} : vector<8x384xf32> to vector<8x128xf32>
    %120 = vector.extract_strided_slice %115 {offsets = [0, 256], sizes = [8, 128], strides = [1, 1]} : vector<8x384xf32> to vector<8x128xf32>
    %121 = arith.mulf %119, %76 : vector<8x128xf32>
    %122 = arith.mulf %118, %117 : vector<8x128xf32>
    %123 = arith.addf %121, %122 : vector<8x128xf32>
    %124 = math.tanh %123 : vector<8x128xf32>
    %125 = arith.mulf %120, %124 : vector<8x128xf32>
    %126 = vector.extract_strided_slice %13 {offsets = [48, 0], sizes = [8, 1], strides = [1, 1]} : vector<64x1xf32> to vector<8x1xf32>
    %127 = vector.broadcast %126 : vector<8x1xf32> to vector<8x128xf32>
    %128 = arith.mulf %125, %127 : vector<8x128xf32>
    %cst_45 = arith.constant 1.000000e+00 : f32
    %129 = vector.broadcast %cst_45 : f32 to vector<8x1xf32>
    %130 = arith.subf %129, %126 : vector<8x1xf32>
    %131 = vector.broadcast %130 : vector<8x1xf32> to vector<8x128xf32>
    %132 = arith.mulf %69, %131 : vector<8x128xf32>
    %133 = arith.addf %128, %132 : vector<8x128xf32>
    %134 = vector.broadcast %126 : vector<8x1xf32> to vector<8x128xf32>
    %135 = arith.mulf %123, %134 : vector<8x128xf32>
    %cst_46 = arith.constant 1.000000e+00 : f32
    %136 = vector.broadcast %cst_46 : f32 to vector<8x1xf32>
    %137 = arith.subf %136, %126 : vector<8x1xf32>
    %138 = vector.broadcast %137 : vector<8x1xf32> to vector<8x128xf32>
    %139 = arith.mulf %76, %138 : vector<8x128xf32>
    %140 = arith.addf %135, %139 : vector<8x128xf32>
    %141 = arith.truncf %133 : vector<8x128xf32> to vector<8x128xbf16>
    %c48_47 = arith.constant 48 : index
    %c128_48 = arith.constant 128 : index
    %142 = vector.load %arg8[%c48_47, %c128_48] : memref<64x256xbf16, #tpu.memory_space<vmem>>, vector<8x128xbf16>
    tpu.vector_store %arg8[%c48_47, %c128_48], %141 {strides = array<i32>} : memref<64x256xbf16, #tpu.memory_space<vmem>>, vector<8x128xbf16>,
    %c16 = arith.constant 16 : index
    %c0_49 = arith.constant 0 : index
    %143 = vector.load %arg9[%c16, %c0_49] : memref<64x512xf32, #tpu.memory_space<vmem>>, vector<8x512xf32>
    %144 = arith.truncf %99 : vector<8x128xf32> to vector<8x128xbf16>
    %c0_50 = arith.constant 0 : index
    %c0_51 = arith.constant 0 : index
    %145 = vector.load %arg3[%c0_50, %c0_51] : memref<128x512xbf16, #tpu.memory_space<vmem>>, vector<128x512xbf16>
    %cst_52 = arith.constant dense<0.000000e+00> : vector<8x512xf32>
    %146 = tpu.matmul %144, %145, %cst_52 {dimension_numbers = #tpu.dot_dimension_numbers<[1], [0], [0], [1], [0, 0, 1, 1], [], []>} : vector<8x128xbf16>, vector<128x512xbf16>, vector<8x512xf32> -> vector<8x512xf32>
    %147 = arith.addf %143, %146 : vector<8x512xf32>
    %148 = vector.extract_strided_slice %147 {offsets = [0, 0], sizes = [8, 384], strides = [1, 1]} : vector<8x512xf32> to vector<8x384xf32>
    %149 = arith.negf %148 : vector<8x384xf32>
    %150 = math.exp %149 : vector<8x384xf32>
    %cst_53 = arith.constant 1.000000e+00 : f32
    %151 = vector.broadcast %cst_53 : f32 to vector<8x384xf32>
    %152 = arith.addf %151, %150 : vector<8x384xf32>
    %153 = arith.divf %151, %152 : vector<8x384xf32>
    %154 = vector.extract_strided_slice %147 {offsets = [0, 384], sizes = [8, 128], strides = [1, 1]} : vector<8x512xf32> to vector<8x128xf32>
    %155 = math.tanh %154 : vector<8x128xf32>
    %156 = vector.extract_strided_slice %153 {offsets = [0, 0], sizes = [8, 128], strides = [1, 1]} : vector<8x384xf32> to vector<8x128xf32>
    %157 = vector.extract_strided_slice %153 {offsets = [0, 128], sizes = [8, 128], strides = [1, 1]} : vector<8x384xf32> to vector<8x128xf32>
    %158 = vector.extract_strided_slice %153 {offsets = [0, 256], sizes = [8, 128], strides = [1, 1]} : vector<8x384xf32> to vector<8x128xf32>
    %159 = arith.mulf %157, %97 : vector<8x128xf32>
    %160 = arith.mulf %156, %155 : vector<8x128xf32>
    %161 = arith.addf %159, %160 : vector<8x128xf32>
    %162 = math.tanh %161 : vector<8x128xf32>
    %163 = arith.mulf %158, %162 : vector<8x128xf32>
    %164 = vector.extract_strided_slice %13 {offsets = [16, 0], sizes = [8, 1], strides = [1, 1]} : vector<64x1xf32> to vector<8x1xf32>
    %165 = vector.broadcast %164 : vector<8x1xf32> to vector<8x128xf32>
    %166 = arith.mulf %163, %165 : vector<8x128xf32>
    %167 = arith.truncf %166 : vector<8x128xf32> to vector<8x128xbf16>
    %c16_54 = arith.constant 16 : index
    %c0_55 = arith.constant 0 : index
    %168 = vector.load %arg8[%c16_54, %c0_55] : memref<64x256xbf16, #tpu.memory_space<vmem>>, vector<8x128xbf16>
    tpu.vector_store %arg8[%c16_54, %c0_55], %167 {strides = array<i32>} : memref<64x256xbf16, #tpu.memory_space<vmem>>, vector<8x128xbf16>,
    %c40 = arith.constant 40 : index
    %c0_56 = arith.constant 0 : index
    %169 = vector.load %arg10[%c40, %c0_56] : memref<64x512xf32, #tpu.memory_space<vmem>>, vector<8x512xf32>
    %170 = arith.truncf %133 : vector<8x128xf32> to vector<8x128xbf16>
    %c0_57 = arith.constant 0 : index
    %c0_58 = arith.constant 0 : index
    %171 = vector.load %arg6[%c0_57, %c0_58] : memref<128x512xbf16, #tpu.memory_space<vmem>>, vector<128x512xbf16>
    %cst_59 = arith.constant dense<0.000000e+00> : vector<8x512xf32>
    %172 = tpu.matmul %170, %171, %cst_59 {dimension_numbers = #tpu.dot_dimension_numbers<[1], [0], [0], [1], [0, 0, 1, 1], [], []>} : vector<8x128xbf16>, vector<128x512xbf16>, vector<8x512xf32> -> vector<8x512xf32>
    %173 = arith.addf %169, %172 : vector<8x512xf32>
    %174 = vector.extract_strided_slice %173 {offsets = [0, 0], sizes = [8, 384], strides = [1, 1]} : vector<8x512xf32> to vector<8x384xf32>
    %175 = arith.negf %174 : vector<8x384xf32>
    %176 = math.exp %175 : vector<8x384xf32>
    %cst_60 = arith.constant 1.000000e+00 : f32
    %177 = vector.broadcast %cst_60 : f32 to vector<8x384xf32>
    %178 = arith.addf %177, %176 : vector<8x384xf32>
    %179 = arith.divf %177, %178 : vector<8x384xf32>
    %180 = vector.extract_strided_slice %173 {offsets = [0, 384], sizes = [8, 128], strides = [1, 1]} : vector<8x512xf32> to vector<8x128xf32>
    %181 = math.tanh %180 : vector<8x128xf32>
    %182 = vector.extract_strided_slice %179 {offsets = [0, 0], sizes = [8, 128], strides = [1, 1]} : vector<8x384xf32> to vector<8x128xf32>
    %183 = vector.extract_strided_slice %179 {offsets = [0, 128], sizes = [8, 128], strides = [1, 1]} : vector<8x384xf32> to vector<8x128xf32>
    %184 = vector.extract_strided_slice %179 {offsets = [0, 256], sizes = [8, 128], strides = [1, 1]} : vector<8x384xf32> to vector<8x128xf32>
    %185 = arith.mulf %183, %140 : vector<8x128xf32>
    %186 = arith.mulf %182, %181 : vector<8x128xf32>
    %187 = arith.addf %185, %186 : vector<8x128xf32>
    %188 = math.tanh %187 : vector<8x128xf32>
    %189 = arith.mulf %184, %188 : vector<8x128xf32>
    %190 = vector.extract_strided_slice %13 {offsets = [40, 0], sizes = [8, 1], strides = [1, 1]} : vector<64x1xf32> to vector<8x1xf32>
    %191 = vector.broadcast %190 : vector<8x1xf32> to vector<8x128xf32>
    %192 = arith.mulf %189, %191 : vector<8x128xf32>
    %cst_61 = arith.constant 1.000000e+00 : f32
    %193 = vector.broadcast %cst_61 : f32 to vector<8x1xf32>
    %194 = arith.subf %193, %190 : vector<8x1xf32>
    %195 = vector.broadcast %194 : vector<8x1xf32> to vector<8x128xf32>
    %196 = arith.mulf %133, %195 : vector<8x128xf32>
    %197 = arith.addf %192, %196 : vector<8x128xf32>
    %198 = vector.broadcast %190 : vector<8x1xf32> to vector<8x128xf32>
    %199 = arith.mulf %187, %198 : vector<8x128xf32>
    %cst_62 = arith.constant 1.000000e+00 : f32
    %200 = vector.broadcast %cst_62 : f32 to vector<8x1xf32>
    %201 = arith.subf %200, %190 : vector<8x1xf32>
    %202 = vector.broadcast %201 : vector<8x1xf32> to vector<8x128xf32>
    %203 = arith.mulf %140, %202 : vector<8x128xf32>
    %204 = arith.addf %199, %203 : vector<8x128xf32>
    %205 = arith.truncf %197 : vector<8x128xf32> to vector<8x128xbf16>
    %c40_63 = arith.constant 40 : index
    %c128_64 = arith.constant 128 : index
    %206 = vector.load %arg8[%c40_63, %c128_64] : memref<64x256xbf16, #tpu.memory_space<vmem>>, vector<8x128xbf16>
    tpu.vector_store %arg8[%c40_63, %c128_64], %205 {strides = array<i32>} : memref<64x256xbf16, #tpu.memory_space<vmem>>, vector<8x128xbf16>,
    %c24 = arith.constant 24 : index
    %c0_65 = arith.constant 0 : index
    %207 = vector.load %arg9[%c24, %c0_65] : memref<64x512xf32, #tpu.memory_space<vmem>>, vector<8x512xf32>
    %208 = arith.truncf %163 : vector<8x128xf32> to vector<8x128xbf16>
    %c0_66 = arith.constant 0 : index
    %c0_67 = arith.constant 0 : index
    %209 = vector.load %arg3[%c0_66, %c0_67] : memref<128x512xbf16, #tpu.memory_space<vmem>>, vector<128x512xbf16>
    %cst_68 = arith.constant dense<0.000000e+00> : vector<8x512xf32>
    %210 = tpu.matmul %208, %209, %cst_68 {dimension_numbers = #tpu.dot_dimension_numbers<[1], [0], [0], [1], [0, 0, 1, 1], [], []>} : vector<8x128xbf16>, vector<128x512xbf16>, vector<8x512xf32> -> vector<8x512xf32>
    %211 = arith.addf %207, %210 : vector<8x512xf32>
    %212 = vector.extract_strided_slice %211 {offsets = [0, 0], sizes = [8, 384], strides = [1, 1]} : vector<8x512xf32> to vector<8x384xf32>
    %213 = arith.negf %212 : vector<8x384xf32>
    %214 = math.exp %213 : vector<8x384xf32>
    %cst_69 = arith.constant 1.000000e+00 : f32
    %215 = vector.broadcast %cst_69 : f32 to vector<8x384xf32>
    %216 = arith.addf %215, %214 : vector<8x384xf32>
    %217 = arith.divf %215, %216 : vector<8x384xf32>
    %218 = vector.extract_strided_slice %211 {offsets = [0, 384], sizes = [8, 128], strides = [1, 1]} : vector<8x512xf32> to vector<8x128xf32>
    %219 = math.tanh %218 : vector<8x128xf32>
    %220 = vector.extract_strided_slice %217 {offsets = [0, 0], sizes = [8, 128], strides = [1, 1]} : vector<8x384xf32> to vector<8x128xf32>
    %221 = vector.extract_strided_slice %217 {offsets = [0, 128], sizes = [8, 128], strides = [1, 1]} : vector<8x384xf32> to vector<8x128xf32>
    %222 = vector.extract_strided_slice %217 {offsets = [0, 256], sizes = [8, 128], strides = [1, 1]} : vector<8x384xf32> to vector<8x128xf32>
    %223 = arith.mulf %221, %161 : vector<8x128xf32>
    %224 = arith.mulf %220, %219 : vector<8x128xf32>
    %225 = arith.addf %223, %224 : vector<8x128xf32>
    %226 = math.tanh %225 : vector<8x128xf32>
    %227 = arith.mulf %222, %226 : vector<8x128xf32>
    %228 = vector.extract_strided_slice %13 {offsets = [24, 0], sizes = [8, 1], strides = [1, 1]} : vector<64x1xf32> to vector<8x1xf32>
    %229 = vector.broadcast %228 : vector<8x1xf32> to vector<8x128xf32>
    %230 = arith.mulf %227, %229 : vector<8x128xf32>
    %231 = arith.truncf %230 : vector<8x128xf32> to vector<8x128xbf16>
    %c24_70 = arith.constant 24 : index
    %c0_71 = arith.constant 0 : index
    %232 = vector.load %arg8[%c24_70, %c0_71] : memref<64x256xbf16, #tpu.memory_space<vmem>>, vector<8x128xbf16>
    tpu.vector_store %arg8[%c24_70, %c0_71], %231 {strides = array<i32>} : memref<64x256xbf16, #tpu.memory_space<vmem>>, vector<8x128xbf16>,
    %c32 = arith.constant 32 : index
    %c0_72 = arith.constant 0 : index
    %233 = vector.load %arg10[%c32, %c0_72] : memref<64x512xf32, #tpu.memory_space<vmem>>, vector<8x512xf32>
    %234 = arith.truncf %197 : vector<8x128xf32> to vector<8x128xbf16>
    %c0_73 = arith.constant 0 : index
    %c0_74 = arith.constant 0 : index
    %235 = vector.load %arg6[%c0_73, %c0_74] : memref<128x512xbf16, #tpu.memory_space<vmem>>, vector<128x512xbf16>
    %cst_75 = arith.constant dense<0.000000e+00> : vector<8x512xf32>
    %236 = tpu.matmul %234, %235, %cst_75 {dimension_numbers = #tpu.dot_dimension_numbers<[1], [0], [0], [1], [0, 0, 1, 1], [], []>} : vector<8x128xbf16>, vector<128x512xbf16>, vector<8x512xf32> -> vector<8x512xf32>
    %237 = arith.addf %233, %236 : vector<8x512xf32>
    %238 = vector.extract_strided_slice %237 {offsets = [0, 0], sizes = [8, 384], strides = [1, 1]} : vector<8x512xf32> to vector<8x384xf32>
    %239 = arith.negf %238 : vector<8x384xf32>
    %240 = math.exp %239 : vector<8x384xf32>
    %cst_76 = arith.constant 1.000000e+00 : f32
    %241 = vector.broadcast %cst_76 : f32 to vector<8x384xf32>
    %242 = arith.addf %241, %240 : vector<8x384xf32>
    %243 = arith.divf %241, %242 : vector<8x384xf32>
    %244 = vector.extract_strided_slice %237 {offsets = [0, 384], sizes = [8, 128], strides = [1, 1]} : vector<8x512xf32> to vector<8x128xf32>
    %245 = math.tanh %244 : vector<8x128xf32>
    %246 = vector.extract_strided_slice %243 {offsets = [0, 0], sizes = [8, 128], strides = [1, 1]} : vector<8x384xf32> to vector<8x128xf32>
    %247 = vector.extract_strided_slice %243 {offsets = [0, 128], sizes = [8, 128], strides = [1, 1]} : vector<8x384xf32> to vector<8x128xf32>
    %248 = vector.extract_strided_slice %243 {offsets = [0, 256], sizes = [8, 128], strides = [1, 1]} : vector<8x384xf32> to vector<8x128xf32>
    %249 = arith.mulf %247, %204 : vector<8x128xf32>
    %250 = arith.mulf %246, %245 : vector<8x128xf32>
    %251 = arith.addf %249, %250 : vector<8x128xf32>
    %252 = math.tanh %251 : vector<8x128xf32>
    %253 = arith.mulf %248, %252 : vector<8x128xf32>
    %254 = vector.extract_strided_slice %13 {offsets = [32, 0], sizes = [8, 1], strides = [1, 1]} : vector<64x1xf32> to vector<8x1xf32>
    %255 = vector.broadcast %254 : vector<8x1xf32> to vector<8x128xf32>
    %256 = arith.mulf %253, %255 : vector<8x128xf32>
    %cst_77 = arith.constant 1.000000e+00 : f32
    %257 = vector.broadcast %cst_77 : f32 to vector<8x1xf32>
    %258 = arith.subf %257, %254 : vector<8x1xf32>
    %259 = vector.broadcast %258 : vector<8x1xf32> to vector<8x128xf32>
    %260 = arith.mulf %197, %259 : vector<8x128xf32>
    %261 = arith.addf %256, %260 : vector<8x128xf32>
    %262 = vector.broadcast %254 : vector<8x1xf32> to vector<8x128xf32>
    %263 = arith.mulf %251, %262 : vector<8x128xf32>
    %cst_78 = arith.constant 1.000000e+00 : f32
    %264 = vector.broadcast %cst_78 : f32 to vector<8x1xf32>
    %265 = arith.subf %264, %254 : vector<8x1xf32>
    %266 = vector.broadcast %265 : vector<8x1xf32> to vector<8x128xf32>
    %267 = arith.mulf %204, %266 : vector<8x128xf32>
    %268 = arith.addf %263, %267 : vector<8x128xf32>
    %269 = arith.truncf %261 : vector<8x128xf32> to vector<8x128xbf16>
    %c32_79 = arith.constant 32 : index
    %c128_80 = arith.constant 128 : index
    %270 = vector.load %arg8[%c32_79, %c128_80] : memref<64x256xbf16, #tpu.memory_space<vmem>>, vector<8x128xbf16>
    tpu.vector_store %arg8[%c32_79, %c128_80], %269 {strides = array<i32>} : memref<64x256xbf16, #tpu.memory_space<vmem>>, vector<8x128xbf16>,
    %c32_81 = arith.constant 32 : index
    %c0_82 = arith.constant 0 : index
    %271 = vector.load %arg9[%c32_81, %c0_82] : memref<64x512xf32, #tpu.memory_space<vmem>>, vector<8x512xf32>
    %272 = arith.truncf %227 : vector<8x128xf32> to vector<8x128xbf16>
    %c0_83 = arith.constant 0 : index
    %c0_84 = arith.constant 0 : index
    %273 = vector.load %arg3[%c0_83, %c0_84] : memref<128x512xbf16, #tpu.memory_space<vmem>>, vector<128x512xbf16>
    %cst_85 = arith.constant dense<0.000000e+00> : vector<8x512xf32>
    %274 = tpu.matmul %272, %273, %cst_85 {dimension_numbers = #tpu.dot_dimension_numbers<[1], [0], [0], [1], [0, 0, 1, 1], [], []>} : vector<8x128xbf16>, vector<128x512xbf16>, vector<8x512xf32> -> vector<8x512xf32>
    %275 = arith.addf %271, %274 : vector<8x512xf32>
    %276 = vector.extract_strided_slice %275 {offsets = [0, 0], sizes = [8, 384], strides = [1, 1]} : vector<8x512xf32> to vector<8x384xf32>
    %277 = arith.negf %276 : vector<8x384xf32>
    %278 = math.exp %277 : vector<8x384xf32>
    %cst_86 = arith.constant 1.000000e+00 : f32
    %279 = vector.broadcast %cst_86 : f32 to vector<8x384xf32>
    %280 = arith.addf %279, %278 : vector<8x384xf32>
    %281 = arith.divf %279, %280 : vector<8x384xf32>
    %282 = vector.extract_strided_slice %275 {offsets = [0, 384], sizes = [8, 128], strides = [1, 1]} : vector<8x512xf32> to vector<8x128xf32>
    %283 = math.tanh %282 : vector<8x128xf32>
    %284 = vector.extract_strided_slice %281 {offsets = [0, 0], sizes = [8, 128], strides = [1, 1]} : vector<8x384xf32> to vector<8x128xf32>
    %285 = vector.extract_strided_slice %281 {offsets = [0, 128], sizes = [8, 128], strides = [1, 1]} : vector<8x384xf32> to vector<8x128xf32>
    %286 = vector.extract_strided_slice %281 {offsets = [0, 256], sizes = [8, 128], strides = [1, 1]} : vector<8x384xf32> to vector<8x128xf32>
    %287 = arith.mulf %285, %225 : vector<8x128xf32>
    %288 = arith.mulf %284, %283 : vector<8x128xf32>
    %289 = arith.addf %287, %288 : vector<8x128xf32>
    %290 = math.tanh %289 : vector<8x128xf32>
    %291 = arith.mulf %286, %290 : vector<8x128xf32>
    %292 = vector.extract_strided_slice %13 {offsets = [32, 0], sizes = [8, 1], strides = [1, 1]} : vector<64x1xf32> to vector<8x1xf32>
    %293 = vector.broadcast %292 : vector<8x1xf32> to vector<8x128xf32>
    %294 = arith.mulf %291, %293 : vector<8x128xf32>
    %295 = arith.truncf %294 : vector<8x128xf32> to vector<8x128xbf16>
    %c32_87 = arith.constant 32 : index
    %c0_88 = arith.constant 0 : index
    %296 = vector.load %arg8[%c32_87, %c0_88] : memref<64x256xbf16, #tpu.memory_space<vmem>>, vector<8x128xbf16>
    tpu.vector_store %arg8[%c32_87, %c0_88], %295 {strides = array<i32>} : memref<64x256xbf16, #tpu.memory_space<vmem>>, vector<8x128xbf16>,
    %c24_89 = arith.constant 24 : index
    %c0_90 = arith.constant 0 : index
    %297 = vector.load %arg10[%c24_89, %c0_90] : memref<64x512xf32, #tpu.memory_space<vmem>>, vector<8x512xf32>
    %298 = arith.truncf %261 : vector<8x128xf32> to vector<8x128xbf16>
    %c0_91 = arith.constant 0 : index
    %c0_92 = arith.constant 0 : index
    %299 = vector.load %arg6[%c0_91, %c0_92] : memref<128x512xbf16, #tpu.memory_space<vmem>>, vector<128x512xbf16>
    %cst_93 = arith.constant dense<0.000000e+00> : vector<8x512xf32>
    %300 = tpu.matmul %298, %299, %cst_93 {dimension_numbers = #tpu.dot_dimension_numbers<[1], [0], [0], [1], [0, 0, 1, 1], [], []>} : vector<8x128xbf16>, vector<128x512xbf16>, vector<8x512xf32> -> vector<8x512xf32>
    %301 = arith.addf %297, %300 : vector<8x512xf32>
    %302 = vector.extract_strided_slice %301 {offsets = [0, 0], sizes = [8, 384], strides = [1, 1]} : vector<8x512xf32> to vector<8x384xf32>
    %303 = arith.negf %302 : vector<8x384xf32>
    %304 = math.exp %303 : vector<8x384xf32>
    %cst_94 = arith.constant 1.000000e+00 : f32
    %305 = vector.broadcast %cst_94 : f32 to vector<8x384xf32>
    %306 = arith.addf %305, %304 : vector<8x384xf32>
    %307 = arith.divf %305, %306 : vector<8x384xf32>
    %308 = vector.extract_strided_slice %301 {offsets = [0, 384], sizes = [8, 128], strides = [1, 1]} : vector<8x512xf32> to vector<8x128xf32>
    %309 = math.tanh %308 : vector<8x128xf32>
    %310 = vector.extract_strided_slice %307 {offsets = [0, 0], sizes = [8, 128], strides = [1, 1]} : vector<8x384xf32> to vector<8x128xf32>
    %311 = vector.extract_strided_slice %307 {offsets = [0, 128], sizes = [8, 128], strides = [1, 1]} : vector<8x384xf32> to vector<8x128xf32>
    %312 = vector.extract_strided_slice %307 {offsets = [0, 256], sizes = [8, 128], strides = [1, 1]} : vector<8x384xf32> to vector<8x128xf32>
    %313 = arith.mulf %311, %268 : vector<8x128xf32>
    %314 = arith.mulf %310, %309 : vector<8x128xf32>
    %315 = arith.addf %313, %314 : vector<8x128xf32>
    %316 = math.tanh %315 : vector<8x128xf32>
    %317 = arith.mulf %312, %316 : vector<8x128xf32>
    %318 = vector.extract_strided_slice %13 {offsets = [24, 0], sizes = [8, 1], strides = [1, 1]} : vector<64x1xf32> to vector<8x1xf32>
    %319 = vector.broadcast %318 : vector<8x1xf32> to vector<8x128xf32>
    %320 = arith.mulf %317, %319 : vector<8x128xf32>
    %cst_95 = arith.constant 1.000000e+00 : f32
    %321 = vector.broadcast %cst_95 : f32 to vector<8x1xf32>
    %322 = arith.subf %321, %318 : vector<8x1xf32>
    %323 = vector.broadcast %322 : vector<8x1xf32> to vector<8x128xf32>
    %324 = arith.mulf %261, %323 : vector<8x128xf32>
    %325 = arith.addf %320, %324 : vector<8x128xf32>
    %326 = vector.broadcast %318 : vector<8x1xf32> to vector<8x128xf32>
    %327 = arith.mulf %315, %326 : vector<8x128xf32>
    %cst_96 = arith.constant 1.000000e+00 : f32
    %328 = vector.broadcast %cst_96 : f32 to vector<8x1xf32>
    %329 = arith.subf %328, %318 : vector<8x1xf32>
    %330 = vector.broadcast %329 : vector<8x1xf32> to vector<8x128xf32>
    %331 = arith.mulf %268, %330 : vector<8x128xf32>
    %332 = arith.addf %327, %331 : vector<8x128xf32>
    %333 = arith.truncf %325 : vector<8x128xf32> to vector<8x128xbf16>
    %c24_97 = arith.constant 24 : index
    %c128_98 = arith.constant 128 : index
    %334 = vector.load %arg8[%c24_97, %c128_98] : memref<64x256xbf16, #tpu.memory_space<vmem>>, vector<8x128xbf16>
    tpu.vector_store %arg8[%c24_97, %c128_98], %333 {strides = array<i32>} : memref<64x256xbf16, #tpu.memory_space<vmem>>, vector<8x128xbf16>,
    %c40_99 = arith.constant 40 : index
    %c0_100 = arith.constant 0 : index
    %335 = vector.load %arg9[%c40_99, %c0_100] : memref<64x512xf32, #tpu.memory_space<vmem>>, vector<8x512xf32>
    %336 = arith.truncf %291 : vector<8x128xf32> to vector<8x128xbf16>
    %c0_101 = arith.constant 0 : index
    %c0_102 = arith.constant 0 : index
    %337 = vector.load %arg3[%c0_101, %c0_102] : memref<128x512xbf16, #tpu.memory_space<vmem>>, vector<128x512xbf16>
    %cst_103 = arith.constant dense<0.000000e+00> : vector<8x512xf32>
    %338 = tpu.matmul %336, %337, %cst_103 {dimension_numbers = #tpu.dot_dimension_numbers<[1], [0], [0], [1], [0, 0, 1, 1], [], []>} : vector<8x128xbf16>, vector<128x512xbf16>, vector<8x512xf32> -> vector<8x512xf32>
    %339 = arith.addf %335, %338 : vector<8x512xf32>
    %340 = vector.extract_strided_slice %339 {offsets = [0, 0], sizes = [8, 384], strides = [1, 1]} : vector<8x512xf32> to vector<8x384xf32>
    %341 = arith.negf %340 : vector<8x384xf32>
    %342 = math.exp %341 : vector<8x384xf32>
    %cst_104 = arith.constant 1.000000e+00 : f32
    %343 = vector.broadcast %cst_104 : f32 to vector<8x384xf32>
    %344 = arith.addf %343, %342 : vector<8x384xf32>
    %345 = arith.divf %343, %344 : vector<8x384xf32>
    %346 = vector.extract_strided_slice %339 {offsets = [0, 384], sizes = [8, 128], strides = [1, 1]} : vector<8x512xf32> to vector<8x128xf32>
    %347 = math.tanh %346 : vector<8x128xf32>
    %348 = vector.extract_strided_slice %345 {offsets = [0, 0], sizes = [8, 128], strides = [1, 1]} : vector<8x384xf32> to vector<8x128xf32>
    %349 = vector.extract_strided_slice %345 {offsets = [0, 128], sizes = [8, 128], strides = [1, 1]} : vector<8x384xf32> to vector<8x128xf32>
    %350 = vector.extract_strided_slice %345 {offsets = [0, 256], sizes = [8, 128], strides = [1, 1]} : vector<8x384xf32> to vector<8x128xf32>
    %351 = arith.mulf %349, %289 : vector<8x128xf32>
    %352 = arith.mulf %348, %347 : vector<8x128xf32>
    %353 = arith.addf %351, %352 : vector<8x128xf32>
    %354 = math.tanh %353 : vector<8x128xf32>
    %355 = arith.mulf %350, %354 : vector<8x128xf32>
    %356 = vector.extract_strided_slice %13 {offsets = [40, 0], sizes = [8, 1], strides = [1, 1]} : vector<64x1xf32> to vector<8x1xf32>
    %357 = vector.broadcast %356 : vector<8x1xf32> to vector<8x128xf32>
    %358 = arith.mulf %355, %357 : vector<8x128xf32>
    %359 = arith.truncf %358 : vector<8x128xf32> to vector<8x128xbf16>
    %c40_105 = arith.constant 40 : index
    %c0_106 = arith.constant 0 : index
    %360 = vector.load %arg8[%c40_105, %c0_106] : memref<64x256xbf16, #tpu.memory_space<vmem>>, vector<8x128xbf16>
    tpu.vector_store %arg8[%c40_105, %c0_106], %359 {strides = array<i32>} : memref<64x256xbf16, #tpu.memory_space<vmem>>, vector<8x128xbf16>,
    %c16_107 = arith.constant 16 : index
    %c0_108 = arith.constant 0 : index
    %361 = vector.load %arg10[%c16_107, %c0_108] : memref<64x512xf32, #tpu.memory_space<vmem>>, vector<8x512xf32>
    %362 = arith.truncf %325 : vector<8x128xf32> to vector<8x128xbf16>
    %c0_109 = arith.constant 0 : index
    %c0_110 = arith.constant 0 : index
    %363 = vector.load %arg6[%c0_109, %c0_110] : memref<128x512xbf16, #tpu.memory_space<vmem>>, vector<128x512xbf16>
    %cst_111 = arith.constant dense<0.000000e+00> : vector<8x512xf32>
    %364 = tpu.matmul %362, %363, %cst_111 {dimension_numbers = #tpu.dot_dimension_numbers<[1], [0], [0], [1], [0, 0, 1, 1], [], []>} : vector<8x128xbf16>, vector<128x512xbf16>, vector<8x512xf32> -> vector<8x512xf32>
    %365 = arith.addf %361, %364 : vector<8x512xf32>
    %366 = vector.extract_strided_slice %365 {offsets = [0, 0], sizes = [8, 384], strides = [1, 1]} : vector<8x512xf32> to vector<8x384xf32>
    %367 = arith.negf %366 : vector<8x384xf32>
    %368 = math.exp %367 : vector<8x384xf32>
    %cst_112 = arith.constant 1.000000e+00 : f32
    %369 = vector.broadcast %cst_112 : f32 to vector<8x384xf32>
    %370 = arith.addf %369, %368 : vector<8x384xf32>
    %371 = arith.divf %369, %370 : vector<8x384xf32>
    %372 = vector.extract_strided_slice %365 {offsets = [0, 384], sizes = [8, 128], strides = [1, 1]} : vector<8x512xf32> to vector<8x128xf32>
    %373 = math.tanh %372 : vector<8x128xf32>
    %374 = vector.extract_strided_slice %371 {offsets = [0, 0], sizes = [8, 128], strides = [1, 1]} : vector<8x384xf32> to vector<8x128xf32>
    %375 = vector.extract_strided_slice %371 {offsets = [0, 128], sizes = [8, 128], strides = [1, 1]} : vector<8x384xf32> to vector<8x128xf32>
    %376 = vector.extract_strided_slice %371 {offsets = [0, 256], sizes = [8, 128], strides = [1, 1]} : vector<8x384xf32> to vector<8x128xf32>
    %377 = arith.mulf %375, %332 : vector<8x128xf32>
    %378 = arith.mulf %374, %373 : vector<8x128xf32>
    %379 = arith.addf %377, %378 : vector<8x128xf32>
    %380 = math.tanh %379 : vector<8x128xf32>
    %381 = arith.mulf %376, %380 : vector<8x128xf32>
    %382 = vector.extract_strided_slice %13 {offsets = [16, 0], sizes = [8, 1], strides = [1, 1]} : vector<64x1xf32> to vector<8x1xf32>
    %383 = vector.broadcast %382 : vector<8x1xf32> to vector<8x128xf32>
    %384 = arith.mulf %381, %383 : vector<8x128xf32>
    %cst_113 = arith.constant 1.000000e+00 : f32
    %385 = vector.broadcast %cst_113 : f32 to vector<8x1xf32>
    %386 = arith.subf %385, %382 : vector<8x1xf32>
    %387 = vector.broadcast %386 : vector<8x1xf32> to vector<8x128xf32>
    %388 = arith.mulf %325, %387 : vector<8x128xf32>
    %389 = arith.addf %384, %388 : vector<8x128xf32>
    %390 = vector.broadcast %382 : vector<8x1xf32> to vector<8x128xf32>
    %391 = arith.mulf %379, %390 : vector<8x128xf32>
    %cst_114 = arith.constant 1.000000e+00 : f32
    %392 = vector.broadcast %cst_114 : f32 to vector<8x1xf32>
    %393 = arith.subf %392, %382 : vector<8x1xf32>
    %394 = vector.broadcast %393 : vector<8x1xf32> to vector<8x128xf32>
    %395 = arith.mulf %332, %394 : vector<8x128xf32>
    %396 = arith.addf %391, %395 : vector<8x128xf32>
    %397 = arith.truncf %389 : vector<8x128xf32> to vector<8x128xbf16>
    %c16_115 = arith.constant 16 : index
    %c128_116 = arith.constant 128 : index
    %398 = vector.load %arg8[%c16_115, %c128_116] : memref<64x256xbf16, #tpu.memory_space<vmem>>, vector<8x128xbf16>
    tpu.vector_store %arg8[%c16_115, %c128_116], %397 {strides = array<i32>} : memref<64x256xbf16, #tpu.memory_space<vmem>>, vector<8x128xbf16>,
    %c48_117 = arith.constant 48 : index
    %c0_118 = arith.constant 0 : index
    %399 = vector.load %arg9[%c48_117, %c0_118] : memref<64x512xf32, #tpu.memory_space<vmem>>, vector<8x512xf32>
    %400 = arith.truncf %355 : vector<8x128xf32> to vector<8x128xbf16>
    %c0_119 = arith.constant 0 : index
    %c0_120 = arith.constant 0 : index
    %401 = vector.load %arg3[%c0_119, %c0_120] : memref<128x512xbf16, #tpu.memory_space<vmem>>, vector<128x512xbf16>
    %cst_121 = arith.constant dense<0.000000e+00> : vector<8x512xf32>
    %402 = tpu.matmul %400, %401, %cst_121 {dimension_numbers = #tpu.dot_dimension_numbers<[1], [0], [0], [1], [0, 0, 1, 1], [], []>} : vector<8x128xbf16>, vector<128x512xbf16>, vector<8x512xf32> -> vector<8x512xf32>
    %403 = arith.addf %399, %402 : vector<8x512xf32>
    %404 = vector.extract_strided_slice %403 {offsets = [0, 0], sizes = [8, 384], strides = [1, 1]} : vector<8x512xf32> to vector<8x384xf32>
    %405 = arith.negf %404 : vector<8x384xf32>
    %406 = math.exp %405 : vector<8x384xf32>
    %cst_122 = arith.constant 1.000000e+00 : f32
    %407 = vector.broadcast %cst_122 : f32 to vector<8x384xf32>
    %408 = arith.addf %407, %406 : vector<8x384xf32>
    %409 = arith.divf %407, %408 : vector<8x384xf32>
    %410 = vector.extract_strided_slice %403 {offsets = [0, 384], sizes = [8, 128], strides = [1, 1]} : vector<8x512xf32> to vector<8x128xf32>
    %411 = math.tanh %410 : vector<8x128xf32>
    %412 = vector.extract_strided_slice %409 {offsets = [0, 0], sizes = [8, 128], strides = [1, 1]} : vector<8x384xf32> to vector<8x128xf32>
    %413 = vector.extract_strided_slice %409 {offsets = [0, 128], sizes = [8, 128], strides = [1, 1]} : vector<8x384xf32> to vector<8x128xf32>
    %414 = vector.extract_strided_slice %409 {offsets = [0, 256], sizes = [8, 128], strides = [1, 1]} : vector<8x384xf32> to vector<8x128xf32>
    %415 = arith.mulf %413, %353 : vector<8x128xf32>
    %416 = arith.mulf %412, %411 : vector<8x128xf32>
    %417 = arith.addf %415, %416 : vector<8x128xf32>
    %418 = math.tanh %417 : vector<8x128xf32>
    %419 = arith.mulf %414, %418 : vector<8x128xf32>
    %420 = vector.extract_strided_slice %13 {offsets = [48, 0], sizes = [8, 1], strides = [1, 1]} : vector<64x1xf32> to vector<8x1xf32>
    %421 = vector.broadcast %420 : vector<8x1xf32> to vector<8x128xf32>
    %422 = arith.mulf %419, %421 : vector<8x128xf32>
    %423 = arith.truncf %422 : vector<8x128xf32> to vector<8x128xbf16>
    %c48_123 = arith.constant 48 : index
    %c0_124 = arith.constant 0 : index
    %424 = vector.load %arg8[%c48_123, %c0_124] : memref<64x256xbf16, #tpu.memory_space<vmem>>, vector<8x128xbf16>
    tpu.vector_store %arg8[%c48_123, %c0_124], %423 {strides = array<i32>} : memref<64x256xbf16, #tpu.memory_space<vmem>>, vector<8x128xbf16>,
    %c8_125 = arith.constant 8 : index
    %c0_126 = arith.constant 0 : index
    %425 = vector.load %arg10[%c8_125, %c0_126] : memref<64x512xf32, #tpu.memory_space<vmem>>, vector<8x512xf32>
    %426 = arith.truncf %389 : vector<8x128xf32> to vector<8x128xbf16>
    %c0_127 = arith.constant 0 : index
    %c0_128 = arith.constant 0 : index
    %427 = vector.load %arg6[%c0_127, %c0_128] : memref<128x512xbf16, #tpu.memory_space<vmem>>, vector<128x512xbf16>
    %cst_129 = arith.constant dense<0.000000e+00> : vector<8x512xf32>
    %428 = tpu.matmul %426, %427, %cst_129 {dimension_numbers = #tpu.dot_dimension_numbers<[1], [0], [0], [1], [0, 0, 1, 1], [], []>} : vector<8x128xbf16>, vector<128x512xbf16>, vector<8x512xf32> -> vector<8x512xf32>
    %429 = arith.addf %425, %428 : vector<8x512xf32>
    %430 = vector.extract_strided_slice %429 {offsets = [0, 0], sizes = [8, 384], strides = [1, 1]} : vector<8x512xf32> to vector<8x384xf32>
    %431 = arith.negf %430 : vector<8x384xf32>
    %432 = math.exp %431 : vector<8x384xf32>
    %cst_130 = arith.constant 1.000000e+00 : f32
    %433 = vector.broadcast %cst_130 : f32 to vector<8x384xf32>
    %434 = arith.addf %433, %432 : vector<8x384xf32>
    %435 = arith.divf %433, %434 : vector<8x384xf32>
    %436 = vector.extract_strided_slice %429 {offsets = [0, 384], sizes = [8, 128], strides = [1, 1]} : vector<8x512xf32> to vector<8x128xf32>
    %437 = math.tanh %436 : vector<8x128xf32>
    %438 = vector.extract_strided_slice %435 {offsets = [0, 0], sizes = [8, 128], strides = [1, 1]} : vector<8x384xf32> to vector<8x128xf32>
    %439 = vector.extract_strided_slice %435 {offsets = [0, 128], sizes = [8, 128], strides = [1, 1]} : vector<8x384xf32> to vector<8x128xf32>
    %440 = vector.extract_strided_slice %435 {offsets = [0, 256], sizes = [8, 128], strides = [1, 1]} : vector<8x384xf32> to vector<8x128xf32>
    %441 = arith.mulf %439, %396 : vector<8x128xf32>
    %442 = arith.mulf %438, %437 : vector<8x128xf32>
    %443 = arith.addf %441, %442 : vector<8x128xf32>
    %444 = math.tanh %443 : vector<8x128xf32>
    %445 = arith.mulf %440, %444 : vector<8x128xf32>
    %446 = vector.extract_strided_slice %13 {offsets = [8, 0], sizes = [8, 1], strides = [1, 1]} : vector<64x1xf32> to vector<8x1xf32>
    %447 = vector.broadcast %446 : vector<8x1xf32> to vector<8x128xf32>
    %448 = arith.mulf %445, %447 : vector<8x128xf32>
    %cst_131 = arith.constant 1.000000e+00 : f32
    %449 = vector.broadcast %cst_131 : f32 to vector<8x1xf32>
    %450 = arith.subf %449, %446 : vector<8x1xf32>
    %451 = vector.broadcast %450 : vector<8x1xf32> to vector<8x128xf32>
    %452 = arith.mulf %389, %451 : vector<8x128xf32>
    %453 = arith.addf %448, %452 : vector<8x128xf32>
    %454 = vector.broadcast %446 : vector<8x1xf32> to vector<8x128xf32>
    %455 = arith.mulf %443, %454 : vector<8x128xf32>
    %cst_132 = arith.constant 1.000000e+00 : f32
    %456 = vector.broadcast %cst_132 : f32 to vector<8x1xf32>
    %457 = arith.subf %456, %446 : vector<8x1xf32>
    %458 = vector.broadcast %457 : vector<8x1xf32> to vector<8x128xf32>
    %459 = arith.mulf %396, %458 : vector<8x128xf32>
    %460 = arith.addf %455, %459 : vector<8x128xf32>
    %461 = arith.truncf %453 : vector<8x128xf32> to vector<8x128xbf16>
    %c8_133 = arith.constant 8 : index
    %c128_134 = arith.constant 128 : index
    %462 = vector.load %arg8[%c8_133, %c128_134] : memref<64x256xbf16, #tpu.memory_space<vmem>>, vector<8x128xbf16>
    tpu.vector_store %arg8[%c8_133, %c128_134], %461 {strides = array<i32>} : memref<64x256xbf16, #tpu.memory_space<vmem>>, vector<8x128xbf16>,
    %c56_135 = arith.constant 56 : index
    %c0_136 = arith.constant 0 : index
    %463 = vector.load %arg9[%c56_135, %c0_136] : memref<64x512xf32, #tpu.memory_space<vmem>>, vector<8x512xf32>
    %464 = arith.truncf %419 : vector<8x128xf32> to vector<8x128xbf16>
    %c0_137 = arith.constant 0 : index
    %c0_138 = arith.constant 0 : index
    %465 = vector.load %arg3[%c0_137, %c0_138] : memref<128x512xbf16, #tpu.memory_space<vmem>>, vector<128x512xbf16>
    %cst_139 = arith.constant dense<0.000000e+00> : vector<8x512xf32>
    %466 = tpu.matmul %464, %465, %cst_139 {dimension_numbers = #tpu.dot_dimension_numbers<[1], [0], [0], [1], [0, 0, 1, 1], [], []>} : vector<8x128xbf16>, vector<128x512xbf16>, vector<8x512xf32> -> vector<8x512xf32>
    %467 = arith.addf %463, %466 : vector<8x512xf32>
    %468 = vector.extract_strided_slice %467 {offsets = [0, 0], sizes = [8, 384], strides = [1, 1]} : vector<8x512xf32> to vector<8x384xf32>
    %469 = arith.negf %468 : vector<8x384xf32>
    %470 = math.exp %469 : vector<8x384xf32>
    %cst_140 = arith.constant 1.000000e+00 : f32
    %471 = vector.broadcast %cst_140 : f32 to vector<8x384xf32>
    %472 = arith.addf %471, %470 : vector<8x384xf32>
    %473 = arith.divf %471, %472 : vector<8x384xf32>
    %474 = vector.extract_strided_slice %467 {offsets = [0, 384], sizes = [8, 128], strides = [1, 1]} : vector<8x512xf32> to vector<8x128xf32>
    %475 = math.tanh %474 : vector<8x128xf32>
    %476 = vector.extract_strided_slice %473 {offsets = [0, 0], sizes = [8, 128], strides = [1, 1]} : vector<8x384xf32> to vector<8x128xf32>
    %477 = vector.extract_strided_slice %473 {offsets = [0, 128], sizes = [8, 128], strides = [1, 1]} : vector<8x384xf32> to vector<8x128xf32>
    %478 = vector.extract_strided_slice %473 {offsets = [0, 256], sizes = [8, 128], strides = [1, 1]} : vector<8x384xf32> to vector<8x128xf32>
    %479 = arith.mulf %477, %417 : vector<8x128xf32>
    %480 = arith.mulf %476, %475 : vector<8x128xf32>
    %481 = arith.addf %479, %480 : vector<8x128xf32>
    %482 = math.tanh %481 : vector<8x128xf32>
    %483 = arith.mulf %478, %482 : vector<8x128xf32>
    %484 = vector.extract_strided_slice %13 {offsets = [56, 0], sizes = [8, 1], strides = [1, 1]} : vector<64x1xf32> to vector<8x1xf32>
    %485 = vector.broadcast %484 : vector<8x1xf32> to vector<8x128xf32>
    %486 = arith.mulf %483, %485 : vector<8x128xf32>
    %487 = arith.truncf %486 : vector<8x128xf32> to vector<8x128xbf16>
    %c56_141 = arith.constant 56 : index
    %c0_142 = arith.constant 0 : index
    %488 = vector.load %arg8[%c56_141, %c0_142] : memref<64x256xbf16, #tpu.memory_space<vmem>>, vector<8x128xbf16>
    tpu.vector_store %arg8[%c56_141, %c0_142], %487 {strides = array<i32>} : memref<64x256xbf16, #tpu.memory_space<vmem>>, vector<8x128xbf16>,
    %c0_143 = arith.constant 0 : index
    %c0_144 = arith.constant 0 : index
    %489 = vector.load %arg10[%c0_143, %c0_144] : memref<64x512xf32, #tpu.memory_space<vmem>>, vector<8x512xf32>
    %490 = arith.truncf %453 : vector<8x128xf32> to vector<8x128xbf16>
    %c0_145 = arith.constant 0 : index
    %c0_146 = arith.constant 0 : index
    %491 = vector.load %arg6[%c0_145, %c0_146] : memref<128x512xbf16, #tpu.memory_space<vmem>>, vector<128x512xbf16>
    %cst_147 = arith.constant dense<0.000000e+00> : vector<8x512xf32>
    %492 = tpu.matmul %490, %491, %cst_147 {dimension_numbers = #tpu.dot_dimension_numbers<[1], [0], [0], [1], [0, 0, 1, 1], [], []>} : vector<8x128xbf16>, vector<128x512xbf16>, vector<8x512xf32> -> vector<8x512xf32>
    %493 = arith.addf %489, %492 : vector<8x512xf32>
    %494 = vector.extract_strided_slice %493 {offsets = [0, 0], sizes = [8, 384], strides = [1, 1]} : vector<8x512xf32> to vector<8x384xf32>
    %495 = arith.negf %494 : vector<8x384xf32>
    %496 = math.exp %495 : vector<8x384xf32>
    %cst_148 = arith.constant 1.000000e+00 : f32
    %497 = vector.broadcast %cst_148 : f32 to vector<8x384xf32>
    %498 = arith.addf %497, %496 : vector<8x384xf32>
    %499 = arith.divf %497, %498 : vector<8x384xf32>
    %500 = vector.extract_strided_slice %493 {offsets = [0, 384], sizes = [8, 128], strides = [1, 1]} : vector<8x512xf32> to vector<8x128xf32>
    %501 = math.tanh %500 : vector<8x128xf32>
    %502 = vector.extract_strided_slice %499 {offsets = [0, 0], sizes = [8, 128], strides = [1, 1]} : vector<8x384xf32> to vector<8x128xf32>
    %503 = vector.extract_strided_slice %499 {offsets = [0, 128], sizes = [8, 128], strides = [1, 1]} : vector<8x384xf32> to vector<8x128xf32>
    %504 = vector.extract_strided_slice %499 {offsets = [0, 256], sizes = [8, 128], strides = [1, 1]} : vector<8x384xf32> to vector<8x128xf32>
    %505 = arith.mulf %503, %460 : vector<8x128xf32>
    %506 = arith.mulf %502, %501 : vector<8x128xf32>
    %507 = arith.addf %505, %506 : vector<8x128xf32>
    %508 = math.tanh %507 : vector<8x128xf32>
    %509 = arith.mulf %504, %508 : vector<8x128xf32>
    %510 = vector.extract_strided_slice %13 {offsets = [0, 0], sizes = [8, 1], strides = [1, 1]} : vector<64x1xf32> to vector<8x1xf32>
    %511 = vector.broadcast %510 : vector<8x1xf32> to vector<8x128xf32>
    %512 = arith.mulf %509, %511 : vector<8x128xf32>
    %cst_149 = arith.constant 1.000000e+00 : f32
    %513 = vector.broadcast %cst_149 : f32 to vector<8x1xf32>
    %514 = arith.subf %513, %510 : vector<8x1xf32>
    %515 = vector.broadcast %514 : vector<8x1xf32> to vector<8x128xf32>
    %516 = arith.mulf %453, %515 : vector<8x128xf32>
    %517 = arith.addf %512, %516 : vector<8x128xf32>
    %518 = arith.truncf %517 : vector<8x128xf32> to vector<8x128xbf16>
    %c0_150 = arith.constant 0 : index
    %c128_151 = arith.constant 128 : index
    %519 = vector.load %arg8[%c0_150, %c128_151] : memref<64x256xbf16, #tpu.memory_space<vmem>>, vector<8x128xbf16>
    tpu.vector_store %arg8[%c0_150, %c128_151], %518 {strides = array<i32>} : memref<64x256xbf16, #tpu.memory_space<vmem>>, vector<8x128xbf16>,
    return
  }
}

</mosaic_0001>

<llo_original>
// kernel: tpu_custom_call.1
$region0: #{tpu_custom_call.1}
  #allocation0 [shape = 'u32[]', space=smem, size = 0x4, offset = 0x4, fixed_abs, tag = 'smem constant byte address 0x4 - core index']
  #allocation1 [shape = 'u32[144,128]{1,0:T(1,128)}', space=vmem, size = 0x12000, scoped, tag = 'internal scratch']
  #allocation2 [shape = 'f32[64,512]{1,0:T(8,128)}', space=vmem, size = 0x20000, scoped, tag = 'scratch operand']
  #allocation3 [shape = 'f32[64,512]{1,0:T(8,128)}', space=vmem, size = 0x20000, scoped, tag = 'scratch operand']
  %s0 = inlined_call_operand.vmem [shape: f32[64,1], index: 0, kind: input, shape index: {}]
  %s1 = inlined_call_operand.vmem [shape: bf16[64,8], index: 1, kind: input, shape index: {}]
  %s2 = inlined_call_operand.vmem [shape: bf16[8,512], index: 2, kind: input, shape index: {}]
  %s3 = inlined_call_operand.hbm [shape: bf16[128,512], index: 3, kind: input, shape index: {}]
  %s4 = inlined_call_operand.vmem [shape: f32[1,512], index: 4, kind: input, shape index: {}]
  %s5 = inlined_call_operand.vmem [shape: bf16[8,512], index: 5, kind: input, shape index: {}]
  %s6 = inlined_call_operand.hbm [shape: bf16[128,512], index: 6, kind: input, shape index: {}]
  %s7 = inlined_call_operand.vmem [shape: f32[1,512], index: 7, kind: input, shape index: {}]
  %s8 = inlined_call_operand.hbm [shape: bf16[64,256], index: 8, kind: output, shape index: {}]
  %s9 = sld [smem:[#allocation0]]
  $region50: #{tpu_custom_call.1} parent=0
    _
  %s11 = ssub.s32 1, %s9
  %s12 = scalar_select 0, %s11, %s9
  $region1: #{tpu_custom_call.1} parent=0
    #allocation4 [shape = 'u8[131072]{0}', space=vmem, size = 0x20000, scoped, tag = 'input window, operand 3, single buffered']
    #allocation5 [shape = 's32[1]{0}', space=sflag, size = 0x4, scoped, tag = 'scoped memory for tpu_custom_call.1']
    #allocation6 [shape = 's32[1]{0}', space=sflag, size = 0x4, scoped, tag = 'scoped memory for tpu_custom_call.1']
    #allocation7 [shape = 'u8[131072]{0}', space=vmem, size = 0x20000, scoped, tag = 'input window, operand 6, single buffered']
    #allocation8 [shape = 's32[1]{0}', space=sflag, size = 0x4, scoped, tag = 'scoped memory for tpu_custom_call.1']
    #allocation9 [shape = 'u8[32768]{0}', space=vmem, size = 0x8000, scoped, tag = 'output window, operand 0, single buffered']
    %13 = vsyncpa [#allocation5], 0
    %14 = vsyncpa [#allocation8], 0
    %15 = vsyncpa [#allocation6], 0
    // Predicated region
    $region2: #{tpu_custom_call.1} parent=1 // pred_check
      _
    $region3: #{tpu_custom_call.1} parent=1 // pred_check_branch
      %17 = sbr.rel (0) target = $region5
    $region4: #{tpu_custom_call.1} parent=1 // pred_region
      _
    $region5: #{tpu_custom_call.1} parent=1 // pred_fallthru
      _
    // Predicated region
    $region6: #{tpu_custom_call.1} parent=1 // pred_check
      _
    $region7: #{tpu_custom_call.1} parent=1 // pred_check_branch
      %19 = sbr.rel (0) target = $region9
    $region8: #{tpu_custom_call.1} parent=1 // pred_region
      _
    $region9: #{tpu_custom_call.1} parent=1 // pred_fallthru
      _
    // Predicated region
    $region10: #{tpu_custom_call.1} parent=1 // pred_check
      _
    $region11: #{tpu_custom_call.1} parent=1 // pred_check_branch
      %21 = sbr.rel (0) target = $region13
    $region12: #{tpu_custom_call.1} parent=1 // pred_region
      _
    $region13: #{tpu_custom_call.1} parent=1 // pred_fallthru
      _
    // Predicated region
    $region14: #{tpu_custom_call.1} parent=1 // pred_check
      _
    $region15: #{tpu_custom_call.1} parent=1 // pred_check_branch
      %23 = sbr.rel (0) target = $region17
    $region16: #{tpu_custom_call.1} parent=1 // pred_region
      %s25 = ssub.s32 4096, 4096
      %26 = vsyncadd [#allocation5], %s25
      %s27 = sshll.u32 [#allocation4], 4
      %s28 = int_to_ptr.vmem [resolvable:$true] %s27
      %33 = dma.hbm_to_vmem [thread:$0]  %s3, 4096, %s28, [#allocation5], 256, 256, 16
    $region17: #{tpu_custom_call.1} parent=1 // pred_fallthru
      _
    // Predicated region
    $region18: #{tpu_custom_call.1} parent=1 // pred_check
      _
    $region19: #{tpu_custom_call.1} parent=1 // pred_check_branch
      %35 = sbr.rel (0) target = $region21
    $region20: #{tpu_custom_call.1} parent=1 // pred_region
      _
    $region21: #{tpu_custom_call.1} parent=1 // pred_fallthru
      _
    // Predicated region
    $region22: #{tpu_custom_call.1} parent=1 // pred_check
      _
    $region23: #{tpu_custom_call.1} parent=1 // pred_check_branch
      %37 = sbr.rel (0) target = $region25
    $region24: #{tpu_custom_call.1} parent=1 // pred_region
      _
    $region25: #{tpu_custom_call.1} parent=1 // pred_fallthru
      _
    // Predicated region
    $region26: #{tpu_custom_call.1} parent=1 // pred_check
      _
    $region27: #{tpu_custom_call.1} parent=1 // pred_check_branch
      %39 = sbr.rel (0) target = $region29
    $region28: #{tpu_custom_call.1} parent=1 // pred_region
      %s41 = ssub.s32 4096, 4096
      %42 = vsyncadd [#allocation8], %s41
      %s43 = sshll.u32 [#allocation7], 4
      %s44 = int_to_ptr.vmem [resolvable:$true] %s43
      %49 = dma.hbm_to_vmem [thread:$0]  %s6, 4096, %s44, [#allocation8], 256, 256, 16
    $region29: #{tpu_custom_call.1} parent=1 // pred_fallthru
      _
    // Predicated region
    $region30: #{tpu_custom_call.1} parent=1 // pred_check
      _
    $region31: #{tpu_custom_call.1} parent=1 // pred_check_branch
      %51 = sbr.rel (0) target = $region33
    $region32: #{tpu_custom_call.1} parent=1 // pred_region
      _
    $region33: #{tpu_custom_call.1} parent=1 // pred_fallthru
      _
    // Predicated region
    $region34: #{tpu_custom_call.1} parent=1 // pred_check
      _
    $region35: #{tpu_custom_call.1} parent=1 // pred_check_branch
      %53 = sbr.rel (0) target = $region37
    $region36: #{tpu_custom_call.1} parent=1 // pred_region
      %54 = dma.done [#allocation5], 4096
    $region37: #{tpu_custom_call.1} parent=1 // pred_fallthru
      _
    // Predicated region
    $region38: #{tpu_custom_call.1} parent=1 // pred_check
      _
    $region39: #{tpu_custom_call.1} parent=1 // pred_check_branch
      %56 = sbr.rel (0) target = $region41
    $region40: #{tpu_custom_call.1} parent=1 // pred_region
      %57 = dma.done [#allocation8], 4096
    $region41: #{tpu_custom_call.1} parent=1 // pred_fallthru
      _
    %v59 = vld [vmem:[%s1] sm:$0xf]
    %v60 = vld [vmem:[%s1 + $0x4] sm:$0xf]
    %v61 = vld [vmem:[%s1 + $0x8] sm:$0xf]
    %v62 = vld [vmem:[%s1 + $0xc] sm:$0xf]
    %v63 = vld [vmem:[%s1 + $0x10] sm:$0xf]
    %v64 = vld [vmem:[%s1 + $0x14] sm:$0xf]
    %v65 = vld [vmem:[%s1 + $0x18] sm:$0xf]
    %v66 = vld [vmem:[%s1 + $0x1c] sm:$0xf]
    %v67 = vld [vmem:[%s2] sm:$0xff]
    %v68 = vld [vmem:[%s2 + $0x8] sm:$0xff]
    %v69 = vld [vmem:[%s4] sm:$0xf]
    %v71 = vlaneseq
    %v72 = vshrl.u32 %v71, 7
    %v73 = vsub.s32 0, %v72
    %v74 = vrot.slane %v69, %v73
    %v75 = vlaneseq
    %v76 = vshrl.u32 %v75, 7
    %v77 = vsub.s32 1, %v76
    %v78 = vrot.slane %v69, %v77
    %v79 = vlaneseq
    %v80 = vshrl.u32 %v79, 7
    %v81 = vsub.s32 2, %v80
    %v82 = vrot.slane %v69, %v81
    %v83 = vlaneseq
    %v84 = vshrl.u32 %v83, 7
    %v85 = vsub.s32 3, %v84
    %v86 = vrot.slane %v69, %v85
    %v99 = vunpack.c.l.b16 %v59
    %v100 = vunpack.c.l.b16 %v60
    %v101 = vunpack.c.l.b16 %v61
    %v102 = vunpack.c.l.b16 %v62
    %v103 = vunpack.c.l.b16 %v63
    %v104 = vunpack.c.l.b16 %v64
    %v105 = vunpack.c.l.b16 %v65
    %v106 = vunpack.c.l.b16 %v66
    %v107 = vpack.c.b16 %v100, %v99
    %v108 = vpack.c.b16 %v102, %v101
    %v109 = vpack.c.b16 %v104, %v103
    %v110 = vpack.c.b16 %v106, %v105
    %v113 = vunpack.c.l.b16 %v67
    %v114 = vunpack.c.h.b16 %v67
    %v115 = vunpack.c.l.b16 %v68
    %v116 = vunpack.c.h.b16 %v68
    %v117 = vpack.c.b16 %v113, %v113
    %v118 = vpack.c.b16 %v114, %v114
    %v119 = vpack.c.b16 %v115, %v115
    %v120 = vpack.c.b16 %v116, %v116
    %vm121 = vcmask 64512
    %v123 = vsel %vm121, %v107, 0
    %v126 = vsel %vm121, %v108, 0
    %v129 = vsel %vm121, %v109, 0
    %v132 = vsel %vm121, %v110, 0
    %vm134 = vcmask 1043456
    %v136 = vsel %vm134, %v117, 0
    %v139 = vsel %vm134, %v118, 0
    %v142 = vsel %vm134, %v119, 0
    %v145 = vsel %vm134, %v120, 0
    %147 = vmatprep.subr.bf16.mxu0 %v139
    %148 = vmatpush1.bf16.msra.mxu0 %v136
    %149 = vmatprep.subr.bf16.mxu0 0
    %150 = vmatpush1.bf16.msra.mxu0 0
    %151 = vmatprep.subr.bf16.mxu0 0
    %152 = vmatpush1.bf16.msra.mxu0 0
    %153 = vmatprep.subr.bf16.mxu0 0
    %154 = vmatpush1.bf16.msra.mxu0 0
    %155 = vmatprep.subr.bf16.mxu0 0
    %156 = vmatpush1.bf16.msra.mxu0 0
    %157 = vmatprep.subr.bf16.mxu0 0
    %158 = vmatpush1.bf16.msra.mxu0 0
    %159 = vmatprep.subr.bf16.mxu0 0
    %160 = vmatpush1.bf16.msra.mxu0 0
    %161 = vmatprep.subr.bf16.mxu0 0
    %162 = vmatpush1.bf16.msra.mxu0 0
    %163 = vmatprep.subr.bf16.mxu0 0
    %164 = vmatpush1.bf16.msra.mxu0 0
    %165 = vmatprep.subr.bf16.mxu0 0
    %166 = vmatpush1.bf16.msra.mxu0 0
    %167 = vmatprep.subr.bf16.mxu0 0
    %168 = vmatpush1.bf16.msra.mxu0 0
    %169 = vmatprep.subr.bf16.mxu0 0
    %170 = vmatpush1.bf16.msra.mxu0 0
    %171 = vmatprep.subr.bf16.mxu0 0
    %172 = vmatpush1.bf16.msra.mxu0 0
    %173 = vmatprep.subr.bf16.mxu0 0
    %174 = vmatpush1.bf16.msra.mxu0 0
    %175 = vmatprep.subr.bf16.mxu0 0
    %176 = vmatpush1.bf16.msra.mxu0 0
    %177 = vmatprep.subr.bf16.mxu0 0
    %178 = vmatpush1.bf16.msra.mxu0 0
    %179 = vmatprep.mubr.bf16.mxu0 0
    %180 = vmatmul.mubr.bf16.gmra.mrb[0].mxu0 %v123
    %v181 = vpop.f32.mrb[0].mxu0
    %v182 = vadd.f32 %v74, %v181
    %v183 = vpop.f32.mrb[0].mxu0
    %v184 = vadd.f32 %v78, %v183
    %v185 = vpop.f32.mrb[0].mxu0
    %v186 = vadd.f32 %v74, %v185
    %v187 = vpop.f32.mrb[0].mxu0
    %v188 = vadd.f32 %v78, %v187
    %189 = vmatprep.mubr.bf16.mxu0 0
    %190 = vmatmul.mubr.bf16.gmra.mrb[0].mxu0 %v126
    %v191 = vpop.f32.mrb[0].mxu0
    %v192 = vadd.f32 %v74, %v191
    %v193 = vpop.f32.mrb[0].mxu0
    %v194 = vadd.f32 %v78, %v193
    %v195 = vpop.f32.mrb[0].mxu0
    %v196 = vadd.f32 %v74, %v195
    %v197 = vpop.f32.mrb[0].mxu0
    %v198 = vadd.f32 %v78, %v197
    %199 = vmatprep.mubr.bf16.mxu0 0
    %200 = vmatmul.mubr.bf16.gmra.mrb[0].mxu0 %v129
    %v201 = vpop.f32.mrb[0].mxu0
    %v202 = vadd.f32 %v74, %v201
    %v203 = vpop.f32.mrb[0].mxu0
    %v204 = vadd.f32 %v78, %v203
    %v205 = vpop.f32.mrb[0].mxu0
    %v206 = vadd.f32 %v74, %v205
    %v207 = vpop.f32.mrb[0].mxu0
    %v208 = vadd.f32 %v78, %v207
    %209 = vmatprep.mubr.bf16.mxu0 0
    %210 = vmatmul.mubr.bf16.gmra.mrb[0].mxu0 %v132
    %v211 = vpop.f32.mrb[0].mxu0
    %v212 = vadd.f32 %v74, %v211
    %v213 = vpop.f32.mrb[0].mxu0
    %v214 = vadd.f32 %v78, %v213
    %v215 = vpop.f32.mrb[0].mxu0
    %v216 = vadd.f32 %v74, %v215
    %v217 = vpop.f32.mrb[0].mxu0
    %v218 = vadd.f32 %v78, %v217
    %219 = vdwg.mxu0
    %220 = vmatprep.subr.bf16.mxu0 %v145
    %221 = vmatpush1.bf16.msra.mxu0 %v142
    %222 = vmatprep.subr.bf16.mxu0 0
    %223 = vmatpush1.bf16.msra.mxu0 0
    %224 = vmatprep.subr.bf16.mxu0 0
    %225 = vmatpush1.bf16.msra.mxu0 0
    %226 = vmatprep.subr.bf16.mxu0 0
    %227 = vmatpush1.bf16.msra.mxu0 0
    %228 = vmatprep.subr.bf16.mxu0 0
    %229 = vmatpush1.bf16.msra.mxu0 0
    %230 = vmatprep.subr.bf16.mxu0 0
    %231 = vmatpush1.bf16.msra.mxu0 0
    %232 = vmatprep.subr.bf16.mxu0 0
    %233 = vmatpush1.bf16.msra.mxu0 0
    %234 = vmatprep.subr.bf16.mxu0 0
    %235 = vmatpush1.bf16.msra.mxu0 0
    %236 = vmatprep.subr.bf16.mxu0 0
    %237 = vmatpush1.bf16.msra.mxu0 0
    %238 = vmatprep.subr.bf16.mxu0 0
    %239 = vmatpush1.bf16.msra.mxu0 0
    %240 = vmatprep.subr.bf16.mxu0 0
    %241 = vmatpush1.bf16.msra.mxu0 0
    %242 = vmatprep.subr.bf16.mxu0 0
    %243 = vmatpush1.bf16.msra.mxu0 0
    %244 = vmatprep.subr.bf16.mxu0 0
    %245 = vmatpush1.bf16.msra.mxu0 0
    %246 = vmatprep.subr.bf16.mxu0 0
    %247 = vmatpush1.bf16.msra.mxu0 0
    %248 = vmatprep.subr.bf16.mxu0 0
    %249 = vmatpush1.bf16.msra.mxu0 0
    %250 = vmatprep.subr.bf16.mxu0 0
    %251 = vmatpush1.bf16.msra.mxu0 0
    %252 = vmatprep.mubr.bf16.mxu0 0
    %253 = vmatmul.mubr.bf16.gmra.mrb[0].mxu0 %v123
    %v254 = vpop.f32.mrb[0].mxu0
    %v255 = vadd.f32 %v82, %v254
    %v256 = vpop.f32.mrb[0].mxu0
    %v257 = vadd.f32 %v86, %v256
    %v258 = vpop.f32.mrb[0].mxu0
    %v259 = vadd.f32 %v82, %v258
    %v260 = vpop.f32.mrb[0].mxu0
    %v261 = vadd.f32 %v86, %v260
    %262 = vmatprep.mubr.bf16.mxu0 0
    %263 = vmatmul.mubr.bf16.gmra.mrb[0].mxu0 %v126
    %v264 = vpop.f32.mrb[0].mxu0
    %v265 = vadd.f32 %v82, %v264
    %v266 = vpop.f32.mrb[0].mxu0
    %v267 = vadd.f32 %v86, %v266
    %v268 = vpop.f32.mrb[0].mxu0
    %v269 = vadd.f32 %v82, %v268
    %v270 = vpop.f32.mrb[0].mxu0
    %v271 = vadd.f32 %v86, %v270
    %272 = vmatprep.mubr.bf16.mxu0 0
    %273 = vmatmul.mubr.bf16.gmra.mrb[0].mxu0 %v129
    %v274 = vpop.f32.mrb[0].mxu0
    %v275 = vadd.f32 %v82, %v274
    %v276 = vpop.f32.mrb[0].mxu0
    %v277 = vadd.f32 %v86, %v276
    %v278 = vpop.f32.mrb[0].mxu0
    %v279 = vadd.f32 %v82, %v278
    %v280 = vpop.f32.mrb[0].mxu0
    %v281 = vadd.f32 %v86, %v280
    %282 = vmatprep.mubr.bf16.mxu0 0
    %283 = vmatmul.mubr.bf16.gmra.mrb[0].mxu0 %v132
    %v284 = vpop.f32.mrb[0].mxu0
    %v285 = vadd.f32 %v82, %v284
    %v286 = vpop.f32.mrb[0].mxu0
    %v287 = vadd.f32 %v86, %v286
    %v288 = vpop.f32.mrb[0].mxu0
    %v289 = vadd.f32 %v82, %v288
    %v290 = vpop.f32.mrb[0].mxu0
    %v291 = vadd.f32 %v86, %v290
    %292 = vdwg.mxu0
    %293 = vst [vmem:[#allocation2] sm:$0xff] %v182
    %294 = vst [vmem:[#allocation2 + $0x8] sm:$0xff] %v184
    %295 = vst [vmem:[#allocation2 + $0x10] sm:$0xff] %v255
    %296 = vst [vmem:[#allocation2 + $0x18] sm:$0xff] %v257
    %297 = vst [vmem:[#allocation2 + $0x20] sm:$0xff] %v186
    %298 = vst [vmem:[#allocation2 + $0x28] sm:$0xff] %v188
    %299 = vst [vmem:[#allocation2 + $0x30] sm:$0xff] %v259
    %300 = vst [vmem:[#allocation2 + $0x38] sm:$0xff] %v261
    %301 = vst [vmem:[#allocation2 + $0x40] sm:$0xff] %v192
    %302 = vst [vmem:[#allocation2 + $0x48] sm:$0xff] %v194
    %303 = vst [vmem:[#allocation2 + $0x50] sm:$0xff] %v265
    %304 = vst [vmem:[#allocation2 + $0x58] sm:$0xff] %v267
    %305 = vst [vmem:[#allocation2 + $0x60] sm:$0xff] %v196
    %306 = vst [vmem:[#allocation2 + $0x68] sm:$0xff] %v198
    %307 = vst [vmem:[#allocation2 + $0x70] sm:$0xff] %v269
    %308 = vst [vmem:[#allocation2 + $0x78] sm:$0xff] %v271
    %309 = vst [vmem:[#allocation2 + $0x80] sm:$0xff] %v202
    %310 = vst [vmem:[#allocation2 + $0x88] sm:$0xff] %v204
    %311 = vst [vmem:[#allocation2 + $0x90] sm:$0xff] %v275
    %312 = vst [vmem:[#allocation2 + $0x98] sm:$0xff] %v277
    %313 = vst [vmem:[#allocation2 + $0xa0] sm:$0xff] %v206
    %314 = vst [vmem:[#allocation2 + $0xa8] sm:$0xff] %v208
    %315 = vst [vmem:[#allocation2 + $0xb0] sm:$0xff] %v279
    %316 = vst [vmem:[#allocation2 + $0xb8] sm:$0xff] %v281
    %317 = vst [vmem:[#allocation2 + $0xc0] sm:$0xff] %v212
    %318 = vst [vmem:[#allocation2 + $0xc8] sm:$0xff] %v214
    %319 = vst [vmem:[#allocation2 + $0xd0] sm:$0xff] %v285
    %320 = vst [vmem:[#allocation2 + $0xd8] sm:$0xff] %v287
    %321 = vst [vmem:[#allocation2 + $0xe0] sm:$0xff] %v216
    %322 = vst [vmem:[#allocation2 + $0xe8] sm:$0xff] %v218
    %323 = vst [vmem:[#allocation2 + $0xf0] sm:$0xff] %v289
    %324 = vst [vmem:[#allocation2 + $0xf8] sm:$0xff] %v291
    %v325 = vld [vmem:[%s5] sm:$0xff]
    %v326 = vld [vmem:[%s5 + $0x8] sm:$0xff]
    %v327 = vld [vmem:[%s7] sm:$0xf]
    %v329 = vlaneseq
    %v330 = vshrl.u32 %v329, 7
    %v331 = vsub.s32 0, %v330
    %v332 = vrot.slane %v327, %v331
    %v333 = vlaneseq
    %v334 = vshrl.u32 %v333, 7
    %v335 = vsub.s32 1, %v334
    %v336 = vrot.slane %v327, %v335
    %v337 = vlaneseq
    %v338 = vshrl.u32 %v337, 7
    %v339 = vsub.s32 2, %v338
    %v340 = vrot.slane %v327, %v339
    %v341 = vlaneseq
    %v342 = vshrl.u32 %v341, 7
    %v343 = vsub.s32 3, %v342
    %v344 = vrot.slane %v327, %v343
    %v351 = vunpack.c.l.b16 %v325
    %v352 = vunpack.c.h.b16 %v325
    %v353 = vunpack.c.l.b16 %v326
    %v354 = vunpack.c.h.b16 %v326
    %v355 = vpack.c.b16 %v351, %v351
    %v356 = vpack.c.b16 %v352, %v352
    %v357 = vpack.c.b16 %v353, %v353
    %v358 = vpack.c.b16 %v354, %v354
    %v360 = vsel %vm134, %v355, 0
    %v363 = vsel %vm134, %v356, 0
    %v366 = vsel %vm134, %v357, 0
    %v369 = vsel %vm134, %v358, 0
    %371 = vmatprep.subr.bf16.mxu0 %v363
    %372 = vmatpush1.bf16.msra.mxu0 %v360
    %373 = vmatprep.subr.bf16.mxu0 0
    %374 = vmatpush1.bf16.msra.mxu0 0
    %375 = vmatprep.subr.bf16.mxu0 0
    %376 = vmatpush1.bf16.msra.mxu0 0
    %377 = vmatprep.subr.bf16.mxu0 0
    %378 = vmatpush1.bf16.msra.mxu0 0
    %379 = vmatprep.subr.bf16.mxu0 0
    %380 = vmatpush1.bf16.msra.mxu0 0
    %381 = vmatprep.subr.bf16.mxu0 0
    %382 = vmatpush1.bf16.msra.mxu0 0
    %383 = vmatprep.subr.bf16.mxu0 0
    %384 = vmatpush1.bf16.msra.mxu0 0
    %385 = vmatprep.subr.bf16.mxu0 0
    %386 = vmatpush1.bf16.msra.mxu0 0
    %387 = vmatprep.subr.bf16.mxu0 0
    %388 = vmatpush1.bf16.msra.mxu0 0
    %389 = vmatprep.subr.bf16.mxu0 0
    %390 = vmatpush1.bf16.msra.mxu0 0
    %391 = vmatprep.subr.bf16.mxu0 0
    %392 = vmatpush1.bf16.msra.mxu0 0
    %393 = vmatprep.subr.bf16.mxu0 0
    %394 = vmatpush1.bf16.msra.mxu0 0
    %395 = vmatprep.subr.bf16.mxu0 0
    %396 = vmatpush1.bf16.msra.mxu0 0
    %397 = vmatprep.subr.bf16.mxu0 0
    %398 = vmatpush1.bf16.msra.mxu0 0
    %399 = vmatprep.subr.bf16.mxu0 0
    %400 = vmatpush1.bf16.msra.mxu0 0
    %401 = vmatprep.subr.bf16.mxu0 0
    %402 = vmatpush1.bf16.msra.mxu0 0
    %403 = vmatprep.mubr.bf16.mxu0 0
    %404 = vmatmul.mubr.bf16.gmra.mrb[0].mxu0 %v123
    %v405 = vpop.f32.mrb[0].mxu0
    %v406 = vadd.f32 %v332, %v405
    %v407 = vpop.f32.mrb[0].mxu0
    %v408 = vadd.f32 %v336, %v407
    %v409 = vpop.f32.mrb[0].mxu0
    %v410 = vadd.f32 %v332, %v409
    %v411 = vpop.f32.mrb[0].mxu0
    %v412 = vadd.f32 %v336, %v411
    %413 = vmatprep.mubr.bf16.mxu0 0
    %414 = vmatmul.mubr.bf16.gmra.mrb[0].mxu0 %v126
    %v415 = vpop.f32.mrb[0].mxu0
    %v416 = vadd.f32 %v332, %v415
    %v417 = vpop.f32.mrb[0].mxu0
    %v418 = vadd.f32 %v336, %v417
    %v419 = vpop.f32.mrb[0].mxu0
    %v420 = vadd.f32 %v332, %v419
    %v421 = vpop.f32.mrb[0].mxu0
    %v422 = vadd.f32 %v336, %v421
    %423 = vmatprep.mubr.bf16.mxu0 0
    %424 = vmatmul.mubr.bf16.gmra.mrb[0].mxu0 %v129
    %v425 = vpop.f32.mrb[0].mxu0
    %v426 = vadd.f32 %v332, %v425
    %v427 = vpop.f32.mrb[0].mxu0
    %v428 = vadd.f32 %v336, %v427
    %v429 = vpop.f32.mrb[0].mxu0
    %v430 = vadd.f32 %v332, %v429
    %v431 = vpop.f32.mrb[0].mxu0
    %v432 = vadd.f32 %v336, %v431
    %433 = vmatprep.mubr.bf16.mxu0 0
    %434 = vmatmul.mubr.bf16.gmra.mrb[0].mxu0 %v132
    %v435 = vpop.f32.mrb[0].mxu0
    %v436 = vadd.f32 %v332, %v435
    %v437 = vpop.f32.mrb[0].mxu0
    %v438 = vadd.f32 %v336, %v437
    %v439 = vpop.f32.mrb[0].mxu0
    %v440 = vadd.f32 %v332, %v439
    %v441 = vpop.f32.mrb[0].mxu0
    %v442 = vadd.f32 %v336, %v441
    %443 = vdwg.mxu0
    %444 = vmatprep.subr.bf16.mxu0 %v369
    %445 = vmatpush1.bf16.msra.mxu0 %v366
    %446 = vmatprep.subr.bf16.mxu0 0
    %447 = vmatpush1.bf16.msra.mxu0 0
    %448 = vmatprep.subr.bf16.mxu0 0
    %449 = vmatpush1.bf16.msra.mxu0 0
    %450 = vmatprep.subr.bf16.mxu0 0
    %451 = vmatpush1.bf16.msra.mxu0 0
    %452 = vmatprep.subr.bf16.mxu0 0
    %453 = vmatpush1.bf16.msra.mxu0 0
    %454 = vmatprep.subr.bf16.mxu0 0
    %455 = vmatpush1.bf16.msra.mxu0 0
    %456 = vmatprep.subr.bf16.mxu0 0
    %457 = vmatpush1.bf16.msra.mxu0 0
    %458 = vmatprep.subr.bf16.mxu0 0
    %459 = vmatpush1.bf16.msra.mxu0 0
    %460 = vmatprep.subr.bf16.mxu0 0
    %461 = vmatpush1.bf16.msra.mxu0 0
    %462 = vmatprep.subr.bf16.mxu0 0
    %463 = vmatpush1.bf16.msra.mxu0 0
    %464 = vmatprep.subr.bf16.mxu0 0
    %465 = vmatpush1.bf16.msra.mxu0 0
    %466 = vmatprep.subr.bf16.mxu0 0
    %467 = vmatpush1.bf16.msra.mxu0 0
    %468 = vmatprep.subr.bf16.mxu0 0
    %469 = vmatpush1.bf16.msra.mxu0 0
    %470 = vmatprep.subr.bf16.mxu0 0
    %471 = vmatpush1.bf16.msra.mxu0 0
    %472 = vmatprep.subr.bf16.mxu0 0
    %473 = vmatpush1.bf16.msra.mxu0 0
    %474 = vmatprep.subr.bf16.mxu0 0
    %475 = vmatpush1.bf16.msra.mxu0 0
    %476 = vmatprep.mubr.bf16.mxu0 0
    %477 = vmatmul.mubr.bf16.gmra.mrb[0].mxu0 %v123
    %v478 = vpop.f32.mrb[0].mxu0
    %v479 = vadd.f32 %v340, %v478
    %v480 = vpop.f32.mrb[0].mxu0
    %v481 = vadd.f32 %v344, %v480
    %v482 = vpop.f32.mrb[0].mxu0
    %v483 = vadd.f32 %v340, %v482
    %v484 = vpop.f32.mrb[0].mxu0
    %v485 = vadd.f32 %v344, %v484
    %486 = vmatprep.mubr.bf16.mxu0 0
    %487 = vmatmul.mubr.bf16.gmra.mrb[0].mxu0 %v126
    %v488 = vpop.f32.mrb[0].mxu0
    %v489 = vadd.f32 %v340, %v488
    %v490 = vpop.f32.mrb[0].mxu0
    %v491 = vadd.f32 %v344, %v490
    %v492 = vpop.f32.mrb[0].mxu0
    %v493 = vadd.f32 %v340, %v492
    %v494 = vpop.f32.mrb[0].mxu0
    %v495 = vadd.f32 %v344, %v494
    %496 = vmatprep.mubr.bf16.mxu0 0
    %497 = vmatmul.mubr.bf16.gmra.mrb[0].mxu0 %v129
    %v498 = vpop.f32.mrb[0].mxu0
    %v499 = vadd.f32 %v340, %v498
    %v500 = vpop.f32.mrb[0].mxu0
    %v501 = vadd.f32 %v344, %v500
    %v502 = vpop.f32.mrb[0].mxu0
    %v503 = vadd.f32 %v340, %v502
    %v504 = vpop.f32.mrb[0].mxu0
    %v505 = vadd.f32 %v344, %v504
    %506 = vmatprep.mubr.bf16.mxu0 0
    %507 = vmatmul.mubr.bf16.gmra.mrb[0].mxu0 %v132
    %v508 = vpop.f32.mrb[0].mxu0
    %v509 = vadd.f32 %v340, %v508
    %v510 = vpop.f32.mrb[0].mxu0
    %v511 = vadd.f32 %v344, %v510
    %v512 = vpop.f32.mrb[0].mxu0
    %v513 = vadd.f32 %v340, %v512
    %v514 = vpop.f32.mrb[0].mxu0
    %v515 = vadd.f32 %v344, %v514
    %516 = vdwg.mxu0
    %517 = vst [vmem:[#allocation3] sm:$0xff] %v406
    %518 = vst [vmem:[#allocation3 + $0x8] sm:$0xff] %v408
    %519 = vst [vmem:[#allocation3 + $0x10] sm:$0xff] %v479
    %520 = vst [vmem:[#allocation3 + $0x18] sm:$0xff] %v481
    %521 = vst [vmem:[#allocation3 + $0x20] sm:$0xff] %v410
    %522 = vst [vmem:[#allocation3 + $0x28] sm:$0xff] %v412
    %523 = vst [vmem:[#allocation3 + $0x30] sm:$0xff] %v483
    %524 = vst [vmem:[#allocation3 + $0x38] sm:$0xff] %v485
    %525 = vst [vmem:[#allocation3 + $0x40] sm:$0xff] %v416
    %526 = vst [vmem:[#allocation3 + $0x48] sm:$0xff] %v418
    %527 = vst [vmem:[#allocation3 + $0x50] sm:$0xff] %v489
    %528 = vst [vmem:[#allocation3 + $0x58] sm:$0xff] %v491
    %529 = vst [vmem:[#allocation3 + $0x60] sm:$0xff] %v420
    %530 = vst [vmem:[#allocation3 + $0x68] sm:$0xff] %v422
    %531 = vst [vmem:[#allocation3 + $0x70] sm:$0xff] %v493
    %532 = vst [vmem:[#allocation3 + $0x78] sm:$0xff] %v495
    %533 = vst [vmem:[#allocation3 + $0x80] sm:$0xff] %v426
    %534 = vst [vmem:[#allocation3 + $0x88] sm:$0xff] %v428
    %535 = vst [vmem:[#allocation3 + $0x90] sm:$0xff] %v499
    %536 = vst [vmem:[#allocation3 + $0x98] sm:$0xff] %v501
    %537 = vst [vmem:[#allocation3 + $0xa0] sm:$0xff] %v430
    %538 = vst [vmem:[#allocation3 + $0xa8] sm:$0xff] %v432
    %539 = vst [vmem:[#allocation3 + $0xb0] sm:$0xff] %v503
    %540 = vst [vmem:[#allocation3 + $0xb8] sm:$0xff] %v505
    %541 = vst [vmem:[#allocation3 + $0xc0] sm:$0xff] %v436
    %542 = vst [vmem:[#allocation3 + $0xc8] sm:$0xff] %v438
    %543 = vst [vmem:[#allocation3 + $0xd0] sm:$0xff] %v509
    %544 = vst [vmem:[#allocation3 + $0xd8] sm:$0xff] %v511
    %545 = vst [vmem:[#allocation3 + $0xe0] sm:$0xff] %v440
    %546 = vst [vmem:[#allocation3 + $0xe8] sm:$0xff] %v442
    %547 = vst [vmem:[#allocation3 + $0xf0] sm:$0xff] %v513
    %548 = vst [vmem:[#allocation3 + $0xf8] sm:$0xff] %v515
    %v549 = vld [vmem:[%s0] sm:$0xff]
    %v550 = vld [vmem:[%s0 + $0x8] sm:$0xff]
    %v551 = vld [vmem:[%s0 + $0x10] sm:$0xff]
    %v552 = vld [vmem:[%s0 + $0x18] sm:$0xff]
    %v553 = vld [vmem:[%s0 + $0x20] sm:$0xff]
    %v554 = vld [vmem:[%s0 + $0x28] sm:$0xff]
    %v555 = vld [vmem:[%s0 + $0x30] sm:$0xff]
    %v556 = vld [vmem:[%s0 + $0x38] sm:$0xff]
    %v557 = vld [vmem:[#allocation2] sm:$0xff]
    %v558 = vld [vmem:[#allocation2 + $0x8] sm:$0xff]
    %v559 = vld [vmem:[#allocation2 + $0x10] sm:$0xff]
    %v560 = vld [vmem:[#allocation2 + $0x18] sm:$0xff]
    %v561 = vld [vmem:[#allocation4] sm:$0xff]
    %v562 = vld [vmem:[#allocation4 + $0x8] sm:$0xff]
    %v563 = vld [vmem:[#allocation4 + $0x10] sm:$0xff]
    %v564 = vld [vmem:[#allocation4 + $0x18] sm:$0xff]
    %v565 = vld [vmem:[#allocation4 + $0x20] sm:$0xff]
    %v566 = vld [vmem:[#allocation4 + $0x28] sm:$0xff]
    %v567 = vld [vmem:[#allocation4 + $0x30] sm:$0xff]
    %v568 = vld [vmem:[#allocation4 + $0x38] sm:$0xff]
    %v569 = vld [vmem:[#allocation4 + $0x40] sm:$0xff]
    %v570 = vld [vmem:[#allocation4 + $0x48] sm:$0xff]
    %v571 = vld [vmem:[#allocation4 + $0x50] sm:$0xff]
    %v572 = vld [vmem:[#allocation4 + $0x58] sm:$0xff]
    %v573 = vld [vmem:[#allocation4 + $0x60] sm:$0xff]
    %v574 = vld [vmem:[#allocation4 + $0x68] sm:$0xff]
    %v575 = vld [vmem:[#allocation4 + $0x70] sm:$0xff]
    %v576 = vld [vmem:[#allocation4 + $0x78] sm:$0xff]
    %v577 = vld [vmem:[#allocation4 + $0x80] sm:$0xff]
    %v578 = vld [vmem:[#allocation4 + $0x88] sm:$0xff]
    %v579 = vld [vmem:[#allocation4 + $0x90] sm:$0xff]
    %v580 = vld [vmem:[#allocation4 + $0x98] sm:$0xff]
    %v581 = vld [vmem:[#allocation4 + $0xa0] sm:$0xff]
    %v582 = vld [vmem:[#allocation4 + $0xa8] sm:$0xff]
    %v583 = vld [vmem:[#allocation4 + $0xb0] sm:$0xff]
    %v584 = vld [vmem:[#allocation4 + $0xb8] sm:$0xff]
    %v585 = vld [vmem:[#allocation4 + $0xc0] sm:$0xff]
    %v586 = vld [vmem:[#allocation4 + $0xc8] sm:$0xff]
    %v587 = vld [vmem:[#allocation4 + $0xd0] sm:$0xff]
    %v588 = vld [vmem:[#allocation4 + $0xd8] sm:$0xff]
    %v589 = vld [vmem:[#allocation4 + $0xe0] sm:$0xff]
    %v590 = vld [vmem:[#allocation4 + $0xe8] sm:$0xff]
    %v591 = vld [vmem:[#allocation4 + $0xf0] sm:$0xff]
    %v592 = vld [vmem:[#allocation4 + $0xf8] sm:$0xff]
    %v625 = vunpack.c.l.b16 %v561
    %v626 = vunpack.c.h.b16 %v561
    %v627 = vunpack.c.l.b16 %v562
    %v628 = vunpack.c.h.b16 %v562
    %v629 = vunpack.c.l.b16 %v563
    %v630 = vunpack.c.h.b16 %v563
    %v631 = vunpack.c.l.b16 %v564
    %v632 = vunpack.c.h.b16 %v564
    %v633 = vunpack.c.l.b16 %v565
    %v634 = vunpack.c.h.b16 %v565
    %v635 = vunpack.c.l.b16 %v566
    %v636 = vunpack.c.h.b16 %v566
    %v637 = vunpack.c.l.b16 %v567
    %v638 = vunpack.c.h.b16 %v567
    %v639 = vunpack.c.l.b16 %v568
    %v640 = vunpack.c.h.b16 %v568
    %v641 = vunpack.c.l.b16 %v569
    %v642 = vunpack.c.h.b16 %v569
    %v643 = vunpack.c.l.b16 %v570
    %v644 = vunpack.c.h.b16 %v570
    %v645 = vunpack.c.l.b16 %v571
    %v646 = vunpack.c.h.b16 %v571
    %v647 = vunpack.c.l.b16 %v572
    %v648 = vunpack.c.h.b16 %v572
    %v649 = vunpack.c.l.b16 %v573
    %v650 = vunpack.c.h.b16 %v573
    %v651 = vunpack.c.l.b16 %v574
    %v652 = vunpack.c.h.b16 %v574
    %v653 = vunpack.c.l.b16 %v575
    %v654 = vunpack.c.h.b16 %v575
    %v655 = vunpack.c.l.b16 %v576
    %v656 = vunpack.c.h.b16 %v576
    %v657 = vunpack.c.l.b16 %v577
    %v658 = vunpack.c.h.b16 %v577
    %v659 = vunpack.c.l.b16 %v578
    %v660 = vunpack.c.h.b16 %v578
    %v661 = vunpack.c.l.b16 %v579
    %v662 = vunpack.c.h.b16 %v579
    %v663 = vunpack.c.l.b16 %v580
    %v664 = vunpack.c.h.b16 %v580
    %v665 = vunpack.c.l.b16 %v581
    %v666 = vunpack.c.h.b16 %v581
    %v667 = vunpack.c.l.b16 %v582
    %v668 = vunpack.c.h.b16 %v582
    %v669 = vunpack.c.l.b16 %v583
    %v670 = vunpack.c.h.b16 %v583
    %v671 = vunpack.c.l.b16 %v584
    %v672 = vunpack.c.h.b16 %v584
    %v673 = vunpack.c.l.b16 %v585
    %v674 = vunpack.c.h.b16 %v585
    %v675 = vunpack.c.l.b16 %v586
    %v676 = vunpack.c.h.b16 %v586
    %v677 = vunpack.c.l.b16 %v587
    %v678 = vunpack.c.h.b16 %v587
    %v679 = vunpack.c.l.b16 %v588
    %v680 = vunpack.c.h.b16 %v588
    %v681 = vunpack.c.l.b16 %v589
    %v682 = vunpack.c.h.b16 %v589
    %v683 = vunpack.c.l.b16 %v590
    %v684 = vunpack.c.h.b16 %v590
    %v685 = vunpack.c.l.b16 %v591
    %v686 = vunpack.c.h.b16 %v591
    %v687 = vunpack.c.l.b16 %v592
    %v688 = vunpack.c.h.b16 %v592
    %v689 = vpack.c.b16 %v629, %v625
    %v690 = vpack.c.b16 %v630, %v626
    %v691 = vpack.c.b16 %v631, %v627
    %v692 = vpack.c.b16 %v632, %v628
    %v693 = vpack.c.b16 %v637, %v633
    %v694 = vpack.c.b16 %v638, %v634
    %v695 = vpack.c.b16 %v639, %v635
    %v696 = vpack.c.b16 %v640, %v636
    %v697 = vpack.c.b16 %v645, %v641
    %v698 = vpack.c.b16 %v646, %v642
    %v699 = vpack.c.b16 %v647, %v643
    %v700 = vpack.c.b16 %v648, %v644
    %v701 = vpack.c.b16 %v653, %v649
    %v702 = vpack.c.b16 %v654, %v650
    %v703 = vpack.c.b16 %v655, %v651
    %v704 = vpack.c.b16 %v656, %v652
    %v705 = vpack.c.b16 %v661, %v657
    %v706 = vpack.c.b16 %v662, %v658
    %v707 = vpack.c.b16 %v663, %v659
    %v708 = vpack.c.b16 %v664, %v660
    %v709 = vpack.c.b16 %v669, %v665
    %v710 = vpack.c.b16 %v670, %v666
    %v711 = vpack.c.b16 %v671, %v667
    %v712 = vpack.c.b16 %v672, %v668
    %v713 = vpack.c.b16 %v677, %v673
    %v714 = vpack.c.b16 %v678, %v674
    %v715 = vpack.c.b16 %v679, %v675
    %v716 = vpack.c.b16 %v680, %v676
    %v717 = vpack.c.b16 %v685, %v681
    %v718 = vpack.c.b16 %v686, %v682
    %v719 = vpack.c.b16 %v687, %v683
    %v720 = vpack.c.b16 %v688, %v684
    %753 = vmatprep.subr.bf16.mxu0 %v690
    %754 = vmatpush1.bf16.msra.mxu0 %v689
    %755 = vmatprep.subr.bf16.mxu0 %v694
    %756 = vmatpush1.bf16.msra.mxu0 %v693
    %757 = vmatprep.subr.bf16.mxu0 %v698
    %758 = vmatpush1.bf16.msra.mxu0 %v697
    %759 = vmatprep.subr.bf16.mxu0 %v702
    %760 = vmatpush1.bf16.msra.mxu0 %v701
    %761 = vmatprep.subr.bf16.mxu0 %v706
    %762 = vmatpush1.bf16.msra.mxu0 %v705
    %763 = vmatprep.subr.bf16.mxu0 %v710
    %764 = vmatpush1.bf16.msra.mxu0 %v709
    %765 = vmatprep.subr.bf16.mxu0 %v714
    %766 = vmatpush1.bf16.msra.mxu0 %v713
    %767 = vmatprep.subr.bf16.mxu0 %v718
    %768 = vmatpush1.bf16.msra.mxu0 %v717
    %769 = vmatprep.subr.bf16.mxu0 0
    %770 = vmatpush1.bf16.msra.mxu0 0
    %771 = vmatprep.subr.bf16.mxu0 0
    %772 = vmatpush1.bf16.msra.mxu0 0
    %773 = vmatprep.subr.bf16.mxu0 0
    %774 = vmatpush1.bf16.msra.mxu0 0
    %775 = vmatprep.subr.bf16.mxu0 0
    %776 = vmatpush1.bf16.msra.mxu0 0
    %777 = vmatprep.subr.bf16.mxu0 0
    %778 = vmatpush1.bf16.msra.mxu0 0
    %779 = vmatprep.subr.bf16.mxu0 0
    %780 = vmatpush1.bf16.msra.mxu0 0
    %781 = vmatprep.subr.bf16.mxu0 0
    %782 = vmatpush1.bf16.msra.mxu0 0
    %783 = vmatprep.subr.bf16.mxu0 0
    %784 = vmatpush1.bf16.msra.mxu0 0
    %785 = vmatprep.mubr.bf16.mxu0 0
    %786 = vmatmul.mubr.bf16.gmra.mrb[0].mxu0 0
    %v787 = vpop.f32.mrb[0].mxu0
    %v788 = vadd.f32 0.0, %v787
    %v789 = vpop.f32.mrb[0].mxu0
    %v790 = vadd.f32 0.0, %v789
    %v791 = vpop.f32.mrb[0].mxu0
    %v792 = vpop.f32.mrb[0].mxu0
    %793 = vdwg.mxu0
    %794 = vmatprep.subr.bf16.mxu0 %v692
    %795 = vmatpush1.bf16.msra.mxu0 %v691
    %796 = vmatprep.subr.bf16.mxu0 %v696
    %797 = vmatpush1.bf16.msra.mxu0 %v695
    %798 = vmatprep.subr.bf16.mxu0 %v700
    %799 = vmatpush1.bf16.msra.mxu0 %v699
    %800 = vmatprep.subr.bf16.mxu0 %v704
    %801 = vmatpush1.bf16.msra.mxu0 %v703
    %802 = vmatprep.subr.bf16.mxu0 %v708
    %803 = vmatpush1.bf16.msra.mxu0 %v707
    %804 = vmatprep.subr.bf16.mxu0 %v712
    %805 = vmatpush1.bf16.msra.mxu0 %v711
    %806 = vmatprep.subr.bf16.mxu0 %v716
    %807 = vmatpush1.bf16.msra.mxu0 %v715
    %808 = vmatprep.subr.bf16.mxu0 %v720
    %809 = vmatpush1.bf16.msra.mxu0 %v719
    %810 = vmatprep.subr.bf16.mxu0 0
    %811 = vmatpush1.bf16.msra.mxu0 0
    %812 = vmatprep.subr.bf16.mxu0 0
    %813 = vmatpush1.bf16.msra.mxu0 0
    %814 = vmatprep.subr.bf16.mxu0 0
    %815 = vmatpush1.bf16.msra.mxu0 0
    %816 = vmatprep.subr.bf16.mxu0 0
    %817 = vmatpush1.bf16.msra.mxu0 0
    %818 = vmatprep.subr.bf16.mxu0 0
    %819 = vmatpush1.bf16.msra.mxu0 0
    %820 = vmatprep.subr.bf16.mxu0 0
    %821 = vmatpush1.bf16.msra.mxu0 0
    %822 = vmatprep.subr.bf16.mxu0 0
    %823 = vmatpush1.bf16.msra.mxu0 0
    %824 = vmatprep.subr.bf16.mxu0 0
    %825 = vmatpush1.bf16.msra.mxu0 0
    %826 = vmatprep.mubr.bf16.mxu0 0
    %827 = vmatmul.mubr.bf16.gmra.mrb[0].mxu0 0
    %v828 = vpop.f32.mrb[0].mxu0
    %v829 = vadd.f32 0.0, %v828
    %v830 = vpop.f32.mrb[0].mxu0
    %v831 = vadd.f32 0.0, %v830
    %v832 = vpop.f32.mrb[0].mxu0
    %v833 = vpop.f32.mrb[0].mxu0
    %834 = vdwg.mxu0
    %v835 = vadd.f32 %v557, %v788
    %v836 = vadd.f32 %v558, %v790
    %v837 = vadd.f32 %v559, %v829
    %v838 = vadd.f32 %v560, %v831
    %v839 = vxor.u32 %v835, 2147483648
    %v840 = vxor.u32 %v836, 2147483648
    %v841 = vxor.u32 %v837, 2147483648
    %v842 = vmul.f32 %v839, 1.442695
    %v843 = vpow.pop %v842
    %v844 = vmul.f32 %v840, 1.442695
    %v845 = vpow.pop %v844
    %v846 = vmul.f32 %v841, 1.442695
    %v847 = vpow.pop %v846
    %v848 = vadd.f32 %v843, 1.0
    %v849 = vadd.f32 %v845, 1.0
    %v850 = vadd.f32 %v847, 1.0
    %v851 = vrcp.pop %v848
    %v852 = vmul.f32 1.0, %v851
    %v853 = vrcp.pop %v849
    %v854 = vmul.f32 1.0, %v853
    %v855 = vrcp.pop %v850
    %v856 = vmul.f32 1.0, %v855
    %v857 = vtanh.pop %v838
    %v858 = vmul.f32 %v854, 0.0
    %v859 = vmul.f32 %v852, %v857
    %v860 = vadd.f32 %v858, %v859
    %v861 = vtanh.pop %v860
    %v862 = vmul.f32 %v856, %v861
    %864 = vset.pattern.permute.xlu0 0
    %865 = vperm.xlu0 %864, %v549
    %v866 = vpop.permute.xlu0 %865
    %v868 = vmul.f32 %v862, %v866
    %v869 = vpack.c.bf16 %v868, %v868
    %870 = vst [vmem:[#allocation9] sm:$0xf] %v869
    %v871 = vld [vmem:[#allocation3 + $0xe0] sm:$0xff]
    %v872 = vld [vmem:[#allocation3 + $0xe8] sm:$0xff]
    %v873 = vld [vmem:[#allocation3 + $0xf0] sm:$0xff]
    %v874 = vld [vmem:[#allocation3 + $0xf8] sm:$0xff]
    %v875 = vld [vmem:[#allocation7] sm:$0xff]
    %v876 = vld [vmem:[#allocation7 + $0x8] sm:$0xff]
    %v877 = vld [vmem:[#allocation7 + $0x10] sm:$0xff]
    %v878 = vld [vmem:[#allocation7 + $0x18] sm:$0xff]
    %v879 = vld [vmem:[#allocation7 + $0x20] sm:$0xff]
    %v880 = vld [vmem:[#allocation7 + $0x28] sm:$0xff]
    %v881 = vld [vmem:[#allocation7 + $0x30] sm:$0xff]
    %v882 = vld [vmem:[#allocation7 + $0x38] sm:$0xff]
    %v883 = vld [vmem:[#allocation7 + $0x40] sm:$0xff]
    %v884 = vld [vmem:[#allocation7 + $0x48] sm:$0xff]
    %v885 = vld [vmem:[#allocation7 + $0x50] sm:$0xff]
    %v886 = vld [vmem:[#allocation7 + $0x58] sm:$0xff]
    %v887 = vld [vmem:[#allocation7 + $0x60] sm:$0xff]
    %v888 = vld [vmem:[#allocation7 + $0x68] sm:$0xff]
    %v889 = vld [vmem:[#allocation7 + $0x70] sm:$0xff]
    %v890 = vld [vmem:[#allocation7 + $0x78] sm:$0xff]
    %v891 = vld [vmem:[#allocation7 + $0x80] sm:$0xff]
    %v892 = vld [vmem:[#allocation7 + $0x88] sm:$0xff]
    %v893 = vld [vmem:[#allocation7 + $0x90] sm:$0xff]
    %v894 = vld [vmem:[#allocation7 + $0x98] sm:$0xff]
    %v895 = vld [vmem:[#allocation7 + $0xa0] sm:$0xff]
    %v896 = vld [vmem:[#allocation7 + $0xa8] sm:$0xff]
    %v897 = vld [vmem:[#allocation7 + $0xb0] sm:$0xff]
    %v898 = vld [vmem:[#allocation7 + $0xb8] sm:$0xff]
    %v899 = vld [vmem:[#allocation7 + $0xc0] sm:$0xff]
    %v900 = vld [vmem:[#allocation7 + $0xc8] sm:$0xff]
    %v901 = vld [vmem:[#allocation7 + $0xd0] sm:$0xff]
    %v902 = vld [vmem:[#allocation7 + $0xd8] sm:$0xff]
    %v903 = vld [vmem:[#allocation7 + $0xe0] sm:$0xff]
    %v904 = vld [vmem:[#allocation7 + $0xe8] sm:$0xff]
    %v905 = vld [vmem:[#allocation7 + $0xf0] sm:$0xff]
    %v906 = vld [vmem:[#allocation7 + $0xf8] sm:$0xff]
    %v939 = vunpack.c.l.b16 %v875
    %v940 = vunpack.c.h.b16 %v875
    %v941 = vunpack.c.l.b16 %v876
    %v942 = vunpack.c.h.b16 %v876
    %v943 = vunpack.c.l.b16 %v877
    %v944 = vunpack.c.h.b16 %v877
    %v945 = vunpack.c.l.b16 %v878
    %v946 = vunpack.c.h.b16 %v878
    %v947 = vunpack.c.l.b16 %v879
    %v948 = vunpack.c.h.b16 %v879
    %v949 = vunpack.c.l.b16 %v880
    %v950 = vunpack.c.h.b16 %v880
    %v951 = vunpack.c.l.b16 %v881
    %v952 = vunpack.c.h.b16 %v881
    %v953 = vunpack.c.l.b16 %v882
    %v954 = vunpack.c.h.b16 %v882
    %v955 = vunpack.c.l.b16 %v883
    %v956 = vunpack.c.h.b16 %v883
    %v957 = vunpack.c.l.b16 %v884
    %v958 = vunpack.c.h.b16 %v884
    %v959 = vunpack.c.l.b16 %v885
    %v960 = vunpack.c.h.b16 %v885
    %v961 = vunpack.c.l.b16 %v886
    %v962 = vunpack.c.h.b16 %v886
    %v963 = vunpack.c.l.b16 %v887
    %v964 = vunpack.c.h.b16 %v887
    %v965 = vunpack.c.l.b16 %v888
    %v966 = vunpack.c.h.b16 %v888
    %v967 = vunpack.c.l.b16 %v889
    %v968 = vunpack.c.h.b16 %v889
    %v969 = vunpack.c.l.b16 %v890
    %v970 = vunpack.c.h.b16 %v890
    %v971 = vunpack.c.l.b16 %v891
    %v972 = vunpack.c.h.b16 %v891
    %v973 = vunpack.c.l.b16 %v892
    %v974 = vunpack.c.h.b16 %v892
    %v975 = vunpack.c.l.b16 %v893
    %v976 = vunpack.c.h.b16 %v893
    %v977 = vunpack.c.l.b16 %v894
    %v978 = vunpack.c.h.b16 %v894
    %v979 = vunpack.c.l.b16 %v895
    %v980 = vunpack.c.h.b16 %v895
    %v981 = vunpack.c.l.b16 %v896
    %v982 = vunpack.c.h.b16 %v896
    %v983 = vunpack.c.l.b16 %v897
    %v984 = vunpack.c.h.b16 %v897
    %v985 = vunpack.c.l.b16 %v898
    %v986 = vunpack.c.h.b16 %v898
    %v987 = vunpack.c.l.b16 %v899
    %v988 = vunpack.c.h.b16 %v899
    %v989 = vunpack.c.l.b16 %v900
    %v990 = vunpack.c.h.b16 %v900
    %v991 = vunpack.c.l.b16 %v901
    %v992 = vunpack.c.h.b16 %v901
    %v993 = vunpack.c.l.b16 %v902
    %v994 = vunpack.c.h.b16 %v902
    %v995 = vunpack.c.l.b16 %v903
    %v996 = vunpack.c.h.b16 %v903
    %v997 = vunpack.c.l.b16 %v904
    %v998 = vunpack.c.h.b16 %v904
    %v999 = vunpack.c.l.b16 %v905
    %v1000 = vunpack.c.h.b16 %v905
    %v1001 = vunpack.c.l.b16 %v906
    %v1002 = vunpack.c.h.b16 %v906
    %v1003 = vpack.c.b16 %v943, %v939
    %v1004 = vpack.c.b16 %v944, %v940
    %v1005 = vpack.c.b16 %v945, %v941
    %v1006 = vpack.c.b16 %v946, %v942
    %v1007 = vpack.c.b16 %v951, %v947
    %v1008 = vpack.c.b16 %v952, %v948
    %v1009 = vpack.c.b16 %v953, %v949
    %v1010 = vpack.c.b16 %v954, %v950
    %v1011 = vpack.c.b16 %v959, %v955
    %v1012 = vpack.c.b16 %v960, %v956
    %v1013 = vpack.c.b16 %v961, %v957
    %v1014 = vpack.c.b16 %v962, %v958
    %v1015 = vpack.c.b16 %v967, %v963
    %v1016 = vpack.c.b16 %v968, %v964
    %v1017 = vpack.c.b16 %v969, %v965
    %v1018 = vpack.c.b16 %v970, %v966
    %v1019 = vpack.c.b16 %v975, %v971
    %v1020 = vpack.c.b16 %v976, %v972
    %v1021 = vpack.c.b16 %v977, %v973
    %v1022 = vpack.c.b16 %v978, %v974
    %v1023 = vpack.c.b16 %v983, %v979
    %v1024 = vpack.c.b16 %v984, %v980
    %v1025 = vpack.c.b16 %v985, %v981
    %v1026 = vpack.c.b16 %v986, %v982
    %v1027 = vpack.c.b16 %v991, %v987
    %v1028 = vpack.c.b16 %v992, %v988
    %v1029 = vpack.c.b16 %v993, %v989
    %v1030 = vpack.c.b16 %v994, %v990
    %v1031 = vpack.c.b16 %v999, %v995
    %v1032 = vpack.c.b16 %v1000, %v996
    %v1033 = vpack.c.b16 %v1001, %v997
    %v1034 = vpack.c.b16 %v1002, %v998
    %1067 = vmatprep.subr.bf16.mxu0 %v1004
    %1068 = vmatpush1.bf16.msra.mxu0 %v1003
    %1069 = vmatprep.subr.bf16.mxu0 %v1008
    %1070 = vmatpush1.bf16.msra.mxu0 %v1007
    %1071 = vmatprep.subr.bf16.mxu0 %v1012
    %1072 = vmatpush1.bf16.msra.mxu0 %v1011
    %1073 = vmatprep.subr.bf16.mxu0 %v1016
    %1074 = vmatpush1.bf16.msra.mxu0 %v1015
    %1075 = vmatprep.subr.bf16.mxu0 %v1020
    %1076 = vmatpush1.bf16.msra.mxu0 %v1019
    %1077 = vmatprep.subr.bf16.mxu0 %v1024
    %1078 = vmatpush1.bf16.msra.mxu0 %v1023
    %1079 = vmatprep.subr.bf16.mxu0 %v1028
    %1080 = vmatpush1.bf16.msra.mxu0 %v1027
    %1081 = vmatprep.subr.bf16.mxu0 %v1032
    %1082 = vmatpush1.bf16.msra.mxu0 %v1031
    %1083 = vmatprep.subr.bf16.mxu0 0
    %1084 = vmatpush1.bf16.msra.mxu0 0
    %1085 = vmatprep.subr.bf16.mxu0 0
    %1086 = vmatpush1.bf16.msra.mxu0 0
    %1087 = vmatprep.subr.bf16.mxu0 0
    %1088 = vmatpush1.bf16.msra.mxu0 0
    %1089 = vmatprep.subr.bf16.mxu0 0
    %1090 = vmatpush1.bf16.msra.mxu0 0
    %1091 = vmatprep.subr.bf16.mxu0 0
    %1092 = vmatpush1.bf16.msra.mxu0 0
    %1093 = vmatprep.subr.bf16.mxu0 0
    %1094 = vmatpush1.bf16.msra.mxu0 0
    %1095 = vmatprep.subr.bf16.mxu0 0
    %1096 = vmatpush1.bf16.msra.mxu0 0
    %1097 = vmatprep.subr.bf16.mxu0 0
    %1098 = vmatpush1.bf16.msra.mxu0 0
    %1099 = vmatprep.mubr.bf16.mxu0 0
    %1100 = vmatmul.mubr.bf16.gmra.mrb[0].mxu0 0
    %v1101 = vpop.f32.mrb[0].mxu0
    %v1102 = vadd.f32 0.0, %v1101
    %v1103 = vpop.f32.mrb[0].mxu0
    %v1104 = vadd.f32 0.0, %v1103
    %v1105 = vpop.f32.mrb[0].mxu0
    %v1106 = vpop.f32.mrb[0].mxu0
    %1107 = vdwg.mxu0
    %1108 = vmatprep.subr.bf16.mxu0 %v1006
    %1109 = vmatpush1.bf16.msra.mxu0 %v1005
    %1110 = vmatprep.subr.bf16.mxu0 %v1010
    %1111 = vmatpush1.bf16.msra.mxu0 %v1009
    %1112 = vmatprep.subr.bf16.mxu0 %v1014
    %1113 = vmatpush1.bf16.msra.mxu0 %v1013
    %1114 = vmatprep.subr.bf16.mxu0 %v1018
    %1115 = vmatpush1.bf16.msra.mxu0 %v1017
    %1116 = vmatprep.subr.bf16.mxu0 %v1022
    %1117 = vmatpush1.bf16.msra.mxu0 %v1021
    %1118 = vmatprep.subr.bf16.mxu0 %v1026
    %1119 = vmatpush1.bf16.msra.mxu0 %v1025
    %1120 = vmatprep.subr.bf16.mxu0 %v1030
    %1121 = vmatpush1.bf16.msra.mxu0 %v1029
    %1122 = vmatprep.subr.bf16.mxu0 %v1034
    %1123 = vmatpush1.bf16.msra.mxu0 %v1033
    %1124 = vmatprep.subr.bf16.mxu0 0
    %1125 = vmatpush1.bf16.msra.mxu0 0
    %1126 = vmatprep.subr.bf16.mxu0 0
    %1127 = vmatpush1.bf16.msra.mxu0 0
    %1128 = vmatprep.subr.bf16.mxu0 0
    %1129 = vmatpush1.bf16.msra.mxu0 0
    %1130 = vmatprep.subr.bf16.mxu0 0
    %1131 = vmatpush1.bf16.msra.mxu0 0
    %1132 = vmatprep.subr.bf16.mxu0 0
    %1133 = vmatpush1.bf16.msra.mxu0 0
    %1134 = vmatprep.subr.bf16.mxu0 0
    %1135 = vmatpush1.bf16.msra.mxu0 0
    %1136 = vmatprep.subr.bf16.mxu0 0
    %1137 = vmatpush1.bf16.msra.mxu0 0
    %1138 = vmatprep.subr.bf16.mxu0 0
    %1139 = vmatpush1.bf16.msra.mxu0 0
    %1140 = vmatprep.mubr.bf16.mxu0 0
    %1141 = vmatmul.mubr.bf16.gmra.mrb[0].mxu0 0
    %v1142 = vpop.f32.mrb[0].mxu0
    %v1143 = vadd.f32 0.0, %v1142
    %v1144 = vpop.f32.mrb[0].mxu0
    %v1145 = vadd.f32 0.0, %v1144
    %v1146 = vpop.f32.mrb[0].mxu0
    %v1147 = vpop.f32.mrb[0].mxu0
    %1148 = vdwg.mxu0
    %v1149 = vadd.f32 %v871, %v1102
    %v1150 = vadd.f32 %v872, %v1104
    %v1151 = vadd.f32 %v873, %v1143
    %v1152 = vadd.f32 %v874, %v1145
    %v1153 = vxor.u32 %v1149, 2147483648
    %v1154 = vxor.u32 %v1150, 2147483648
    %v1155 = vxor.u32 %v1151, 2147483648
    %v1156 = vmul.f32 %v1153, 1.442695
    %v1157 = vpow.pop %v1156
    %v1158 = vmul.f32 %v1154, 1.442695
    %v1159 = vpow.pop %v1158
    %v1160 = vmul.f32 %v1155, 1.442695
    %v1161 = vpow.pop %v1160
    %v1162 = vadd.f32 %v1157, 1.0
    %v1163 = vadd.f32 %v1159, 1.0
    %v1164 = vadd.f32 %v1161, 1.0
    %v1165 = vrcp.pop %v1162
    %v1166 = vmul.f32 1.0, %v1165
    %v1167 = vrcp.pop %v1163
    %v1168 = vmul.f32 1.0, %v1167
    %v1169 = vrcp.pop %v1164
    %v1170 = vmul.f32 1.0, %v1169
    %v1171 = vtanh.pop %v1152
    %v1172 = vmul.f32 %v1168, 0.0
    %v1173 = vmul.f32 %v1166, %v1171
    %v1174 = vadd.f32 %v1172, %v1173
    %v1175 = vtanh.pop %v1174
    %v1176 = vmul.f32 %v1170, %v1175
    %1178 = vset.pattern.permute.xlu0 0
    %1179 = vperm.xlu0 %1178, %v556
    %v1180 = vpop.permute.xlu0 %1179
    %v1182 = vmul.f32 %v1176, %v1180
    %v1183 = vsub.f32 1.0, %v556
    %1185 = vset.pattern.permute.xlu0 0
    %1186 = vperm.xlu0 %1185, %v1183
    %v1187 = vpop.permute.xlu0 %1186
    %v1189 = vmul.f32 %v1187, 0.0
    %v1190 = vadd.f32 %v1182, %v1189
    %v1191 = vmul.f32 %v1174, %v1180
    %v1192 = vadd.f32 %v1191, %v1189
    %v1193 = vpack.c.bf16 %v1190, %v1190
    %1194 = vst [vmem:[#allocation9 + $0x3c] sm:$0xf] %v1193
    %v1195 = vld [vmem:[#allocation2 + $0x20] sm:$0xff]
    %v1196 = vld [vmem:[#allocation2 + $0x28] sm:$0xff]
    %v1197 = vld [vmem:[#allocation2 + $0x30] sm:$0xff]
    %v1198 = vld [vmem:[#allocation2 + $0x38] sm:$0xff]
    %v1199 = vpack.c.bf16 %v862, %v862
    %v1200 = vld [vmem:[#allocation4] sm:$0xff]
    %v1201 = vld [vmem:[#allocation4 + $0x8] sm:$0xff]
    %v1202 = vld [vmem:[#allocation4 + $0x10] sm:$0xff]
    %v1203 = vld [vmem:[#allocation4 + $0x18] sm:$0xff]
    %v1204 = vld [vmem:[#allocation4 + $0x20] sm:$0xff]
    %v1205 = vld [vmem:[#allocation4 + $0x28] sm:$0xff]
    %v1206 = vld [vmem:[#allocation4 + $0x30] sm:$0xff]
    %v1207 = vld [vmem:[#allocation4 + $0x38] sm:$0xff]
    %v1208 = vld [vmem:[#allocation4 + $0x40] sm:$0xff]
    %v1209 = vld [vmem:[#allocation4 + $0x48] sm:$0xff]
    %v1210 = vld [vmem:[#allocation4 + $0x50] sm:$0xff]
    %v1211 = vld [vmem:[#allocation4 + $0x58] sm:$0xff]
    %v1212 = vld [vmem:[#allocation4 + $0x60] sm:$0xff]
    %v1213 = vld [vmem:[#allocation4 + $0x68] sm:$0xff]
    %v1214 = vld [vmem:[#allocation4 + $0x70] sm:$0xff]
    %v1215 = vld [vmem:[#allocation4 + $0x78] sm:$0xff]
    %v1216 = vld [vmem:[#allocation4 + $0x80] sm:$0xff]
    %v1217 = vld [vmem:[#allocation4 + $0x88] sm:$0xff]
    %v1218 = vld [vmem:[#allocation4 + $0x90] sm:$0xff]
    %v1219 = vld [vmem:[#allocation4 + $0x98] sm:$0xff]
    %v1220 = vld [vmem:[#allocation4 + $0xa0] sm:$0xff]
    %v1221 = vld [vmem:[#allocation4 + $0xa8] sm:$0xff]
    %v1222 = vld [vmem:[#allocation4 + $0xb0] sm:$0xff]
    %v1223 = vld [vmem:[#allocation4 + $0xb8] sm:$0xff]
    %v1224 = vld [vmem:[#allocation4 + $0xc0] sm:$0xff]
    %v1225 = vld [vmem:[#allocation4 + $0xc8] sm:$0xff]
    %v1226 = vld [vmem:[#allocation4 + $0xd0] sm:$0xff]
    %v1227 = vld [vmem:[#allocation4 + $0xd8] sm:$0xff]
    %v1228 = vld [vmem:[#allocation4 + $0xe0] sm:$0xff]
    %v1229 = vld [vmem:[#allocation4 + $0xe8] sm:$0xff]
    %v1230 = vld [vmem:[#allocation4 + $0xf0] sm:$0xff]
    %v1231 = vld [vmem:[#allocation4 + $0xf8] sm:$0xff]
    %v1264 = vunpack.c.l.b16 %v1200
    %v1265 = vunpack.c.h.b16 %v1200
    %v1266 = vunpack.c.l.b16 %v1201
    %v1267 = vunpack.c.h.b16 %v1201
    %v1268 = vunpack.c.l.b16 %v1202
    %v1269 = vunpack.c.h.b16 %v1202
    %v1270 = vunpack.c.l.b16 %v1203
    %v1271 = vunpack.c.h.b16 %v1203
    %v1272 = vunpack.c.l.b16 %v1204
    %v1273 = vunpack.c.h.b16 %v1204
    %v1274 = vunpack.c.l.b16 %v1205
    %v1275 = vunpack.c.h.b16 %v1205
    %v1276 = vunpack.c.l.b16 %v1206
    %v1277 = vunpack.c.h.b16 %v1206
    %v1278 = vunpack.c.l.b16 %v1207
    %v1279 = vunpack.c.h.b16 %v1207
    %v1280 = vunpack.c.l.b16 %v1208
    %v1281 = vunpack.c.h.b16 %v1208
    %v1282 = vunpack.c.l.b16 %v1209
    %v1283 = vunpack.c.h.b16 %v1209
    %v1284 = vunpack.c.l.b16 %v1210
    %v1285 = vunpack.c.h.b16 %v1210
    %v1286 = vunpack.c.l.b16 %v1211
    %v1287 = vunpack.c.h.b16 %v1211
    %v1288 = vunpack.c.l.b16 %v1212
    %v1289 = vunpack.c.h.b16 %v1212
    %v1290 = vunpack.c.l.b16 %v1213
    %v1291 = vunpack.c.h.b16 %v1213
    %v1292 = vunpack.c.l.b16 %v1214
    %v1293 = vunpack.c.h.b16 %v1214
    %v1294 = vunpack.c.l.b16 %v1215
    %v1295 = vunpack.c.h.b16 %v1215
    %v1296 = vunpack.c.l.b16 %v1216
    %v1297 = vunpack.c.h.b16 %v1216
    %v1298 = vunpack.c.l.b16 %v1217
    %v1299 = vunpack.c.h.b16 %v1217
    %v1300 = vunpack.c.l.b16 %v1218
    %v1301 = vunpack.c.h.b16 %v1218
    %v1302 = vunpack.c.l.b16 %v1219
    %v1303 = vunpack.c.h.b16 %v1219
    %v1304 = vunpack.c.l.b16 %v1220
    %v1305 = vunpack.c.h.b16 %v1220
    %v1306 = vunpack.c.l.b16 %v1221
    %v1307 = vunpack.c.h.b16 %v1221
    %v1308 = vunpack.c.l.b16 %v1222
    %v1309 = vunpack.c.h.b16 %v1222
    %v1310 = vunpack.c.l.b16 %v1223
    %v1311 = vunpack.c.h.b16 %v1223
    %v1312 = vunpack.c.l.b16 %v1224
    %v1313 = vunpack.c.h.b16 %v1224
    %v1314 = vunpack.c.l.b16 %v1225
    %v1315 = vunpack.c.h.b16 %v1225
    %v1316 = vunpack.c.l.b16 %v1226
    %v1317 = vunpack.c.h.b16 %v1226
    %v1318 = vunpack.c.l.b16 %v1227
    %v1319 = vunpack.c.h.b16 %v1227
    %v1320 = vunpack.c.l.b16 %v1228
    %v1321 = vunpack.c.h.b16 %v1228
    %v1322 = vunpack.c.l.b16 %v1229
    %v1323 = vunpack.c.h.b16 %v1229
    %v1324 = vunpack.c.l.b16 %v1230
    %v1325 = vunpack.c.h.b16 %v1230
    %v1326 = vunpack.c.l.b16 %v1231
    %v1327 = vunpack.c.h.b16 %v1231
    %v1328 = vpack.c.b16 %v1268, %v1264
    %v1329 = vpack.c.b16 %v1269, %v1265
    %v1330 = vpack.c.b16 %v1270, %v1266
    %v1331 = vpack.c.b16 %v1271, %v1267
    %v1332 = vpack.c.b16 %v1276, %v1272
    %v1333 = vpack.c.b16 %v1277, %v1273
    %v1334 = vpack.c.b16 %v1278, %v1274
    %v1335 = vpack.c.b16 %v1279, %v1275
    %v1336 = vpack.c.b16 %v1284, %v1280
    %v1337 = vpack.c.b16 %v1285, %v1281
    %v1338 = vpack.c.b16 %v1286, %v1282
    %v1339 = vpack.c.b16 %v1287, %v1283
    %v1340 = vpack.c.b16 %v1292, %v1288
    %v1341 = vpack.c.b16 %v1293, %v1289
    %v1342 = vpack.c.b16 %v1294, %v1290
    %v1343 = vpack.c.b16 %v1295, %v1291
    %v1344 = vpack.c.b16 %v1300, %v1296
    %v1345 = vpack.c.b16 %v1301, %v1297
    %v1346 = vpack.c.b16 %v1302, %v1298
    %v1347 = vpack.c.b16 %v1303, %v1299
    %v1348 = vpack.c.b16 %v1308, %v1304
    %v1349 = vpack.c.b16 %v1309, %v1305
    %v1350 = vpack.c.b16 %v1310, %v1306
    %v1351 = vpack.c.b16 %v1311, %v1307
    %v1352 = vpack.c.b16 %v1316, %v1312
    %v1353 = vpack.c.b16 %v1317, %v1313
    %v1354 = vpack.c.b16 %v1318, %v1314
    %v1355 = vpack.c.b16 %v1319, %v1315
    %v1356 = vpack.c.b16 %v1324, %v1320
    %v1357 = vpack.c.b16 %v1325, %v1321
    %v1358 = vpack.c.b16 %v1326, %v1322
    %v1359 = vpack.c.b16 %v1327, %v1323
    %1392 = vmatprep.subr.bf16.mxu0 %v1329
    %1393 = vmatpush1.bf16.msra.mxu0 %v1328
    %1394 = vmatprep.subr.bf16.mxu0 %v1333
    %1395 = vmatpush1.bf16.msra.mxu0 %v1332
    %1396 = vmatprep.subr.bf16.mxu0 %v1337
    %1397 = vmatpush1.bf16.msra.mxu0 %v1336
    %1398 = vmatprep.subr.bf16.mxu0 %v1341
    %1399 = vmatpush1.bf16.msra.mxu0 %v1340
    %1400 = vmatprep.subr.bf16.mxu0 %v1345
    %1401 = vmatpush1.bf16.msra.mxu0 %v1344
    %1402 = vmatprep.subr.bf16.mxu0 %v1349
    %1403 = vmatpush1.bf16.msra.mxu0 %v1348
    %1404 = vmatprep.subr.bf16.mxu0 %v1353
    %1405 = vmatpush1.bf16.msra.mxu0 %v1352
    %1406 = vmatprep.subr.bf16.mxu0 %v1357
    %1407 = vmatpush1.bf16.msra.mxu0 %v1356
    %1408 = vmatprep.subr.bf16.mxu0 0
    %1409 = vmatpush1.bf16.msra.mxu0 0
    %1410 = vmatprep.subr.bf16.mxu0 0
    %1411 = vmatpush1.bf16.msra.mxu0 0
    %1412 = vmatprep.subr.bf16.mxu0 0
    %1413 = vmatpush1.bf16.msra.mxu0 0
    %1414 = vmatprep.subr.bf16.mxu0 0
    %1415 = vmatpush1.bf16.msra.mxu0 0
    %1416 = vmatprep.subr.bf16.mxu0 0
    %1417 = vmatpush1.bf16.msra.mxu0 0
    %1418 = vmatprep.subr.bf16.mxu0 0
    %1419 = vmatpush1.bf16.msra.mxu0 0
    %1420 = vmatprep.subr.bf16.mxu0 0
    %1421 = vmatpush1.bf16.msra.mxu0 0
    %1422 = vmatprep.subr.bf16.mxu0 0
    %1423 = vmatpush1.bf16.msra.mxu0 0
    %1424 = vmatprep.mubr.bf16.mxu0 0
    %1425 = vmatmul.mubr.bf16.gmra.mrb[0].mxu0 %v1199
    %v1426 = vpop.f32.mrb[0].mxu0
    %v1427 = vadd.f32 0.0, %v1426
    %v1428 = vpop.f32.mrb[0].mxu0
    %v1429 = vadd.f32 0.0, %v1428
    %v1430 = vpop.f32.mrb[0].mxu0
    %v1431 = vpop.f32.mrb[0].mxu0
    %1432 = vdwg.mxu0
    %1433 = vmatprep.subr.bf16.mxu0 %v1331
    %1434 = vmatpush1.bf16.msra.mxu0 %v1330
    %1435 = vmatprep.subr.bf16.mxu0 %v1335
    %1436 = vmatpush1.bf16.msra.mxu0 %v1334
    %1437 = vmatprep.subr.bf16.mxu0 %v1339
    %1438 = vmatpush1.bf16.msra.mxu0 %v1338
    %1439 = vmatprep.subr.bf16.mxu0 %v1343
    %1440 = vmatpush1.bf16.msra.mxu0 %v1342
    %1441 = vmatprep.subr.bf16.mxu0 %v1347
    %1442 = vmatpush1.bf16.msra.mxu0 %v1346
    %1443 = vmatprep.subr.bf16.mxu0 %v1351
    %1444 = vmatpush1.bf16.msra.mxu0 %v1350
    %1445 = vmatprep.subr.bf16.mxu0 %v1355
    %1446 = vmatpush1.bf16.msra.mxu0 %v1354
    %1447 = vmatprep.subr.bf16.mxu0 %v1359
    %1448 = vmatpush1.bf16.msra.mxu0 %v1358
    %1449 = vmatprep.subr.bf16.mxu0 0
    %1450 = vmatpush1.bf16.msra.mxu0 0
    %1451 = vmatprep.subr.bf16.mxu0 0
    %1452 = vmatpush1.bf16.msra.mxu0 0
    %1453 = vmatprep.subr.bf16.mxu0 0
    %1454 = vmatpush1.bf16.msra.mxu0 0
    %1455 = vmatprep.subr.bf16.mxu0 0
    %1456 = vmatpush1.bf16.msra.mxu0 0
    %1457 = vmatprep.subr.bf16.mxu0 0
    %1458 = vmatpush1.bf16.msra.mxu0 0
    %1459 = vmatprep.subr.bf16.mxu0 0
    %1460 = vmatpush1.bf16.msra.mxu0 0
    %1461 = vmatprep.subr.bf16.mxu0 0
    %1462 = vmatpush1.bf16.msra.mxu0 0
    %1463 = vmatprep.subr.bf16.mxu0 0
    %1464 = vmatpush1.bf16.msra.mxu0 0
    %1465 = vmatprep.mubr.bf16.mxu0 0
    %1466 = vmatmul.mubr.bf16.gmra.mrb[0].mxu0 %v1199
    %v1467 = vpop.f32.mrb[0].mxu0
    %v1468 = vadd.f32 0.0, %v1467
    %v1469 = vpop.f32.mrb[0].mxu0
    %v1470 = vadd.f32 0.0, %v1469
    %v1471 = vpop.f32.mrb[0].mxu0
    %v1472 = vpop.f32.mrb[0].mxu0
    %1473 = vdwg.mxu0
    %v1474 = vadd.f32 %v1195, %v1427
    %v1475 = vadd.f32 %v1196, %v1429
    %v1476 = vadd.f32 %v1197, %v1468
    %v1477 = vadd.f32 %v1198, %v1470
    %v1478 = vxor.u32 %v1474, 2147483648
    %v1479 = vxor.u32 %v1475, 2147483648
    %v1480 = vxor.u32 %v1476, 2147483648
    %v1481 = vmul.f32 %v1478, 1.442695
    %v1482 = vpow.pop %v1481
    %v1483 = vmul.f32 %v1479, 1.442695
    %v1484 = vpow.pop %v1483
    %v1485 = vmul.f32 %v1480, 1.442695
    %v1486 = vpow.pop %v1485
    %v1487 = vadd.f32 %v1482, 1.0
    %v1488 = vadd.f32 %v1484, 1.0
    %v1489 = vadd.f32 %v1486, 1.0
    %v1490 = vrcp.pop %v1487
    %v1491 = vmul.f32 1.0, %v1490
    %v1492 = vrcp.pop %v1488
    %v1493 = vmul.f32 1.0, %v1492
    %v1494 = vrcp.pop %v1489
    %v1495 = vmul.f32 1.0, %v1494
    %v1496 = vtanh.pop %v1477
    %v1497 = vmul.f32 %v1493, %v860
    %v1498 = vmul.f32 %v1491, %v1496
    %v1499 = vadd.f32 %v1497, %v1498
    %v1500 = vtanh.pop %v1499
    %v1501 = vmul.f32 %v1495, %v1500
    %1503 = vset.pattern.permute.xlu0 0
    %1504 = vperm.xlu0 %1503, %v550
    %v1505 = vpop.permute.xlu0 %1504
    %v1507 = vmul.f32 %v1501, %v1505
    %v1508 = vpack.c.bf16 %v1507, %v1507
    %1509 = vst [vmem:[#allocation9 + $0x8] sm:$0xf] %v1508
    %v1510 = vld [vmem:[#allocation3 + $0xc0] sm:$0xff]
    %v1511 = vld [vmem:[#allocation3 + $0xc8] sm:$0xff]
    %v1512 = vld [vmem:[#allocation3 + $0xd0] sm:$0xff]
    %v1513 = vld [vmem:[#allocation3 + $0xd8] sm:$0xff]
    %v1514 = vld [vmem:[#allocation7] sm:$0xff]
    %v1515 = vld [vmem:[#allocation7 + $0x8] sm:$0xff]
    %v1516 = vld [vmem:[#allocation7 + $0x10] sm:$0xff]
    %v1517 = vld [vmem:[#allocation7 + $0x18] sm:$0xff]
    %v1518 = vld [vmem:[#allocation7 + $0x20] sm:$0xff]
    %v1519 = vld [vmem:[#allocation7 + $0x28] sm:$0xff]
    %v1520 = vld [vmem:[#allocation7 + $0x30] sm:$0xff]
    %v1521 = vld [vmem:[#allocation7 + $0x38] sm:$0xff]
    %v1522 = vld [vmem:[#allocation7 + $0x40] sm:$0xff]
    %v1523 = vld [vmem:[#allocation7 + $0x48] sm:$0xff]
    %v1524 = vld [vmem:[#allocation7 + $0x50] sm:$0xff]
    %v1525 = vld [vmem:[#allocation7 + $0x58] sm:$0xff]
    %v1526 = vld [vmem:[#allocation7 + $0x60] sm:$0xff]
    %v1527 = vld [vmem:[#allocation7 + $0x68] sm:$0xff]
    %v1528 = vld [vmem:[#allocation7 + $0x70] sm:$0xff]
    %v1529 = vld [vmem:[#allocation7 + $0x78] sm:$0xff]
    %v1530 = vld [vmem:[#allocation7 + $0x80] sm:$0xff]
    %v1531 = vld [vmem:[#allocation7 + $0x88] sm:$0xff]
    %v1532 = vld [vmem:[#allocation7 + $0x90] sm:$0xff]
    %v1533 = vld [vmem:[#allocation7 + $0x98] sm:$0xff]
    %v1534 = vld [vmem:[#allocation7 + $0xa0] sm:$0xff]
    %v1535 = vld [vmem:[#allocation7 + $0xa8] sm:$0xff]
    %v1536 = vld [vmem:[#allocation7 + $0xb0] sm:$0xff]
    %v1537 = vld [vmem:[#allocation7 + $0xb8] sm:$0xff]
    %v1538 = vld [vmem:[#allocation7 + $0xc0] sm:$0xff]
    %v1539 = vld [vmem:[#allocation7 + $0xc8] sm:$0xff]
    %v1540 = vld [vmem:[#allocation7 + $0xd0] sm:$0xff]
    %v1541 = vld [vmem:[#allocation7 + $0xd8] sm:$0xff]
    %v1542 = vld [vmem:[#allocation7 + $0xe0] sm:$0xff]
    %v1543 = vld [vmem:[#allocation7 + $0xe8] sm:$0xff]
    %v1544 = vld [vmem:[#allocation7 + $0xf0] sm:$0xff]
    %v1545 = vld [vmem:[#allocation7 + $0xf8] sm:$0xff]
    %v1578 = vunpack.c.l.b16 %v1514
    %v1579 = vunpack.c.h.b16 %v1514
    %v1580 = vunpack.c.l.b16 %v1515
    %v1581 = vunpack.c.h.b16 %v1515
    %v1582 = vunpack.c.l.b16 %v1516
    %v1583 = vunpack.c.h.b16 %v1516
    %v1584 = vunpack.c.l.b16 %v1517
    %v1585 = vunpack.c.h.b16 %v1517
    %v1586 = vunpack.c.l.b16 %v1518
    %v1587 = vunpack.c.h.b16 %v1518
    %v1588 = vunpack.c.l.b16 %v1519
    %v1589 = vunpack.c.h.b16 %v1519
    %v1590 = vunpack.c.l.b16 %v1520
    %v1591 = vunpack.c.h.b16 %v1520
    %v1592 = vunpack.c.l.b16 %v1521
    %v1593 = vunpack.c.h.b16 %v1521
    %v1594 = vunpack.c.l.b16 %v1522
    %v1595 = vunpack.c.h.b16 %v1522
    %v1596 = vunpack.c.l.b16 %v1523
    %v1597 = vunpack.c.h.b16 %v1523
    %v1598 = vunpack.c.l.b16 %v1524
    %v1599 = vunpack.c.h.b16 %v1524
    %v1600 = vunpack.c.l.b16 %v1525
    %v1601 = vunpack.c.h.b16 %v1525
    %v1602 = vunpack.c.l.b16 %v1526
    %v1603 = vunpack.c.h.b16 %v1526
    %v1604 = vunpack.c.l.b16 %v1527
    %v1605 = vunpack.c.h.b16 %v1527
    %v1606 = vunpack.c.l.b16 %v1528
    %v1607 = vunpack.c.h.b16 %v1528
    %v1608 = vunpack.c.l.b16 %v1529
    %v1609 = vunpack.c.h.b16 %v1529
    %v1610 = vunpack.c.l.b16 %v1530
    %v1611 = vunpack.c.h.b16 %v1530
    %v1612 = vunpack.c.l.b16 %v1531
    %v1613 = vunpack.c.h.b16 %v1531
    %v1614 = vunpack.c.l.b16 %v1532
    %v1615 = vunpack.c.h.b16 %v1532
    %v1616 = vunpack.c.l.b16 %v1533
    %v1617 = vunpack.c.h.b16 %v1533
    %v1618 = vunpack.c.l.b16 %v1534
    %v1619 = vunpack.c.h.b16 %v1534
    %v1620 = vunpack.c.l.b16 %v1535
    %v1621 = vunpack.c.h.b16 %v1535
    %v1622 = vunpack.c.l.b16 %v1536
    %v1623 = vunpack.c.h.b16 %v1536
    %v1624 = vunpack.c.l.b16 %v1537
    %v1625 = vunpack.c.h.b16 %v1537
    %v1626 = vunpack.c.l.b16 %v1538
    %v1627 = vunpack.c.h.b16 %v1538
    %v1628 = vunpack.c.l.b16 %v1539
    %v1629 = vunpack.c.h.b16 %v1539
    %v1630 = vunpack.c.l.b16 %v1540
    %v1631 = vunpack.c.h.b16 %v1540
    %v1632 = vunpack.c.l.b16 %v1541
    %v1633 = vunpack.c.h.b16 %v1541
    %v1634 = vunpack.c.l.b16 %v1542
    %v1635 = vunpack.c.h.b16 %v1542
    %v1636 = vunpack.c.l.b16 %v1543
    %v1637 = vunpack.c.h.b16 %v1543
    %v1638 = vunpack.c.l.b16 %v1544
    %v1639 = vunpack.c.h.b16 %v1544
    %v1640 = vunpack.c.l.b16 %v1545
    %v1641 = vunpack.c.h.b16 %v1545
    %v1642 = vpack.c.b16 %v1582, %v1578
    %v1643 = vpack.c.b16 %v1583, %v1579
    %v1644 = vpack.c.b16 %v1584, %v1580
    %v1645 = vpack.c.b16 %v1585, %v1581
    %v1646 = vpack.c.b16 %v1590, %v1586
    %v1647 = vpack.c.b16 %v1591, %v1587
    %v1648 = vpack.c.b16 %v1592, %v1588
    %v1649 = vpack.c.b16 %v1593, %v1589
    %v1650 = vpack.c.b16 %v1598, %v1594
    %v1651 = vpack.c.b16 %v1599, %v1595
    %v1652 = vpack.c.b16 %v1600, %v1596
    %v1653 = vpack.c.b16 %v1601, %v1597
    %v1654 = vpack.c.b16 %v1606, %v1602
    %v1655 = vpack.c.b16 %v1607, %v1603
    %v1656 = vpack.c.b16 %v1608, %v1604
    %v1657 = vpack.c.b16 %v1609, %v1605
    %v1658 = vpack.c.b16 %v1614, %v1610
    %v1659 = vpack.c.b16 %v1615, %v1611
    %v1660 = vpack.c.b16 %v1616, %v1612
    %v1661 = vpack.c.b16 %v1617, %v1613
    %v1662 = vpack.c.b16 %v1622, %v1618
    %v1663 = vpack.c.b16 %v1623, %v1619
    %v1664 = vpack.c.b16 %v1624, %v1620
    %v1665 = vpack.c.b16 %v1625, %v1621
    %v1666 = vpack.c.b16 %v1630, %v1626
    %v1667 = vpack.c.b16 %v1631, %v1627
    %v1668 = vpack.c.b16 %v1632, %v1628
    %v1669 = vpack.c.b16 %v1633, %v1629
    %v1670 = vpack.c.b16 %v1638, %v1634
    %v1671 = vpack.c.b16 %v1639, %v1635
    %v1672 = vpack.c.b16 %v1640, %v1636
    %v1673 = vpack.c.b16 %v1641, %v1637
    %1706 = vmatprep.subr.bf16.mxu0 %v1643
    %1707 = vmatpush1.bf16.msra.mxu0 %v1642
    %1708 = vmatprep.subr.bf16.mxu0 %v1647
    %1709 = vmatpush1.bf16.msra.mxu0 %v1646
    %1710 = vmatprep.subr.bf16.mxu0 %v1651
    %1711 = vmatpush1.bf16.msra.mxu0 %v1650
    %1712 = vmatprep.subr.bf16.mxu0 %v1655
    %1713 = vmatpush1.bf16.msra.mxu0 %v1654
    %1714 = vmatprep.subr.bf16.mxu0 %v1659
    %1715 = vmatpush1.bf16.msra.mxu0 %v1658
    %1716 = vmatprep.subr.bf16.mxu0 %v1663
    %1717 = vmatpush1.bf16.msra.mxu0 %v1662
    %1718 = vmatprep.subr.bf16.mxu0 %v1667
    %1719 = vmatpush1.bf16.msra.mxu0 %v1666
    %1720 = vmatprep.subr.bf16.mxu0 %v1671
    %1721 = vmatpush1.bf16.msra.mxu0 %v1670
    %1722 = vmatprep.subr.bf16.mxu0 0
    %1723 = vmatpush1.bf16.msra.mxu0 0
    %1724 = vmatprep.subr.bf16.mxu0 0
    %1725 = vmatpush1.bf16.msra.mxu0 0
    %1726 = vmatprep.subr.bf16.mxu0 0
    %1727 = vmatpush1.bf16.msra.mxu0 0
    %1728 = vmatprep.subr.bf16.mxu0 0
    %1729 = vmatpush1.bf16.msra.mxu0 0
    %1730 = vmatprep.subr.bf16.mxu0 0
    %1731 = vmatpush1.bf16.msra.mxu0 0
    %1732 = vmatprep.subr.bf16.mxu0 0
    %1733 = vmatpush1.bf16.msra.mxu0 0
    %1734 = vmatprep.subr.bf16.mxu0 0
    %1735 = vmatpush1.bf16.msra.mxu0 0
    %1736 = vmatprep.subr.bf16.mxu0 0
    %1737 = vmatpush1.bf16.msra.mxu0 0
    %1738 = vmatprep.mubr.bf16.mxu0 0
    %1739 = vmatmul.mubr.bf16.gmra.mrb[0].mxu0 %v1193
    %v1740 = vpop.f32.mrb[0].mxu0
    %v1741 = vadd.f32 0.0, %v1740
    %v1742 = vpop.f32.mrb[0].mxu0
    %v1743 = vadd.f32 0.0, %v1742
    %v1744 = vpop.f32.mrb[0].mxu0
    %v1745 = vpop.f32.mrb[0].mxu0
    %1746 = vdwg.mxu0
    %1747 = vmatprep.subr.bf16.mxu0 %v1645
    %1748 = vmatpush1.bf16.msra.mxu0 %v1644
    %1749 = vmatprep.subr.bf16.mxu0 %v1649
    %1750 = vmatpush1.bf16.msra.mxu0 %v1648
    %1751 = vmatprep.subr.bf16.mxu0 %v1653
    %1752 = vmatpush1.bf16.msra.mxu0 %v1652
    %1753 = vmatprep.subr.bf16.mxu0 %v1657
    %1754 = vmatpush1.bf16.msra.mxu0 %v1656
    %1755 = vmatprep.subr.bf16.mxu0 %v1661
    %1756 = vmatpush1.bf16.msra.mxu0 %v1660
    %1757 = vmatprep.subr.bf16.mxu0 %v1665
    %1758 = vmatpush1.bf16.msra.mxu0 %v1664
    %1759 = vmatprep.subr.bf16.mxu0 %v1669
    %1760 = vmatpush1.bf16.msra.mxu0 %v1668
    %1761 = vmatprep.subr.bf16.mxu0 %v1673
    %1762 = vmatpush1.bf16.msra.mxu0 %v1672
    %1763 = vmatprep.subr.bf16.mxu0 0
    %1764 = vmatpush1.bf16.msra.mxu0 0
    %1765 = vmatprep.subr.bf16.mxu0 0
    %1766 = vmatpush1.bf16.msra.mxu0 0
    %1767 = vmatprep.subr.bf16.mxu0 0
    %1768 = vmatpush1.bf16.msra.mxu0 0
    %1769 = vmatprep.subr.bf16.mxu0 0
    %1770 = vmatpush1.bf16.msra.mxu0 0
    %1771 = vmatprep.subr.bf16.mxu0 0
    %1772 = vmatpush1.bf16.msra.mxu0 0
    %1773 = vmatprep.subr.bf16.mxu0 0
    %1774 = vmatpush1.bf16.msra.mxu0 0
    %1775 = vmatprep.subr.bf16.mxu0 0
    %1776 = vmatpush1.bf16.msra.mxu0 0
    %1777 = vmatprep.subr.bf16.mxu0 0
    %1778 = vmatpush1.bf16.msra.mxu0 0
    %1779 = vmatprep.mubr.bf16.mxu0 0
    %1780 = vmatmul.mubr.bf16.gmra.mrb[0].mxu0 %v1193
    %v1781 = vpop.f32.mrb[0].mxu0
    %v1782 = vadd.f32 0.0, %v1781
    %v1783 = vpop.f32.mrb[0].mxu0
    %v1784 = vadd.f32 0.0, %v1783
    %v1785 = vpop.f32.mrb[0].mxu0
    %v1786 = vpop.f32.mrb[0].mxu0
    %1787 = vdwg.mxu0
    %v1788 = vadd.f32 %v1510, %v1741
    %v1789 = vadd.f32 %v1511, %v1743
    %v1790 = vadd.f32 %v1512, %v1782
    %v1791 = vadd.f32 %v1513, %v1784
    %v1792 = vxor.u32 %v1788, 2147483648
    %v1793 = vxor.u32 %v1789, 2147483648
    %v1794 = vxor.u32 %v1790, 2147483648
    %v1795 = vmul.f32 %v1792, 1.442695
    %v1796 = vpow.pop %v1795
    %v1797 = vmul.f32 %v1793, 1.442695
    %v1798 = vpow.pop %v1797
    %v1799 = vmul.f32 %v1794, 1.442695
    %v1800 = vpow.pop %v1799
    %v1801 = vadd.f32 %v1796, 1.0
    %v1802 = vadd.f32 %v1798, 1.0
    %v1803 = vadd.f32 %v1800, 1.0
    %v1804 = vrcp.pop %v1801
    %v1805 = vmul.f32 1.0, %v1804
    %v1806 = vrcp.pop %v1802
    %v1807 = vmul.f32 1.0, %v1806
    %v1808 = vrcp.pop %v1803
    %v1809 = vmul.f32 1.0, %v1808
    %v1810 = vtanh.pop %v1791
    %v1811 = vmul.f32 %v1807, %v1192
    %v1812 = vmul.f32 %v1805, %v1810
    %v1813 = vadd.f32 %v1811, %v1812
    %v1814 = vtanh.pop %v1813
    %v1815 = vmul.f32 %v1809, %v1814
    %1817 = vset.pattern.permute.xlu0 0
    %1818 = vperm.xlu0 %1817, %v555
    %v1819 = vpop.permute.xlu0 %1818
    %v1821 = vmul.f32 %v1815, %v1819
    %v1822 = vsub.f32 1.0, %v555
    %1824 = vset.pattern.permute.xlu0 0
    %1825 = vperm.xlu0 %1824, %v1822
    %v1826 = vpop.permute.xlu0 %1825
    %v1828 = vmul.f32 %v1190, %v1826
    %v1829 = vadd.f32 %v1821, %v1828
    %v1830 = vmul.f32 %v1813, %v1819
    %v1831 = vmul.f32 %v1192, %v1826
    %v1832 = vadd.f32 %v1830, %v1831
    %v1833 = vpack.c.bf16 %v1829, %v1829
    %1834 = vst [vmem:[#allocation9 + $0x34] sm:$0xf] %v1833
    %v1835 = vld [vmem:[#allocation2 + $0x40] sm:$0xff]
    %v1836 = vld [vmem:[#allocation2 + $0x48] sm:$0xff]
    %v1837 = vld [vmem:[#allocation2 + $0x50] sm:$0xff]
    %v1838 = vld [vmem:[#allocation2 + $0x58] sm:$0xff]
    %v1839 = vpack.c.bf16 %v1501, %v1501
    %v1840 = vld [vmem:[#allocation4] sm:$0xff]
    %v1841 = vld [vmem:[#allocation4 + $0x8] sm:$0xff]
    %v1842 = vld [vmem:[#allocation4 + $0x10] sm:$0xff]
    %v1843 = vld [vmem:[#allocation4 + $0x18] sm:$0xff]
    %v1844 = vld [vmem:[#allocation4 + $0x20] sm:$0xff]
    %v1845 = vld [vmem:[#allocation4 + $0x28] sm:$0xff]
    %v1846 = vld [vmem:[#allocation4 + $0x30] sm:$0xff]
    %v1847 = vld [vmem:[#allocation4 + $0x38] sm:$0xff]
    %v1848 = vld [vmem:[#allocation4 + $0x40] sm:$0xff]
    %v1849 = vld [vmem:[#allocation4 + $0x48] sm:$0xff]
    %v1850 = vld [vmem:[#allocation4 + $0x50] sm:$0xff]
    %v1851 = vld [vmem:[#allocation4 + $0x58] sm:$0xff]
    %v1852 = vld [vmem:[#allocation4 + $0x60] sm:$0xff]
    %v1853 = vld [vmem:[#allocation4 + $0x68] sm:$0xff]
    %v1854 = vld [vmem:[#allocation4 + $0x70] sm:$0xff]
    %v1855 = vld [vmem:[#allocation4 + $0x78] sm:$0xff]
    %v1856 = vld [vmem:[#allocation4 + $0x80] sm:$0xff]
    %v1857 = vld [vmem:[#allocation4 + $0x88] sm:$0xff]
    %v1858 = vld [vmem:[#allocation4 + $0x90] sm:$0xff]
    %v1859 = vld [vmem:[#allocation4 + $0x98] sm:$0xff]
    %v1860 = vld [vmem:[#allocation4 + $0xa0] sm:$0xff]
    %v1861 = vld [vmem:[#allocation4 + $0xa8] sm:$0xff]
    %v1862 = vld [vmem:[#allocation4 + $0xb0] sm:$0xff]
    %v1863 = vld [vmem:[#allocation4 + $0xb8] sm:$0xff]
    %v1864 = vld [vmem:[#allocation4 + $0xc0] sm:$0xff]
    %v1865 = vld [vmem:[#allocation4 + $0xc8] sm:$0xff]
    %v1866 = vld [vmem:[#allocation4 + $0xd0] sm:$0xff]
    %v1867 = vld [vmem:[#allocation4 + $0xd8] sm:$0xff]
    %v1868 = vld [vmem:[#allocation4 + $0xe0] sm:$0xff]
    %v1869 = vld [vmem:[#allocation4 + $0xe8] sm:$0xff]
    %v1870 = vld [vmem:[#allocation4 + $0xf0] sm:$0xff]
    %v1871 = vld [vmem:[#allocation4 + $0xf8] sm:$0xff]
    %v1904 = vunpack.c.l.b16 %v1840
    %v1905 = vunpack.c.h.b16 %v1840
    %v1906 = vunpack.c.l.b16 %v1841
    %v1907 = vunpack.c.h.b16 %v1841
    %v1908 = vunpack.c.l.b16 %v1842
    %v1909 = vunpack.c.h.b16 %v1842
    %v1910 = vunpack.c.l.b16 %v1843
    %v1911 = vunpack.c.h.b16 %v1843
    %v1912 = vunpack.c.l.b16 %v1844
    %v1913 = vunpack.c.h.b16 %v1844
    %v1914 = vunpack.c.l.b16 %v1845
    %v1915 = vunpack.c.h.b16 %v1845
    %v1916 = vunpack.c.l.b16 %v1846
    %v1917 = vunpack.c.h.b16 %v1846
    %v1918 = vunpack.c.l.b16 %v1847
    %v1919 = vunpack.c.h.b16 %v1847
    %v1920 = vunpack.c.l.b16 %v1848
    %v1921 = vunpack.c.h.b16 %v1848
    %v1922 = vunpack.c.l.b16 %v1849
    %v1923 = vunpack.c.h.b16 %v1849
    %v1924 = vunpack.c.l.b16 %v1850
    %v1925 = vunpack.c.h.b16 %v1850
    %v1926 = vunpack.c.l.b16 %v1851
    %v1927 = vunpack.c.h.b16 %v1851
    %v1928 = vunpack.c.l.b16 %v1852
    %v1929 = vunpack.c.h.b16 %v1852
    %v1930 = vunpack.c.l.b16 %v1853
    %v1931 = vunpack.c.h.b16 %v1853
    %v1932 = vunpack.c.l.b16 %v1854
    %v1933 = vunpack.c.h.b16 %v1854
    %v1934 = vunpack.c.l.b16 %v1855
    %v1935 = vunpack.c.h.b16 %v1855
    %v1936 = vunpack.c.l.b16 %v1856
    %v1937 = vunpack.c.h.b16 %v1856
    %v1938 = vunpack.c.l.b16 %v1857
    %v1939 = vunpack.c.h.b16 %v1857
    %v1940 = vunpack.c.l.b16 %v1858
    %v1941 = vunpack.c.h.b16 %v1858
    %v1942 = vunpack.c.l.b16 %v1859
    %v1943 = vunpack.c.h.b16 %v1859
    %v1944 = vunpack.c.l.b16 %v1860
    %v1945 = vunpack.c.h.b16 %v1860
    %v1946 = vunpack.c.l.b16 %v1861
    %v1947 = vunpack.c.h.b16 %v1861
    %v1948 = vunpack.c.l.b16 %v1862
    %v1949 = vunpack.c.h.b16 %v1862
    %v1950 = vunpack.c.l.b16 %v1863
    %v1951 = vunpack.c.h.b16 %v1863
    %v1952 = vunpack.c.l.b16 %v1864
    %v1953 = vunpack.c.h.b16 %v1864
    %v1954 = vunpack.c.l.b16 %v1865
    %v1955 = vunpack.c.h.b16 %v1865
    %v1956 = vunpack.c.l.b16 %v1866
    %v1957 = vunpack.c.h.b16 %v1866
    %v1958 = vunpack.c.l.b16 %v1867
    %v1959 = vunpack.c.h.b16 %v1867
    %v1960 = vunpack.c.l.b16 %v1868
    %v1961 = vunpack.c.h.b16 %v1868
    %v1962 = vunpack.c.l.b16 %v1869
    %v1963 = vunpack.c.h.b16 %v1869
    %v1964 = vunpack.c.l.b16 %v1870
    %v1965 = vunpack.c.h.b16 %v1870
    %v1966 = vunpack.c.l.b16 %v1871
    %v1967 = vunpack.c.h.b16 %v1871
    %v1968 = vpack.c.b16 %v1908, %v1904
    %v1969 = vpack.c.b16 %v1909, %v1905
    %v1970 = vpack.c.b16 %v1910, %v1906
    %v1971 = vpack.c.b16 %v1911, %v1907
    %v1972 = vpack.c.b16 %v1916, %v1912
    %v1973 = vpack.c.b16 %v1917, %v1913
    %v1974 = vpack.c.b16 %v1918, %v1914
    %v1975 = vpack.c.b16 %v1919, %v1915
    %v1976 = vpack.c.b16 %v1924, %v1920
    %v1977 = vpack.c.b16 %v1925, %v1921
    %v1978 = vpack.c.b16 %v1926, %v1922
    %v1979 = vpack.c.b16 %v1927, %v1923
    %v1980 = vpack.c.b16 %v1932, %v1928
    %v1981 = vpack.c.b16 %v1933, %v1929
    %v1982 = vpack.c.b16 %v1934, %v1930
    %v1983 = vpack.c.b16 %v1935, %v1931
    %v1984 = vpack.c.b16 %v1940, %v1936
    %v1985 = vpack.c.b16 %v1941, %v1937
    %v1986 = vpack.c.b16 %v1942, %v1938
    %v1987 = vpack.c.b16 %v1943, %v1939
    %v1988 = vpack.c.b16 %v1948, %v1944
    %v1989 = vpack.c.b16 %v1949, %v1945
    %v1990 = vpack.c.b16 %v1950, %v1946
    %v1991 = vpack.c.b16 %v1951, %v1947
    %v1992 = vpack.c.b16 %v1956, %v1952
    %v1993 = vpack.c.b16 %v1957, %v1953
    %v1994 = vpack.c.b16 %v1958, %v1954
    %v1995 = vpack.c.b16 %v1959, %v1955
    %v1996 = vpack.c.b16 %v1964, %v1960
    %v1997 = vpack.c.b16 %v1965, %v1961
    %v1998 = vpack.c.b16 %v1966, %v1962
    %v1999 = vpack.c.b16 %v1967, %v1963
    %2032 = vmatprep.subr.bf16.mxu0 %v1969
    %2033 = vmatpush1.bf16.msra.mxu0 %v1968
    %2034 = vmatprep.subr.bf16.mxu0 %v1973
    %2035 = vmatpush1.bf16.msra.mxu0 %v1972
    %2036 = vmatprep.subr.bf16.mxu0 %v1977
    %2037 = vmatpush1.bf16.msra.mxu0 %v1976
    %2038 = vmatprep.subr.bf16.mxu0 %v1981
    %2039 = vmatpush1.bf16.msra.mxu0 %v1980
    %2040 = vmatprep.subr.bf16.mxu0 %v1985
    %2041 = vmatpush1.bf16.msra.mxu0 %v1984
    %2042 = vmatprep.subr.bf16.mxu0 %v1989
    %2043 = vmatpush1.bf16.msra.mxu0 %v1988
    %2044 = vmatprep.subr.bf16.mxu0 %v1993
    %2045 = vmatpush1.bf16.msra.mxu0 %v1992
    %2046 = vmatprep.subr.bf16.mxu0 %v1997
    %2047 = vmatpush1.bf16.msra.mxu0 %v1996
    %2048 = vmatprep.subr.bf16.mxu0 0
    %2049 = vmatpush1.bf16.msra.mxu0 0
    %2050 = vmatprep.subr.bf16.mxu0 0
    %2051 = vmatpush1.bf16.msra.mxu0 0
    %2052 = vmatprep.subr.bf16.mxu0 0
    %2053 = vmatpush1.bf16.msra.mxu0 0
    %2054 = vmatprep.subr.bf16.mxu0 0
    %2055 = vmatpush1.bf16.msra.mxu0 0
    %2056 = vmatprep.subr.bf16.mxu0 0
    %2057 = vmatpush1.bf16.msra.mxu0 0
    %2058 = vmatprep.subr.bf16.mxu0 0
    %2059 = vmatpush1.bf16.msra.mxu0 0
    %2060 = vmatprep.subr.bf16.mxu0 0
    %2061 = vmatpush1.bf16.msra.mxu0 0
    %2062 = vmatprep.subr.bf16.mxu0 0
    %2063 = vmatpush1.bf16.msra.mxu0 0
    %2064 = vmatprep.mubr.bf16.mxu0 0
    %2065 = vmatmul.mubr.bf16.gmra.mrb[0].mxu0 %v1839
    %v2066 = vpop.f32.mrb[0].mxu0
    %v2067 = vadd.f32 0.0, %v2066
    %v2068 = vpop.f32.mrb[0].mxu0
    %v2069 = vadd.f32 0.0, %v2068
    %v2070 = vpop.f32.mrb[0].mxu0
    %v2071 = vpop.f32.mrb[0].mxu0
    %2072 = vdwg.mxu0
    %2073 = vmatprep.subr.bf16.mxu0 %v1971
    %2074 = vmatpush1.bf16.msra.mxu0 %v1970
    %2075 = vmatprep.subr.bf16.mxu0 %v1975
    %2076 = vmatpush1.bf16.msra.mxu0 %v1974
    %2077 = vmatprep.subr.bf16.mxu0 %v1979
    %2078 = vmatpush1.bf16.msra.mxu0 %v1978
    %2079 = vmatprep.subr.bf16.mxu0 %v1983
    %2080 = vmatpush1.bf16.msra.mxu0 %v1982
    %2081 = vmatprep.subr.bf16.mxu0 %v1987
    %2082 = vmatpush1.bf16.msra.mxu0 %v1986
    %2083 = vmatprep.subr.bf16.mxu0 %v1991
    %2084 = vmatpush1.bf16.msra.mxu0 %v1990
    %2085 = vmatprep.subr.bf16.mxu0 %v1995
    %2086 = vmatpush1.bf16.msra.mxu0 %v1994
    %2087 = vmatprep.subr.bf16.mxu0 %v1999
    %2088 = vmatpush1.bf16.msra.mxu0 %v1998
    %2089 = vmatprep.subr.bf16.mxu0 0
    %2090 = vmatpush1.bf16.msra.mxu0 0
    %2091 = vmatprep.subr.bf16.mxu0 0
    %2092 = vmatpush1.bf16.msra.mxu0 0
    %2093 = vmatprep.subr.bf16.mxu0 0
    %2094 = vmatpush1.bf16.msra.mxu0 0
    %2095 = vmatprep.subr.bf16.mxu0 0
    %2096 = vmatpush1.bf16.msra.mxu0 0
    %2097 = vmatprep.subr.bf16.mxu0 0
    %2098 = vmatpush1.bf16.msra.mxu0 0
    %2099 = vmatprep.subr.bf16.mxu0 0
    %2100 = vmatpush1.bf16.msra.mxu0 0
    %2101 = vmatprep.subr.bf16.mxu0 0
    %2102 = vmatpush1.bf16.msra.mxu0 0
    %2103 = vmatprep.subr.bf16.mxu0 0
    %2104 = vmatpush1.bf16.msra.mxu0 0
    %2105 = vmatprep.mubr.bf16.mxu0 0
    %2106 = vmatmul.mubr.bf16.gmra.mrb[0].mxu0 %v1839
    %v2107 = vpop.f32.mrb[0].mxu0
    %v2108 = vadd.f32 0.0, %v2107
    %v2109 = vpop.f32.mrb[0].mxu0
    %v2110 = vadd.f32 0.0, %v2109
    %v2111 = vpop.f32.mrb[0].mxu0
    %v2112 = vpop.f32.mrb[0].mxu0
    %2113 = vdwg.mxu0
    %v2114 = vadd.f32 %v1835, %v2067
    %v2115 = vadd.f32 %v1836, %v2069
    %v2116 = vadd.f32 %v1837, %v2108
    %v2117 = vadd.f32 %v1838, %v2110
    %v2118 = vxor.u32 %v2114, 2147483648
    %v2119 = vxor.u32 %v2115, 2147483648
    %v2120 = vxor.u32 %v2116, 2147483648
    %v2121 = vmul.f32 %v2118, 1.442695
    %v2122 = vpow.pop %v2121
    %v2123 = vmul.f32 %v2119, 1.442695
    %v2124 = vpow.pop %v2123
    %v2125 = vmul.f32 %v2120, 1.442695
    %v2126 = vpow.pop %v2125
    %v2127 = vadd.f32 %v2122, 1.0
    %v2128 = vadd.f32 %v2124, 1.0
    %v2129 = vadd.f32 %v2126, 1.0
    %v2130 = vrcp.pop %v2127
    %v2131 = vmul.f32 1.0, %v2130
    %v2132 = vrcp.pop %v2128
    %v2133 = vmul.f32 1.0, %v2132
    %v2134 = vrcp.pop %v2129
    %v2135 = vmul.f32 1.0, %v2134
    %v2136 = vtanh.pop %v2117
    %v2137 = vmul.f32 %v2133, %v1499
    %v2138 = vmul.f32 %v2131, %v2136
    %v2139 = vadd.f32 %v2137, %v2138
    %v2140 = vtanh.pop %v2139
    %v2141 = vmul.f32 %v2135, %v2140
    %2143 = vset.pattern.permute.xlu0 0
    %2144 = vperm.xlu0 %2143, %v551
    %v2145 = vpop.permute.xlu0 %2144
    %v2147 = vmul.f32 %v2141, %v2145
    %v2148 = vpack.c.bf16 %v2147, %v2147
    %2149 = vst [vmem:[#allocation9 + $0x10] sm:$0xf] %v2148
    %v2150 = vld [vmem:[#allocation3 + $0xa0] sm:$0xff]
    %v2151 = vld [vmem:[#allocation3 + $0xa8] sm:$0xff]
    %v2152 = vld [vmem:[#allocation3 + $0xb0] sm:$0xff]
    %v2153 = vld [vmem:[#allocation3 + $0xb8] sm:$0xff]
    %v2154 = vld [vmem:[#allocation7] sm:$0xff]
    %v2155 = vld [vmem:[#allocation7 + $0x8] sm:$0xff]
    %v2156 = vld [vmem:[#allocation7 + $0x10] sm:$0xff]
    %v2157 = vld [vmem:[#allocation7 + $0x18] sm:$0xff]
    %v2158 = vld [vmem:[#allocation7 + $0x20] sm:$0xff]
    %v2159 = vld [vmem:[#allocation7 + $0x28] sm:$0xff]
    %v2160 = vld [vmem:[#allocation7 + $0x30] sm:$0xff]
    %v2161 = vld [vmem:[#allocation7 + $0x38] sm:$0xff]
    %v2162 = vld [vmem:[#allocation7 + $0x40] sm:$0xff]
    %v2163 = vld [vmem:[#allocation7 + $0x48] sm:$0xff]
    %v2164 = vld [vmem:[#allocation7 + $0x50] sm:$0xff]
    %v2165 = vld [vmem:[#allocation7 + $0x58] sm:$0xff]
    %v2166 = vld [vmem:[#allocation7 + $0x60] sm:$0xff]
    %v2167 = vld [vmem:[#allocation7 + $0x68] sm:$0xff]
    %v2168 = vld [vmem:[#allocation7 + $0x70] sm:$0xff]
    %v2169 = vld [vmem:[#allocation7 + $0x78] sm:$0xff]
    %v2170 = vld [vmem:[#allocation7 + $0x80] sm:$0xff]
    %v2171 = vld [vmem:[#allocation7 + $0x88] sm:$0xff]
    %v2172 = vld [vmem:[#allocation7 + $0x90] sm:$0xff]
    %v2173 = vld [vmem:[#allocation7 + $0x98] sm:$0xff]
    %v2174 = vld [vmem:[#allocation7 + $0xa0] sm:$0xff]
    %v2175 = vld [vmem:[#allocation7 + $0xa8] sm:$0xff]
    %v2176 = vld [vmem:[#allocation7 + $0xb0] sm:$0xff]
    %v2177 = vld [vmem:[#allocation7 + $0xb8] sm:$0xff]
    %v2178 = vld [vmem:[#allocation7 + $0xc0] sm:$0xff]
    %v2179 = vld [vmem:[#allocation7 + $0xc8] sm:$0xff]
    %v2180 = vld [vmem:[#allocation7 + $0xd0] sm:$0xff]
    %v2181 = vld [vmem:[#allocation7 + $0xd8] sm:$0xff]
    %v2182 = vld [vmem:[#allocation7 + $0xe0] sm:$0xff]
    %v2183 = vld [vmem:[#allocation7 + $0xe8] sm:$0xff]
    %v2184 = vld [vmem:[#allocation7 + $0xf0] sm:$0xff]
    %v2185 = vld [vmem:[#allocation7 + $0xf8] sm:$0xff]
    %v2218 = vunpack.c.l.b16 %v2154
    %v2219 = vunpack.c.h.b16 %v2154
    %v2220 = vunpack.c.l.b16 %v2155
    %v2221 = vunpack.c.h.b16 %v2155
    %v2222 = vunpack.c.l.b16 %v2156
    %v2223 = vunpack.c.h.b16 %v2156
    %v2224 = vunpack.c.l.b16 %v2157
    %v2225 = vunpack.c.h.b16 %v2157
    %v2226 = vunpack.c.l.b16 %v2158
    %v2227 = vunpack.c.h.b16 %v2158
    %v2228 = vunpack.c.l.b16 %v2159
    %v2229 = vunpack.c.h.b16 %v2159
    %v2230 = vunpack.c.l.b16 %v2160
    %v2231 = vunpack.c.h.b16 %v2160
    %v2232 = vunpack.c.l.b16 %v2161
    %v2233 = vunpack.c.h.b16 %v2161
    %v2234 = vunpack.c.l.b16 %v2162
    %v2235 = vunpack.c.h.b16 %v2162
    %v2236 = vunpack.c.l.b16 %v2163
    %v2237 = vunpack.c.h.b16 %v2163
    %v2238 = vunpack.c.l.b16 %v2164
    %v2239 = vunpack.c.h.b16 %v2164
    %v2240 = vunpack.c.l.b16 %v2165
    %v2241 = vunpack.c.h.b16 %v2165
    %v2242 = vunpack.c.l.b16 %v2166
    %v2243 = vunpack.c.h.b16 %v2166
    %v2244 = vunpack.c.l.b16 %v2167
    %v2245 = vunpack.c.h.b16 %v2167
    %v2246 = vunpack.c.l.b16 %v2168
    %v2247 = vunpack.c.h.b16 %v2168
    %v2248 = vunpack.c.l.b16 %v2169
    %v2249 = vunpack.c.h.b16 %v2169
    %v2250 = vunpack.c.l.b16 %v2170
    %v2251 = vunpack.c.h.b16 %v2170
    %v2252 = vunpack.c.l.b16 %v2171
    %v2253 = vunpack.c.h.b16 %v2171
    %v2254 = vunpack.c.l.b16 %v2172
    %v2255 = vunpack.c.h.b16 %v2172
    %v2256 = vunpack.c.l.b16 %v2173
    %v2257 = vunpack.c.h.b16 %v2173
    %v2258 = vunpack.c.l.b16 %v2174
    %v2259 = vunpack.c.h.b16 %v2174
    %v2260 = vunpack.c.l.b16 %v2175
    %v2261 = vunpack.c.h.b16 %v2175
    %v2262 = vunpack.c.l.b16 %v2176
    %v2263 = vunpack.c.h.b16 %v2176
    %v2264 = vunpack.c.l.b16 %v2177
    %v2265 = vunpack.c.h.b16 %v2177
    %v2266 = vunpack.c.l.b16 %v2178
    %v2267 = vunpack.c.h.b16 %v2178
    %v2268 = vunpack.c.l.b16 %v2179
    %v2269 = vunpack.c.h.b16 %v2179
    %v2270 = vunpack.c.l.b16 %v2180
    %v2271 = vunpack.c.h.b16 %v2180
    %v2272 = vunpack.c.l.b16 %v2181
    %v2273 = vunpack.c.h.b16 %v2181
    %v2274 = vunpack.c.l.b16 %v2182
    %v2275 = vunpack.c.h.b16 %v2182
    %v2276 = vunpack.c.l.b16 %v2183
    %v2277 = vunpack.c.h.b16 %v2183
    %v2278 = vunpack.c.l.b16 %v2184
    %v2279 = vunpack.c.h.b16 %v2184
    %v2280 = vunpack.c.l.b16 %v2185
    %v2281 = vunpack.c.h.b16 %v2185
    %v2282 = vpack.c.b16 %v2222, %v2218
    %v2283 = vpack.c.b16 %v2223, %v2219
    %v2284 = vpack.c.b16 %v2224, %v2220
    %v2285 = vpack.c.b16 %v2225, %v2221
    %v2286 = vpack.c.b16 %v2230, %v2226
    %v2287 = vpack.c.b16 %v2231, %v2227
    %v2288 = vpack.c.b16 %v2232, %v2228
    %v2289 = vpack.c.b16 %v2233, %v2229
    %v2290 = vpack.c.b16 %v2238, %v2234
    %v2291 = vpack.c.b16 %v2239, %v2235
    %v2292 = vpack.c.b16 %v2240, %v2236
    %v2293 = vpack.c.b16 %v2241, %v2237
    %v2294 = vpack.c.b16 %v2246, %v2242
    %v2295 = vpack.c.b16 %v2247, %v2243
    %v2296 = vpack.c.b16 %v2248, %v2244
    %v2297 = vpack.c.b16 %v2249, %v2245
    %v2298 = vpack.c.b16 %v2254, %v2250
    %v2299 = vpack.c.b16 %v2255, %v2251
    %v2300 = vpack.c.b16 %v2256, %v2252
    %v2301 = vpack.c.b16 %v2257, %v2253
    %v2302 = vpack.c.b16 %v2262, %v2258
    %v2303 = vpack.c.b16 %v2263, %v2259
    %v2304 = vpack.c.b16 %v2264, %v2260
    %v2305 = vpack.c.b16 %v2265, %v2261
    %v2306 = vpack.c.b16 %v2270, %v2266
    %v2307 = vpack.c.b16 %v2271, %v2267
    %v2308 = vpack.c.b16 %v2272, %v2268
    %v2309 = vpack.c.b16 %v2273, %v2269
    %v2310 = vpack.c.b16 %v2278, %v2274
    %v2311 = vpack.c.b16 %v2279, %v2275
    %v2312 = vpack.c.b16 %v2280, %v2276
    %v2313 = vpack.c.b16 %v2281, %v2277
    %2346 = vmatprep.subr.bf16.mxu0 %v2283
    %2347 = vmatpush1.bf16.msra.mxu0 %v2282
    %2348 = vmatprep.subr.bf16.mxu0 %v2287
    %2349 = vmatpush1.bf16.msra.mxu0 %v2286
    %2350 = vmatprep.subr.bf16.mxu0 %v2291
    %2351 = vmatpush1.bf16.msra.mxu0 %v2290
    %2352 = vmatprep.subr.bf16.mxu0 %v2295
    %2353 = vmatpush1.bf16.msra.mxu0 %v2294
    %2354 = vmatprep.subr.bf16.mxu0 %v2299
    %2355 = vmatpush1.bf16.msra.mxu0 %v2298
    %2356 = vmatprep.subr.bf16.mxu0 %v2303
    %2357 = vmatpush1.bf16.msra.mxu0 %v2302
    %2358 = vmatprep.subr.bf16.mxu0 %v2307
    %2359 = vmatpush1.bf16.msra.mxu0 %v2306
    %2360 = vmatprep.subr.bf16.mxu0 %v2311
    %2361 = vmatpush1.bf16.msra.mxu0 %v2310
    %2362 = vmatprep.subr.bf16.mxu0 0
    %2363 = vmatpush1.bf16.msra.mxu0 0
    %2364 = vmatprep.subr.bf16.mxu0 0
    %2365 = vmatpush1.bf16.msra.mxu0 0
    %2366 = vmatprep.subr.bf16.mxu0 0
    %2367 = vmatpush1.bf16.msra.mxu0 0
    %2368 = vmatprep.subr.bf16.mxu0 0
    %2369 = vmatpush1.bf16.msra.mxu0 0
    %2370 = vmatprep.subr.bf16.mxu0 0
    %2371 = vmatpush1.bf16.msra.mxu0 0
    %2372 = vmatprep.subr.bf16.mxu0 0
    %2373 = vmatpush1.bf16.msra.mxu0 0
    %2374 = vmatprep.subr.bf16.mxu0 0
    %2375 = vmatpush1.bf16.msra.mxu0 0
    %2376 = vmatprep.subr.bf16.mxu0 0
    %2377 = vmatpush1.bf16.msra.mxu0 0
    %2378 = vmatprep.mubr.bf16.mxu0 0
    %2379 = vmatmul.mubr.bf16.gmra.mrb[0].mxu0 %v1833
    %v2380 = vpop.f32.mrb[0].mxu0
    %v2381 = vadd.f32 0.0, %v2380
    %v2382 = vpop.f32.mrb[0].mxu0
    %v2383 = vadd.f32 0.0, %v2382
    %v2384 = vpop.f32.mrb[0].mxu0
    %v2385 = vpop.f32.mrb[0].mxu0
    %2386 = vdwg.mxu0
    %2387 = vmatprep.subr.bf16.mxu0 %v2285
    %2388 = vmatpush1.bf16.msra.mxu0 %v2284
    %2389 = vmatprep.subr.bf16.mxu0 %v2289
    %2390 = vmatpush1.bf16.msra.mxu0 %v2288
    %2391 = vmatprep.subr.bf16.mxu0 %v2293
    %2392 = vmatpush1.bf16.msra.mxu0 %v2292
    %2393 = vmatprep.subr.bf16.mxu0 %v2297
    %2394 = vmatpush1.bf16.msra.mxu0 %v2296
    %2395 = vmatprep.subr.bf16.mxu0 %v2301
    %2396 = vmatpush1.bf16.msra.mxu0 %v2300
    %2397 = vmatprep.subr.bf16.mxu0 %v2305
    %2398 = vmatpush1.bf16.msra.mxu0 %v2304
    %2399 = vmatprep.subr.bf16.mxu0 %v2309
    %2400 = vmatpush1.bf16.msra.mxu0 %v2308
    %2401 = vmatprep.subr.bf16.mxu0 %v2313
    %2402 = vmatpush1.bf16.msra.mxu0 %v2312
    %2403 = vmatprep.subr.bf16.mxu0 0
    %2404 = vmatpush1.bf16.msra.mxu0 0
    %2405 = vmatprep.subr.bf16.mxu0 0
    %2406 = vmatpush1.bf16.msra.mxu0 0
    %2407 = vmatprep.subr.bf16.mxu0 0
    %2408 = vmatpush1.bf16.msra.mxu0 0
    %2409 = vmatprep.subr.bf16.mxu0 0
    %2410 = vmatpush1.bf16.msra.mxu0 0
    %2411 = vmatprep.subr.bf16.mxu0 0
    %2412 = vmatpush1.bf16.msra.mxu0 0
    %2413 = vmatprep.subr.bf16.mxu0 0
    %2414 = vmatpush1.bf16.msra.mxu0 0
    %2415 = vmatprep.subr.bf16.mxu0 0
    %2416 = vmatpush1.bf16.msra.mxu0 0
    %2417 = vmatprep.subr.bf16.mxu0 0
    %2418 = vmatpush1.bf16.msra.mxu0 0
    %2419 = vmatprep.mubr.bf16.mxu0 0
    %2420 = vmatmul.mubr.bf16.gmra.mrb[0].mxu0 %v1833
    %v2421 = vpop.f32.mrb[0].mxu0
    %v2422 = vadd.f32 0.0, %v2421
    %v2423 = vpop.f32.mrb[0].mxu0
    %v2424 = vadd.f32 0.0, %v2423
    %v2425 = vpop.f32.mrb[0].mxu0
    %v2426 = vpop.f32.mrb[0].mxu0
    %2427 = vdwg.mxu0
    %v2428 = vadd.f32 %v2150, %v2381
    %v2429 = vadd.f32 %v2151, %v2383
    %v2430 = vadd.f32 %v2152, %v2422
    %v2431 = vadd.f32 %v2153, %v2424
    %v2432 = vxor.u32 %v2428, 2147483648
    %v2433 = vxor.u32 %v2429, 2147483648
    %v2434 = vxor.u32 %v2430, 2147483648
    %v2435 = vmul.f32 %v2432, 1.442695
    %v2436 = vpow.pop %v2435
    %v2437 = vmul.f32 %v2433, 1.442695
    %v2438 = vpow.pop %v2437
    %v2439 = vmul.f32 %v2434, 1.442695
    %v2440 = vpow.pop %v2439
    %v2441 = vadd.f32 %v2436, 1.0
    %v2442 = vadd.f32 %v2438, 1.0
    %v2443 = vadd.f32 %v2440, 1.0
    %v2444 = vrcp.pop %v2441
    %v2445 = vmul.f32 1.0, %v2444
    %v2446 = vrcp.pop %v2442
    %v2447 = vmul.f32 1.0, %v2446
    %v2448 = vrcp.pop %v2443
    %v2449 = vmul.f32 1.0, %v2448
    %v2450 = vtanh.pop %v2431
    %v2451 = vmul.f32 %v2447, %v1832
    %v2452 = vmul.f32 %v2445, %v2450
    %v2453 = vadd.f32 %v2451, %v2452
    %v2454 = vtanh.pop %v2453
    %v2455 = vmul.f32 %v2449, %v2454
    %2457 = vset.pattern.permute.xlu0 0
    %2458 = vperm.xlu0 %2457, %v554
    %v2459 = vpop.permute.xlu0 %2458
    %v2461 = vmul.f32 %v2455, %v2459
    %v2462 = vsub.f32 1.0, %v554
    %2464 = vset.pattern.permute.xlu0 0
    %2465 = vperm.xlu0 %2464, %v2462
    %v2466 = vpop.permute.xlu0 %2465
    %v2468 = vmul.f32 %v1829, %v2466
    %v2469 = vadd.f32 %v2461, %v2468
    %v2470 = vmul.f32 %v2453, %v2459
    %v2471 = vmul.f32 %v1832, %v2466
    %v2472 = vadd.f32 %v2470, %v2471
    %v2473 = vpack.c.bf16 %v2469, %v2469
    %2474 = vst [vmem:[#allocation9 + $0x2c] sm:$0xf] %v2473
    %v2475 = vld [vmem:[#allocation2 + $0x60] sm:$0xff]
    %v2476 = vld [vmem:[#allocation2 + $0x68] sm:$0xff]
    %v2477 = vld [vmem:[#allocation2 + $0x70] sm:$0xff]
    %v2478 = vld [vmem:[#allocation2 + $0x78] sm:$0xff]
    %v2479 = vpack.c.bf16 %v2141, %v2141
    %v2480 = vld [vmem:[#allocation4] sm:$0xff]
    %v2481 = vld [vmem:[#allocation4 + $0x8] sm:$0xff]
    %v2482 = vld [vmem:[#allocation4 + $0x10] sm:$0xff]
    %v2483 = vld [vmem:[#allocation4 + $0x18] sm:$0xff]
    %v2484 = vld [vmem:[#allocation4 + $0x20] sm:$0xff]
    %v2485 = vld [vmem:[#allocation4 + $0x28] sm:$0xff]
    %v2486 = vld [vmem:[#allocation4 + $0x30] sm:$0xff]
    %v2487 = vld [vmem:[#allocation4 + $0x38] sm:$0xff]
    %v2488 = vld [vmem:[#allocation4 + $0x40] sm:$0xff]
    %v2489 = vld [vmem:[#allocation4 + $0x48] sm:$0xff]
    %v2490 = vld [vmem:[#allocation4 + $0x50] sm:$0xff]
    %v2491 = vld [vmem:[#allocation4 + $0x58] sm:$0xff]
    %v2492 = vld [vmem:[#allocation4 + $0x60] sm:$0xff]
    %v2493 = vld [vmem:[#allocation4 + $0x68] sm:$0xff]
    %v2494 = vld [vmem:[#allocation4 + $0x70] sm:$0xff]
    %v2495 = vld [vmem:[#allocation4 + $0x78] sm:$0xff]
    %v2496 = vld [vmem:[#allocation4 + $0x80] sm:$0xff]
    %v2497 = vld [vmem:[#allocation4 + $0x88] sm:$0xff]
    %v2498 = vld [vmem:[#allocation4 + $0x90] sm:$0xff]
    %v2499 = vld [vmem:[#allocation4 + $0x98] sm:$0xff]
    %v2500 = vld [vmem:[#allocation4 + $0xa0] sm:$0xff]
    %v2501 = vld [vmem:[#allocation4 + $0xa8] sm:$0xff]
    %v2502 = vld [vmem:[#allocation4 + $0xb0] sm:$0xff]
    %v2503 = vld [vmem:[#allocation4 + $0xb8] sm:$0xff]
    %v2504 = vld [vmem:[#allocation4 + $0xc0] sm:$0xff]
    %v2505 = vld [vmem:[#allocation4 + $0xc8] sm:$0xff]
    %v2506 = vld [vmem:[#allocation4 + $0xd0] sm:$0xff]
    %v2507 = vld [vmem:[#allocation4 + $0xd8] sm:$0xff]
    %v2508 = vld [vmem:[#allocation4 + $0xe0] sm:$0xff]
    %v2509 = vld [vmem:[#allocation4 + $0xe8] sm:$0xff]
    %v2510 = vld [vmem:[#allocation4 + $0xf0] sm:$0xff]
    %v2511 = vld [vmem:[#allocation4 + $0xf8] sm:$0xff]
    %v2544 = vunpack.c.l.b16 %v2480
    %v2545 = vunpack.c.h.b16 %v2480
    %v2546 = vunpack.c.l.b16 %v2481
    %v2547 = vunpack.c.h.b16 %v2481
    %v2548 = vunpack.c.l.b16 %v2482
    %v2549 = vunpack.c.h.b16 %v2482
    %v2550 = vunpack.c.l.b16 %v2483
    %v2551 = vunpack.c.h.b16 %v2483
    %v2552 = vunpack.c.l.b16 %v2484
    %v2553 = vunpack.c.h.b16 %v2484
    %v2554 = vunpack.c.l.b16 %v2485
    %v2555 = vunpack.c.h.b16 %v2485
    %v2556 = vunpack.c.l.b16 %v2486
    %v2557 = vunpack.c.h.b16 %v2486
    %v2558 = vunpack.c.l.b16 %v2487
    %v2559 = vunpack.c.h.b16 %v2487
    %v2560 = vunpack.c.l.b16 %v2488
    %v2561 = vunpack.c.h.b16 %v2488
    %v2562 = vunpack.c.l.b16 %v2489
    %v2563 = vunpack.c.h.b16 %v2489
    %v2564 = vunpack.c.l.b16 %v2490
    %v2565 = vunpack.c.h.b16 %v2490
    %v2566 = vunpack.c.l.b16 %v2491
    %v2567 = vunpack.c.h.b16 %v2491
    %v2568 = vunpack.c.l.b16 %v2492
    %v2569 = vunpack.c.h.b16 %v2492
    %v2570 = vunpack.c.l.b16 %v2493
    %v2571 = vunpack.c.h.b16 %v2493
    %v2572 = vunpack.c.l.b16 %v2494
    %v2573 = vunpack.c.h.b16 %v2494
    %v2574 = vunpack.c.l.b16 %v2495
    %v2575 = vunpack.c.h.b16 %v2495
    %v2576 = vunpack.c.l.b16 %v2496
    %v2577 = vunpack.c.h.b16 %v2496
    %v2578 = vunpack.c.l.b16 %v2497
    %v2579 = vunpack.c.h.b16 %v2497
    %v2580 = vunpack.c.l.b16 %v2498
    %v2581 = vunpack.c.h.b16 %v2498
    %v2582 = vunpack.c.l.b16 %v2499
    %v2583 = vunpack.c.h.b16 %v2499
    %v2584 = vunpack.c.l.b16 %v2500
    %v2585 = vunpack.c.h.b16 %v2500
    %v2586 = vunpack.c.l.b16 %v2501
    %v2587 = vunpack.c.h.b16 %v2501
    %v2588 = vunpack.c.l.b16 %v2502
    %v2589 = vunpack.c.h.b16 %v2502
    %v2590 = vunpack.c.l.b16 %v2503
    %v2591 = vunpack.c.h.b16 %v2503
    %v2592 = vunpack.c.l.b16 %v2504
    %v2593 = vunpack.c.h.b16 %v2504
    %v2594 = vunpack.c.l.b16 %v2505
    %v2595 = vunpack.c.h.b16 %v2505
    %v2596 = vunpack.c.l.b16 %v2506
    %v2597 = vunpack.c.h.b16 %v2506
    %v2598 = vunpack.c.l.b16 %v2507
    %v2599 = vunpack.c.h.b16 %v2507
    %v2600 = vunpack.c.l.b16 %v2508
    %v2601 = vunpack.c.h.b16 %v2508
    %v2602 = vunpack.c.l.b16 %v2509
    %v2603 = vunpack.c.h.b16 %v2509
    %v2604 = vunpack.c.l.b16 %v2510
    %v2605 = vunpack.c.h.b16 %v2510
    %v2606 = vunpack.c.l.b16 %v2511
    %v2607 = vunpack.c.h.b16 %v2511
    %v2608 = vpack.c.b16 %v2548, %v2544
    %v2609 = vpack.c.b16 %v2549, %v2545
    %v2610 = vpack.c.b16 %v2550, %v2546
    %v2611 = vpack.c.b16 %v2551, %v2547
    %v2612 = vpack.c.b16 %v2556, %v2552
    %v2613 = vpack.c.b16 %v2557, %v2553
    %v2614 = vpack.c.b16 %v2558, %v2554
    %v2615 = vpack.c.b16 %v2559, %v2555
    %v2616 = vpack.c.b16 %v2564, %v2560
    %v2617 = vpack.c.b16 %v2565, %v2561
    %v2618 = vpack.c.b16 %v2566, %v2562
    %v2619 = vpack.c.b16 %v2567, %v2563
    %v2620 = vpack.c.b16 %v2572, %v2568
    %v2621 = vpack.c.b16 %v2573, %v2569
    %v2622 = vpack.c.b16 %v2574, %v2570
    %v2623 = vpack.c.b16 %v2575, %v2571
    %v2624 = vpack.c.b16 %v2580, %v2576
    %v2625 = vpack.c.b16 %v2581, %v2577
    %v2626 = vpack.c.b16 %v2582, %v2578
    %v2627 = vpack.c.b16 %v2583, %v2579
    %v2628 = vpack.c.b16 %v2588, %v2584
    %v2629 = vpack.c.b16 %v2589, %v2585
    %v2630 = vpack.c.b16 %v2590, %v2586
    %v2631 = vpack.c.b16 %v2591, %v2587
    %v2632 = vpack.c.b16 %v2596, %v2592
    %v2633 = vpack.c.b16 %v2597, %v2593
    %v2634 = vpack.c.b16 %v2598, %v2594
    %v2635 = vpack.c.b16 %v2599, %v2595
    %v2636 = vpack.c.b16 %v2604, %v2600
    %v2637 = vpack.c.b16 %v2605, %v2601
    %v2638 = vpack.c.b16 %v2606, %v2602
    %v2639 = vpack.c.b16 %v2607, %v2603
    %2672 = vmatprep.subr.bf16.mxu0 %v2609
    %2673 = vmatpush1.bf16.msra.mxu0 %v2608
    %2674 = vmatprep.subr.bf16.mxu0 %v2613
    %2675 = vmatpush1.bf16.msra.mxu0 %v2612
    %2676 = vmatprep.subr.bf16.mxu0 %v2617
    %2677 = vmatpush1.bf16.msra.mxu0 %v2616
    %2678 = vmatprep.subr.bf16.mxu0 %v2621
    %2679 = vmatpush1.bf16.msra.mxu0 %v2620
    %2680 = vmatprep.subr.bf16.mxu0 %v2625
    %2681 = vmatpush1.bf16.msra.mxu0 %v2624
    %2682 = vmatprep.subr.bf16.mxu0 %v2629
    %2683 = vmatpush1.bf16.msra.mxu0 %v2628
    %2684 = vmatprep.subr.bf16.mxu0 %v2633
    %2685 = vmatpush1.bf16.msra.mxu0 %v2632
    %2686 = vmatprep.subr.bf16.mxu0 %v2637
    %2687 = vmatpush1.bf16.msra.mxu0 %v2636
    %2688 = vmatprep.subr.bf16.mxu0 0
    %2689 = vmatpush1.bf16.msra.mxu0 0
    %2690 = vmatprep.subr.bf16.mxu0 0
    %2691 = vmatpush1.bf16.msra.mxu0 0
    %2692 = vmatprep.subr.bf16.mxu0 0
    %2693 = vmatpush1.bf16.msra.mxu0 0
    %2694 = vmatprep.subr.bf16.mxu0 0
    %2695 = vmatpush1.bf16.msra.mxu0 0
    %2696 = vmatprep.subr.bf16.mxu0 0
    %2697 = vmatpush1.bf16.msra.mxu0 0
    %2698 = vmatprep.subr.bf16.mxu0 0
    %2699 = vmatpush1.bf16.msra.mxu0 0
    %2700 = vmatprep.subr.bf16.mxu0 0
    %2701 = vmatpush1.bf16.msra.mxu0 0
    %2702 = vmatprep.subr.bf16.mxu0 0
    %2703 = vmatpush1.bf16.msra.mxu0 0
    %2704 = vmatprep.mubr.bf16.mxu0 0
    %2705 = vmatmul.mubr.bf16.gmra.mrb[0].mxu0 %v2479
    %v2706 = vpop.f32.mrb[0].mxu0
    %v2707 = vadd.f32 0.0, %v2706
    %v2708 = vpop.f32.mrb[0].mxu0
    %v2709 = vadd.f32 0.0, %v2708
    %v2710 = vpop.f32.mrb[0].mxu0
    %v2711 = vpop.f32.mrb[0].mxu0
    %2712 = vdwg.mxu0
    %2713 = vmatprep.subr.bf16.mxu0 %v2611
    %2714 = vmatpush1.bf16.msra.mxu0 %v2610
    %2715 = vmatprep.subr.bf16.mxu0 %v2615
    %2716 = vmatpush1.bf16.msra.mxu0 %v2614
    %2717 = vmatprep.subr.bf16.mxu0 %v2619
    %2718 = vmatpush1.bf16.msra.mxu0 %v2618
    %2719 = vmatprep.subr.bf16.mxu0 %v2623
    %2720 = vmatpush1.bf16.msra.mxu0 %v2622
    %2721 = vmatprep.subr.bf16.mxu0 %v2627
    %2722 = vmatpush1.bf16.msra.mxu0 %v2626
    %2723 = vmatprep.subr.bf16.mxu0 %v2631
    %2724 = vmatpush1.bf16.msra.mxu0 %v2630
    %2725 = vmatprep.subr.bf16.mxu0 %v2635
    %2726 = vmatpush1.bf16.msra.mxu0 %v2634
    %2727 = vmatprep.subr.bf16.mxu0 %v2639
    %2728 = vmatpush1.bf16.msra.mxu0 %v2638
    %2729 = vmatprep.subr.bf16.mxu0 0
    %2730 = vmatpush1.bf16.msra.mxu0 0
    %2731 = vmatprep.subr.bf16.mxu0 0
    %2732 = vmatpush1.bf16.msra.mxu0 0
    %2733 = vmatprep.subr.bf16.mxu0 0
    %2734 = vmatpush1.bf16.msra.mxu0 0
    %2735 = vmatprep.subr.bf16.mxu0 0
    %2736 = vmatpush1.bf16.msra.mxu0 0
    %2737 = vmatprep.subr.bf16.mxu0 0
    %2738 = vmatpush1.bf16.msra.mxu0 0
    %2739 = vmatprep.subr.bf16.mxu0 0
    %2740 = vmatpush1.bf16.msra.mxu0 0
    %2741 = vmatprep.subr.bf16.mxu0 0
    %2742 = vmatpush1.bf16.msra.mxu0 0
    %2743 = vmatprep.subr.bf16.mxu0 0
    %2744 = vmatpush1.bf16.msra.mxu0 0
    %2745 = vmatprep.mubr.bf16.mxu0 0
    %2746 = vmatmul.mubr.bf16.gmra.mrb[0].mxu0 %v2479
    %v2747 = vpop.f32.mrb[0].mxu0
    %v2748 = vadd.f32 0.0, %v2747
    %v2749 = vpop.f32.mrb[0].mxu0
    %v2750 = vadd.f32 0.0, %v2749
    %v2751 = vpop.f32.mrb[0].mxu0
    %v2752 = vpop.f32.mrb[0].mxu0
    %2753 = vdwg.mxu0
    %v2754 = vadd.f32 %v2475, %v2707
    %v2755 = vadd.f32 %v2476, %v2709
    %v2756 = vadd.f32 %v2477, %v2748
    %v2757 = vadd.f32 %v2478, %v2750
    %v2758 = vxor.u32 %v2754, 2147483648
    %v2759 = vxor.u32 %v2755, 2147483648
    %v2760 = vxor.u32 %v2756, 2147483648
    %v2761 = vmul.f32 %v2758, 1.442695
    %v2762 = vpow.pop %v2761
    %v2763 = vmul.f32 %v2759, 1.442695
    %v2764 = vpow.pop %v2763
    %v2765 = vmul.f32 %v2760, 1.442695
    %v2766 = vpow.pop %v2765
    %v2767 = vadd.f32 %v2762, 1.0
    %v2768 = vadd.f32 %v2764, 1.0
    %v2769 = vadd.f32 %v2766, 1.0
    %v2770 = vrcp.pop %v2767
    %v2771 = vmul.f32 1.0, %v2770
    %v2772 = vrcp.pop %v2768
    %v2773 = vmul.f32 1.0, %v2772
    %v2774 = vrcp.pop %v2769
    %v2775 = vmul.f32 1.0, %v2774
    %v2776 = vtanh.pop %v2757
    %v2777 = vmul.f32 %v2773, %v2139
    %v2778 = vmul.f32 %v2771, %v2776
    %v2779 = vadd.f32 %v2777, %v2778
    %v2780 = vtanh.pop %v2779
    %v2781 = vmul.f32 %v2775, %v2780
    %2783 = vset.pattern.permute.xlu0 0
    %2784 = vperm.xlu0 %2783, %v552
    %v2785 = vpop.permute.xlu0 %2784
    %v2787 = vmul.f32 %v2781, %v2785
    %v2788 = vpack.c.bf16 %v2787, %v2787
    %2789 = vst [vmem:[#allocation9 + $0x18] sm:$0xf] %v2788
    %v2790 = vld [vmem:[#allocation3 + $0x80] sm:$0xff]
    %v2791 = vld [vmem:[#allocation3 + $0x88] sm:$0xff]
    %v2792 = vld [vmem:[#allocation3 + $0x90] sm:$0xff]
    %v2793 = vld [vmem:[#allocation3 + $0x98] sm:$0xff]
    %v2794 = vld [vmem:[#allocation7] sm:$0xff]
    %v2795 = vld [vmem:[#allocation7 + $0x8] sm:$0xff]
    %v2796 = vld [vmem:[#allocation7 + $0x10] sm:$0xff]
    %v2797 = vld [vmem:[#allocation7 + $0x18] sm:$0xff]
    %v2798 = vld [vmem:[#allocation7 + $0x20] sm:$0xff]
    %v2799 = vld [vmem:[#allocation7 + $0x28] sm:$0xff]
    %v2800 = vld [vmem:[#allocation7 + $0x30] sm:$0xff]
    %v2801 = vld [vmem:[#allocation7 + $0x38] sm:$0xff]
    %v2802 = vld [vmem:[#allocation7 + $0x40] sm:$0xff]
    %v2803 = vld [vmem:[#allocation7 + $0x48] sm:$0xff]
    %v2804 = vld [vmem:[#allocation7 + $0x50] sm:$0xff]
    %v2805 = vld [vmem:[#allocation7 + $0x58] sm:$0xff]
    %v2806 = vld [vmem:[#allocation7 + $0x60] sm:$0xff]
    %v2807 = vld [vmem:[#allocation7 + $0x68] sm:$0xff]
    %v2808 = vld [vmem:[#allocation7 + $0x70] sm:$0xff]
    %v2809 = vld [vmem:[#allocation7 + $0x78] sm:$0xff]
    %v2810 = vld [vmem:[#allocation7 + $0x80] sm:$0xff]
    %v2811 = vld [vmem:[#allocation7 + $0x88] sm:$0xff]
    %v2812 = vld [vmem:[#allocation7 + $0x90] sm:$0xff]
    %v2813 = vld [vmem:[#allocation7 + $0x98] sm:$0xff]
    %v2814 = vld [vmem:[#allocation7 + $0xa0] sm:$0xff]
    %v2815 = vld [vmem:[#allocation7 + $0xa8] sm:$0xff]
    %v2816 = vld [vmem:[#allocation7 + $0xb0] sm:$0xff]
    %v2817 = vld [vmem:[#allocation7 + $0xb8] sm:$0xff]
    %v2818 = vld [vmem:[#allocation7 + $0xc0] sm:$0xff]
    %v2819 = vld [vmem:[#allocation7 + $0xc8] sm:$0xff]
    %v2820 = vld [vmem:[#allocation7 + $0xd0] sm:$0xff]
    %v2821 = vld [vmem:[#allocation7 + $0xd8] sm:$0xff]
    %v2822 = vld [vmem:[#allocation7 + $0xe0] sm:$0xff]
    %v2823 = vld [vmem:[#allocation7 + $0xe8] sm:$0xff]
    %v2824 = vld [vmem:[#allocation7 + $0xf0] sm:$0xff]
    %v2825 = vld [vmem:[#allocation7 + $0xf8] sm:$0xff]
    %v2858 = vunpack.c.l.b16 %v2794
    %v2859 = vunpack.c.h.b16 %v2794
    %v2860 = vunpack.c.l.b16 %v2795
    %v2861 = vunpack.c.h.b16 %v2795
    %v2862 = vunpack.c.l.b16 %v2796
    %v2863 = vunpack.c.h.b16 %v2796
    %v2864 = vunpack.c.l.b16 %v2797
    %v2865 = vunpack.c.h.b16 %v2797
    %v2866 = vunpack.c.l.b16 %v2798
    %v2867 = vunpack.c.h.b16 %v2798
    %v2868 = vunpack.c.l.b16 %v2799
    %v2869 = vunpack.c.h.b16 %v2799
    %v2870 = vunpack.c.l.b16 %v2800
    %v2871 = vunpack.c.h.b16 %v2800
    %v2872 = vunpack.c.l.b16 %v2801
    %v2873 = vunpack.c.h.b16 %v2801
    %v2874 = vunpack.c.l.b16 %v2802
    %v2875 = vunpack.c.h.b16 %v2802
    %v2876 = vunpack.c.l.b16 %v2803
    %v2877 = vunpack.c.h.b16 %v2803
    %v2878 = vunpack.c.l.b16 %v2804
    %v2879 = vunpack.c.h.b16 %v2804
    %v2880 = vunpack.c.l.b16 %v2805
    %v2881 = vunpack.c.h.b16 %v2805
    %v2882 = vunpack.c.l.b16 %v2806
    %v2883 = vunpack.c.h.b16 %v2806
    %v2884 = vunpack.c.l.b16 %v2807
    %v2885 = vunpack.c.h.b16 %v2807
    %v2886 = vunpack.c.l.b16 %v2808
    %v2887 = vunpack.c.h.b16 %v2808
    %v2888 = vunpack.c.l.b16 %v2809
    %v2889 = vunpack.c.h.b16 %v2809
    %v2890 = vunpack.c.l.b16 %v2810
    %v2891 = vunpack.c.h.b16 %v2810
    %v2892 = vunpack.c.l.b16 %v2811
    %v2893 = vunpack.c.h.b16 %v2811
    %v2894 = vunpack.c.l.b16 %v2812
    %v2895 = vunpack.c.h.b16 %v2812
    %v2896 = vunpack.c.l.b16 %v2813
    %v2897 = vunpack.c.h.b16 %v2813
    %v2898 = vunpack.c.l.b16 %v2814
    %v2899 = vunpack.c.h.b16 %v2814
    %v2900 = vunpack.c.l.b16 %v2815
    %v2901 = vunpack.c.h.b16 %v2815
    %v2902 = vunpack.c.l.b16 %v2816
    %v2903 = vunpack.c.h.b16 %v2816
    %v2904 = vunpack.c.l.b16 %v2817
    %v2905 = vunpack.c.h.b16 %v2817
    %v2906 = vunpack.c.l.b16 %v2818
    %v2907 = vunpack.c.h.b16 %v2818
    %v2908 = vunpack.c.l.b16 %v2819
    %v2909 = vunpack.c.h.b16 %v2819
    %v2910 = vunpack.c.l.b16 %v2820
    %v2911 = vunpack.c.h.b16 %v2820
    %v2912 = vunpack.c.l.b16 %v2821
    %v2913 = vunpack.c.h.b16 %v2821
    %v2914 = vunpack.c.l.b16 %v2822
    %v2915 = vunpack.c.h.b16 %v2822
    %v2916 = vunpack.c.l.b16 %v2823
    %v2917 = vunpack.c.h.b16 %v2823
    %v2918 = vunpack.c.l.b16 %v2824
    %v2919 = vunpack.c.h.b16 %v2824
    %v2920 = vunpack.c.l.b16 %v2825
    %v2921 = vunpack.c.h.b16 %v2825
    %v2922 = vpack.c.b16 %v2862, %v2858
    %v2923 = vpack.c.b16 %v2863, %v2859
    %v2924 = vpack.c.b16 %v2864, %v2860
    %v2925 = vpack.c.b16 %v2865, %v2861
    %v2926 = vpack.c.b16 %v2870, %v2866
    %v2927 = vpack.c.b16 %v2871, %v2867
    %v2928 = vpack.c.b16 %v2872, %v2868
    %v2929 = vpack.c.b16 %v2873, %v2869
    %v2930 = vpack.c.b16 %v2878, %v2874
    %v2931 = vpack.c.b16 %v2879, %v2875
    %v2932 = vpack.c.b16 %v2880, %v2876
    %v2933 = vpack.c.b16 %v2881, %v2877
    %v2934 = vpack.c.b16 %v2886, %v2882
    %v2935 = vpack.c.b16 %v2887, %v2883
    %v2936 = vpack.c.b16 %v2888, %v2884
    %v2937 = vpack.c.b16 %v2889, %v2885
    %v2938 = vpack.c.b16 %v2894, %v2890
    %v2939 = vpack.c.b16 %v2895, %v2891
    %v2940 = vpack.c.b16 %v2896, %v2892
    %v2941 = vpack.c.b16 %v2897, %v2893
    %v2942 = vpack.c.b16 %v2902, %v2898
    %v2943 = vpack.c.b16 %v2903, %v2899
    %v2944 = vpack.c.b16 %v2904, %v2900
    %v2945 = vpack.c.b16 %v2905, %v2901
    %v2946 = vpack.c.b16 %v2910, %v2906
    %v2947 = vpack.c.b16 %v2911, %v2907
    %v2948 = vpack.c.b16 %v2912, %v2908
    %v2949 = vpack.c.b16 %v2913, %v2909
    %v2950 = vpack.c.b16 %v2918, %v2914
    %v2951 = vpack.c.b16 %v2919, %v2915
    %v2952 = vpack.c.b16 %v2920, %v2916
    %v2953 = vpack.c.b16 %v2921, %v2917
    %2986 = vmatprep.subr.bf16.mxu0 %v2923
    %2987 = vmatpush1.bf16.msra.mxu0 %v2922
    %2988 = vmatprep.subr.bf16.mxu0 %v2927
    %2989 = vmatpush1.bf16.msra.mxu0 %v2926
    %2990 = vmatprep.subr.bf16.mxu0 %v2931
    %2991 = vmatpush1.bf16.msra.mxu0 %v2930
    %2992 = vmatprep.subr.bf16.mxu0 %v2935
    %2993 = vmatpush1.bf16.msra.mxu0 %v2934
    %2994 = vmatprep.subr.bf16.mxu0 %v2939
    %2995 = vmatpush1.bf16.msra.mxu0 %v2938
    %2996 = vmatprep.subr.bf16.mxu0 %v2943
    %2997 = vmatpush1.bf16.msra.mxu0 %v2942
    %2998 = vmatprep.subr.bf16.mxu0 %v2947
    %2999 = vmatpush1.bf16.msra.mxu0 %v2946
    %3000 = vmatprep.subr.bf16.mxu0 %v2951
    %3001 = vmatpush1.bf16.msra.mxu0 %v2950
    %3002 = vmatprep.subr.bf16.mxu0 0
    %3003 = vmatpush1.bf16.msra.mxu0 0
    %3004 = vmatprep.subr.bf16.mxu0 0
    %3005 = vmatpush1.bf16.msra.mxu0 0
    %3006 = vmatprep.subr.bf16.mxu0 0
    %3007 = vmatpush1.bf16.msra.mxu0 0
    %3008 = vmatprep.subr.bf16.mxu0 0
    %3009 = vmatpush1.bf16.msra.mxu0 0
    %3010 = vmatprep.subr.bf16.mxu0 0
    %3011 = vmatpush1.bf16.msra.mxu0 0
    %3012 = vmatprep.subr.bf16.mxu0 0
    %3013 = vmatpush1.bf16.msra.mxu0 0
    %3014 = vmatprep.subr.bf16.mxu0 0
    %3015 = vmatpush1.bf16.msra.mxu0 0
    %3016 = vmatprep.subr.bf16.mxu0 0
    %3017 = vmatpush1.bf16.msra.mxu0 0
    %3018 = vmatprep.mubr.bf16.mxu0 0
    %3019 = vmatmul.mubr.bf16.gmra.mrb[0].mxu0 %v2473
    %v3020 = vpop.f32.mrb[0].mxu0
    %v3021 = vadd.f32 0.0, %v3020
    %v3022 = vpop.f32.mrb[0].mxu0
    %v3023 = vadd.f32 0.0, %v3022
    %v3024 = vpop.f32.mrb[0].mxu0
    %v3025 = vpop.f32.mrb[0].mxu0
    %3026 = vdwg.mxu0
    %3027 = vmatprep.subr.bf16.mxu0 %v2925
    %3028 = vmatpush1.bf16.msra.mxu0 %v2924
    %3029 = vmatprep.subr.bf16.mxu0 %v2929
    %3030 = vmatpush1.bf16.msra.mxu0 %v2928
    %3031 = vmatprep.subr.bf16.mxu0 %v2933
    %3032 = vmatpush1.bf16.msra.mxu0 %v2932
    %3033 = vmatprep.subr.bf16.mxu0 %v2937
    %3034 = vmatpush1.bf16.msra.mxu0 %v2936
    %3035 = vmatprep.subr.bf16.mxu0 %v2941
    %3036 = vmatpush1.bf16.msra.mxu0 %v2940
    %3037 = vmatprep.subr.bf16.mxu0 %v2945
    %3038 = vmatpush1.bf16.msra.mxu0 %v2944
    %3039 = vmatprep.subr.bf16.mxu0 %v2949
    %3040 = vmatpush1.bf16.msra.mxu0 %v2948
    %3041 = vmatprep.subr.bf16.mxu0 %v2953
    %3042 = vmatpush1.bf16.msra.mxu0 %v2952
    %3043 = vmatprep.subr.bf16.mxu0 0
    %3044 = vmatpush1.bf16.msra.mxu0 0
    %3045 = vmatprep.subr.bf16.mxu0 0
    %3046 = vmatpush1.bf16.msra.mxu0 0
    %3047 = vmatprep.subr.bf16.mxu0 0
    %3048 = vmatpush1.bf16.msra.mxu0 0
    %3049 = vmatprep.subr.bf16.mxu0 0
    %3050 = vmatpush1.bf16.msra.mxu0 0
    %3051 = vmatprep.subr.bf16.mxu0 0
    %3052 = vmatpush1.bf16.msra.mxu0 0
    %3053 = vmatprep.subr.bf16.mxu0 0
    %3054 = vmatpush1.bf16.msra.mxu0 0
    %3055 = vmatprep.subr.bf16.mxu0 0
    %3056 = vmatpush1.bf16.msra.mxu0 0
    %3057 = vmatprep.subr.bf16.mxu0 0
    %3058 = vmatpush1.bf16.msra.mxu0 0
    %3059 = vmatprep.mubr.bf16.mxu0 0
    %3060 = vmatmul.mubr.bf16.gmra.mrb[0].mxu0 %v2473
    %v3061 = vpop.f32.mrb[0].mxu0
    %v3062 = vadd.f32 0.0, %v3061
    %v3063 = vpop.f32.mrb[0].mxu0
    %v3064 = vadd.f32 0.0, %v3063
    %v3065 = vpop.f32.mrb[0].mxu0
    %v3066 = vpop.f32.mrb[0].mxu0
    %3067 = vdwg.mxu0
    %v3068 = vadd.f32 %v2790, %v3021
    %v3069 = vadd.f32 %v2791, %v3023
    %v3070 = vadd.f32 %v2792, %v3062
    %v3071 = vadd.f32 %v2793, %v3064
    %v3072 = vxor.u32 %v3068, 2147483648
    %v3073 = vxor.u32 %v3069, 2147483648
    %v3074 = vxor.u32 %v3070, 2147483648
    %v3075 = vmul.f32 %v3072, 1.442695
    %v3076 = vpow.pop %v3075
    %v3077 = vmul.f32 %v3073, 1.442695
    %v3078 = vpow.pop %v3077
    %v3079 = vmul.f32 %v3074, 1.442695
    %v3080 = vpow.pop %v3079
    %v3081 = vadd.f32 %v3076, 1.0
    %v3082 = vadd.f32 %v3078, 1.0
    %v3083 = vadd.f32 %v3080, 1.0
    %v3084 = vrcp.pop %v3081
    %v3085 = vmul.f32 1.0, %v3084
    %v3086 = vrcp.pop %v3082
    %v3087 = vmul.f32 1.0, %v3086
    %v3088 = vrcp.pop %v3083
    %v3089 = vmul.f32 1.0, %v3088
    %v3090 = vtanh.pop %v3071
    %v3091 = vmul.f32 %v3087, %v2472
    %v3092 = vmul.f32 %v3085, %v3090
    %v3093 = vadd.f32 %v3091, %v3092
    %v3094 = vtanh.pop %v3093
    %v3095 = vmul.f32 %v3089, %v3094
    %3097 = vset.pattern.permute.xlu0 0
    %3098 = vperm.xlu0 %3097, %v553
    %v3099 = vpop.permute.xlu0 %3098
    %v3101 = vmul.f32 %v3095, %v3099
    %v3102 = vsub.f32 1.0, %v553
    %3104 = vset.pattern.permute.xlu0 0
    %3105 = vperm.xlu0 %3104, %v3102
    %v3106 = vpop.permute.xlu0 %3105
    %v3108 = vmul.f32 %v2469, %v3106
    %v3109 = vadd.f32 %v3101, %v3108
    %v3110 = vmul.f32 %v3093, %v3099
    %v3111 = vmul.f32 %v2472, %v3106
    %v3112 = vadd.f32 %v3110, %v3111
    %v3113 = vpack.c.bf16 %v3109, %v3109
    %3114 = vst [vmem:[#allocation9 + $0x24] sm:$0xf] %v3113
    %v3115 = vld [vmem:[#allocation2 + $0x80] sm:$0xff]
    %v3116 = vld [vmem:[#allocation2 + $0x88] sm:$0xff]
    %v3117 = vld [vmem:[#allocation2 + $0x90] sm:$0xff]
    %v3118 = vld [vmem:[#allocation2 + $0x98] sm:$0xff]
    %v3119 = vpack.c.bf16 %v2781, %v2781
    %v3120 = vld [vmem:[#allocation4] sm:$0xff]
    %v3121 = vld [vmem:[#allocation4 + $0x8] sm:$0xff]
    %v3122 = vld [vmem:[#allocation4 + $0x10] sm:$0xff]
    %v3123 = vld [vmem:[#allocation4 + $0x18] sm:$0xff]
    %v3124 = vld [vmem:[#allocation4 + $0x20] sm:$0xff]
    %v3125 = vld [vmem:[#allocation4 + $0x28] sm:$0xff]
    %v3126 = vld [vmem:[#allocation4 + $0x30] sm:$0xff]
    %v3127 = vld [vmem:[#allocation4 + $0x38] sm:$0xff]
    %v3128 = vld [vmem:[#allocation4 + $0x40] sm:$0xff]
    %v3129 = vld [vmem:[#allocation4 + $0x48] sm:$0xff]
    %v3130 = vld [vmem:[#allocation4 + $0x50] sm:$0xff]
    %v3131 = vld [vmem:[#allocation4 + $0x58] sm:$0xff]
    %v3132 = vld [vmem:[#allocation4 + $0x60] sm:$0xff]
    %v3133 = vld [vmem:[#allocation4 + $0x68] sm:$0xff]
    %v3134 = vld [vmem:[#allocation4 + $0x70] sm:$0xff]
    %v3135 = vld [vmem:[#allocation4 + $0x78] sm:$0xff]
    %v3136 = vld [vmem:[#allocation4 + $0x80] sm:$0xff]
    %v3137 = vld [vmem:[#allocation4 + $0x88] sm:$0xff]
    %v3138 = vld [vmem:[#allocation4 + $0x90] sm:$0xff]
    %v3139 = vld [vmem:[#allocation4 + $0x98] sm:$0xff]
    %v3140 = vld [vmem:[#allocation4 + $0xa0] sm:$0xff]
    %v3141 = vld [vmem:[#allocation4 + $0xa8] sm:$0xff]
    %v3142 = vld [vmem:[#allocation4 + $0xb0] sm:$0xff]
    %v3143 = vld [vmem:[#allocation4 + $0xb8] sm:$0xff]
    %v3144 = vld [vmem:[#allocation4 + $0xc0] sm:$0xff]
    %v3145 = vld [vmem:[#allocation4 + $0xc8] sm:$0xff]
    %v3146 = vld [vmem:[#allocation4 + $0xd0] sm:$0xff]
    %v3147 = vld [vmem:[#allocation4 + $0xd8] sm:$0xff]
    %v3148 = vld [vmem:[#allocation4 + $0xe0] sm:$0xff]
    %v3149 = vld [vmem:[#allocation4 + $0xe8] sm:$0xff]
    %v3150 = vld [vmem:[#allocation4 + $0xf0] sm:$0xff]
    %v3151 = vld [vmem:[#allocation4 + $0xf8] sm:$0xff]
    %v3184 = vunpack.c.l.b16 %v3120
    %v3185 = vunpack.c.h.b16 %v3120
    %v3186 = vunpack.c.l.b16 %v3121
    %v3187 = vunpack.c.h.b16 %v3121
    %v3188 = vunpack.c.l.b16 %v3122
    %v3189 = vunpack.c.h.b16 %v3122
    %v3190 = vunpack.c.l.b16 %v3123
    %v3191 = vunpack.c.h.b16 %v3123
    %v3192 = vunpack.c.l.b16 %v3124
    %v3193 = vunpack.c.h.b16 %v3124
    %v3194 = vunpack.c.l.b16 %v3125
    %v3195 = vunpack.c.h.b16 %v3125
    %v3196 = vunpack.c.l.b16 %v3126
    %v3197 = vunpack.c.h.b16 %v3126
    %v3198 = vunpack.c.l.b16 %v3127
    %v3199 = vunpack.c.h.b16 %v3127
    %v3200 = vunpack.c.l.b16 %v3128
    %v3201 = vunpack.c.h.b16 %v3128
    %v3202 = vunpack.c.l.b16 %v3129
    %v3203 = vunpack.c.h.b16 %v3129
    %v3204 = vunpack.c.l.b16 %v3130
    %v3205 = vunpack.c.h.b16 %v3130
    %v3206 = vunpack.c.l.b16 %v3131
    %v3207 = vunpack.c.h.b16 %v3131
    %v3208 = vunpack.c.l.b16 %v3132
    %v3209 = vunpack.c.h.b16 %v3132
    %v3210 = vunpack.c.l.b16 %v3133
    %v3211 = vunpack.c.h.b16 %v3133
    %v3212 = vunpack.c.l.b16 %v3134
    %v3213 = vunpack.c.h.b16 %v3134
    %v3214 = vunpack.c.l.b16 %v3135
    %v3215 = vunpack.c.h.b16 %v3135
    %v3216 = vunpack.c.l.b16 %v3136
    %v3217 = vunpack.c.h.b16 %v3136
    %v3218 = vunpack.c.l.b16 %v3137
    %v3219 = vunpack.c.h.b16 %v3137
    %v3220 = vunpack.c.l.b16 %v3138
    %v3221 = vunpack.c.h.b16 %v3138
    %v3222 = vunpack.c.l.b16 %v3139
    %v3223 = vunpack.c.h.b16 %v3139
    %v3224 = vunpack.c.l.b16 %v3140
    %v3225 = vunpack.c.h.b16 %v3140
    %v3226 = vunpack.c.l.b16 %v3141
    %v3227 = vunpack.c.h.b16 %v3141
    %v3228 = vunpack.c.l.b16 %v3142
    %v3229 = vunpack.c.h.b16 %v3142
    %v3230 = vunpack.c.l.b16 %v3143
    %v3231 = vunpack.c.h.b16 %v3143
    %v3232 = vunpack.c.l.b16 %v3144
    %v3233 = vunpack.c.h.b16 %v3144
    %v3234 = vunpack.c.l.b16 %v3145
    %v3235 = vunpack.c.h.b16 %v3145
    %v3236 = vunpack.c.l.b16 %v3146
    %v3237 = vunpack.c.h.b16 %v3146
    %v3238 = vunpack.c.l.b16 %v3147
    %v3239 = vunpack.c.h.b16 %v3147
    %v3240 = vunpack.c.l.b16 %v3148
    %v3241 = vunpack.c.h.b16 %v3148
    %v3242 = vunpack.c.l.b16 %v3149
    %v3243 = vunpack.c.h.b16 %v3149
    %v3244 = vunpack.c.l.b16 %v3150
    %v3245 = vunpack.c.h.b16 %v3150
    %v3246 = vunpack.c.l.b16 %v3151
    %v3247 = vunpack.c.h.b16 %v3151
    %v3248 = vpack.c.b16 %v3188, %v3184
    %v3249 = vpack.c.b16 %v3189, %v3185
    %v3250 = vpack.c.b16 %v3190, %v3186
    %v3251 = vpack.c.b16 %v3191, %v3187
    %v3252 = vpack.c.b16 %v3196, %v3192
    %v3253 = vpack.c.b16 %v3197, %v3193
    %v3254 = vpack.c.b16 %v3198, %v3194
    %v3255 = vpack.c.b16 %v3199, %v3195
    %v3256 = vpack.c.b16 %v3204, %v3200
    %v3257 = vpack.c.b16 %v3205, %v3201
    %v3258 = vpack.c.b16 %v3206, %v3202
    %v3259 = vpack.c.b16 %v3207, %v3203
    %v3260 = vpack.c.b16 %v3212, %v3208
    %v3261 = vpack.c.b16 %v3213, %v3209
    %v3262 = vpack.c.b16 %v3214, %v3210
    %v3263 = vpack.c.b16 %v3215, %v3211
    %v3264 = vpack.c.b16 %v3220, %v3216
    %v3265 = vpack.c.b16 %v3221, %v3217
    %v3266 = vpack.c.b16 %v3222, %v3218
    %v3267 = vpack.c.b16 %v3223, %v3219
    %v3268 = vpack.c.b16 %v3228, %v3224
    %v3269 = vpack.c.b16 %v3229, %v3225
    %v3270 = vpack.c.b16 %v3230, %v3226
    %v3271 = vpack.c.b16 %v3231, %v3227
    %v3272 = vpack.c.b16 %v3236, %v3232
    %v3273 = vpack.c.b16 %v3237, %v3233
    %v3274 = vpack.c.b16 %v3238, %v3234
    %v3275 = vpack.c.b16 %v3239, %v3235
    %v3276 = vpack.c.b16 %v3244, %v3240
    %v3277 = vpack.c.b16 %v3245, %v3241
    %v3278 = vpack.c.b16 %v3246, %v3242
    %v3279 = vpack.c.b16 %v3247, %v3243
    %3312 = vmatprep.subr.bf16.mxu0 %v3249
    %3313 = vmatpush1.bf16.msra.mxu0 %v3248
    %3314 = vmatprep.subr.bf16.mxu0 %v3253
    %3315 = vmatpush1.bf16.msra.mxu0 %v3252
    %3316 = vmatprep.subr.bf16.mxu0 %v3257
    %3317 = vmatpush1.bf16.msra.mxu0 %v3256
    %3318 = vmatprep.subr.bf16.mxu0 %v3261
    %3319 = vmatpush1.bf16.msra.mxu0 %v3260
    %3320 = vmatprep.subr.bf16.mxu0 %v3265
    %3321 = vmatpush1.bf16.msra.mxu0 %v3264
    %3322 = vmatprep.subr.bf16.mxu0 %v3269
    %3323 = vmatpush1.bf16.msra.mxu0 %v3268
    %3324 = vmatprep.subr.bf16.mxu0 %v3273
    %3325 = vmatpush1.bf16.msra.mxu0 %v3272
    %3326 = vmatprep.subr.bf16.mxu0 %v3277
    %3327 = vmatpush1.bf16.msra.mxu0 %v3276
    %3328 = vmatprep.subr.bf16.mxu0 0
    %3329 = vmatpush1.bf16.msra.mxu0 0
    %3330 = vmatprep.subr.bf16.mxu0 0
    %3331 = vmatpush1.bf16.msra.mxu0 0
    %3332 = vmatprep.subr.bf16.mxu0 0
    %3333 = vmatpush1.bf16.msra.mxu0 0
    %3334 = vmatprep.subr.bf16.mxu0 0
    %3335 = vmatpush1.bf16.msra.mxu0 0
    %3336 = vmatprep.subr.bf16.mxu0 0
    %3337 = vmatpush1.bf16.msra.mxu0 0
    %3338 = vmatprep.subr.bf16.mxu0 0
    %3339 = vmatpush1.bf16.msra.mxu0 0
    %3340 = vmatprep.subr.bf16.mxu0 0
    %3341 = vmatpush1.bf16.msra.mxu0 0
    %3342 = vmatprep.subr.bf16.mxu0 0
    %3343 = vmatpush1.bf16.msra.mxu0 0
    %3344 = vmatprep.mubr.bf16.mxu0 0
    %3345 = vmatmul.mubr.bf16.gmra.mrb[0].mxu0 %v3119
    %v3346 = vpop.f32.mrb[0].mxu0
    %v3347 = vadd.f32 0.0, %v3346
    %v3348 = vpop.f32.mrb[0].mxu0
    %v3349 = vadd.f32 0.0, %v3348
    %v3350 = vpop.f32.mrb[0].mxu0
    %v3351 = vpop.f32.mrb[0].mxu0
    %3352 = vdwg.mxu0
    %3353 = vmatprep.subr.bf16.mxu0 %v3251
    %3354 = vmatpush1.bf16.msra.mxu0 %v3250
    %3355 = vmatprep.subr.bf16.mxu0 %v3255
    %3356 = vmatpush1.bf16.msra.mxu0 %v3254
    %3357 = vmatprep.subr.bf16.mxu0 %v3259
    %3358 = vmatpush1.bf16.msra.mxu0 %v3258
    %3359 = vmatprep.subr.bf16.mxu0 %v3263
    %3360 = vmatpush1.bf16.msra.mxu0 %v3262
    %3361 = vmatprep.subr.bf16.mxu0 %v3267
    %3362 = vmatpush1.bf16.msra.mxu0 %v3266
    %3363 = vmatprep.subr.bf16.mxu0 %v3271
    %3364 = vmatpush1.bf16.msra.mxu0 %v3270
    %3365 = vmatprep.subr.bf16.mxu0 %v3275
    %3366 = vmatpush1.bf16.msra.mxu0 %v3274
    %3367 = vmatprep.subr.bf16.mxu0 %v3279
    %3368 = vmatpush1.bf16.msra.mxu0 %v3278
    %3369 = vmatprep.subr.bf16.mxu0 0
    %3370 = vmatpush1.bf16.msra.mxu0 0
    %3371 = vmatprep.subr.bf16.mxu0 0
    %3372 = vmatpush1.bf16.msra.mxu0 0
    %3373 = vmatprep.subr.bf16.mxu0 0
    %3374 = vmatpush1.bf16.msra.mxu0 0
    %3375 = vmatprep.subr.bf16.mxu0 0
    %3376 = vmatpush1.bf16.msra.mxu0 0
    %3377 = vmatprep.subr.bf16.mxu0 0
    %3378 = vmatpush1.bf16.msra.mxu0 0
    %3379 = vmatprep.subr.bf16.mxu0 0
    %3380 = vmatpush1.bf16.msra.mxu0 0
    %3381 = vmatprep.subr.bf16.mxu0 0
    %3382 = vmatpush1.bf16.msra.mxu0 0
    %3383 = vmatprep.subr.bf16.mxu0 0
    %3384 = vmatpush1.bf16.msra.mxu0 0
    %3385 = vmatprep.mubr.bf16.mxu0 0
    %3386 = vmatmul.mubr.bf16.gmra.mrb[0].mxu0 %v3119
    %v3387 = vpop.f32.mrb[0].mxu0
    %v3388 = vadd.f32 0.0, %v3387
    %v3389 = vpop.f32.mrb[0].mxu0
    %v3390 = vadd.f32 0.0, %v3389
    %v3391 = vpop.f32.mrb[0].mxu0
    %v3392 = vpop.f32.mrb[0].mxu0
    %3393 = vdwg.mxu0
    %v3394 = vadd.f32 %v3115, %v3347
    %v3395 = vadd.f32 %v3116, %v3349
    %v3396 = vadd.f32 %v3117, %v3388
    %v3397 = vadd.f32 %v3118, %v3390
    %v3398 = vxor.u32 %v3394, 2147483648
    %v3399 = vxor.u32 %v3395, 2147483648
    %v3400 = vxor.u32 %v3396, 2147483648
    %v3401 = vmul.f32 %v3398, 1.442695
    %v3402 = vpow.pop %v3401
    %v3403 = vmul.f32 %v3399, 1.442695
    %v3404 = vpow.pop %v3403
    %v3405 = vmul.f32 %v3400, 1.442695
    %v3406 = vpow.pop %v3405
    %v3407 = vadd.f32 %v3402, 1.0
    %v3408 = vadd.f32 %v3404, 1.0
    %v3409 = vadd.f32 %v3406, 1.0
    %v3410 = vrcp.pop %v3407
    %v3411 = vmul.f32 1.0, %v3410
    %v3412 = vrcp.pop %v3408
    %v3413 = vmul.f32 1.0, %v3412
    %v3414 = vrcp.pop %v3409
    %v3415 = vmul.f32 1.0, %v3414
    %v3416 = vtanh.pop %v3397
    %v3417 = vmul.f32 %v3413, %v2779
    %v3418 = vmul.f32 %v3411, %v3416
    %v3419 = vadd.f32 %v3417, %v3418
    %v3420 = vtanh.pop %v3419
    %v3421 = vmul.f32 %v3415, %v3420
    %v3422 = vmul.f32 %v3421, %v3099
    %v3423 = vpack.c.bf16 %v3422, %v3422
    %3424 = vst [vmem:[#allocation9 + $0x20] sm:$0xf] %v3423
    %v3425 = vld [vmem:[#allocation3 + $0x60] sm:$0xff]
    %v3426 = vld [vmem:[#allocation3 + $0x68] sm:$0xff]
    %v3427 = vld [vmem:[#allocation3 + $0x70] sm:$0xff]
    %v3428 = vld [vmem:[#allocation3 + $0x78] sm:$0xff]
    %v3429 = vld [vmem:[#allocation7] sm:$0xff]
    %v3430 = vld [vmem:[#allocation7 + $0x8] sm:$0xff]
    %v3431 = vld [vmem:[#allocation7 + $0x10] sm:$0xff]
    %v3432 = vld [vmem:[#allocation7 + $0x18] sm:$0xff]
    %v3433 = vld [vmem:[#allocation7 + $0x20] sm:$0xff]
    %v3434 = vld [vmem:[#allocation7 + $0x28] sm:$0xff]
    %v3435 = vld [vmem:[#allocation7 + $0x30] sm:$0xff]
    %v3436 = vld [vmem:[#allocation7 + $0x38] sm:$0xff]
    %v3437 = vld [vmem:[#allocation7 + $0x40] sm:$0xff]
    %v3438 = vld [vmem:[#allocation7 + $0x48] sm:$0xff]
    %v3439 = vld [vmem:[#allocation7 + $0x50] sm:$0xff]
    %v3440 = vld [vmem:[#allocation7 + $0x58] sm:$0xff]
    %v3441 = vld [vmem:[#allocation7 + $0x60] sm:$0xff]
    %v3442 = vld [vmem:[#allocation7 + $0x68] sm:$0xff]
    %v3443 = vld [vmem:[#allocation7 + $0x70] sm:$0xff]
    %v3444 = vld [vmem:[#allocation7 + $0x78] sm:$0xff]
    %v3445 = vld [vmem:[#allocation7 + $0x80] sm:$0xff]
    %v3446 = vld [vmem:[#allocation7 + $0x88] sm:$0xff]
    %v3447 = vld [vmem:[#allocation7 + $0x90] sm:$0xff]
    %v3448 = vld [vmem:[#allocation7 + $0x98] sm:$0xff]
    %v3449 = vld [vmem:[#allocation7 + $0xa0] sm:$0xff]
    %v3450 = vld [vmem:[#allocation7 + $0xa8] sm:$0xff]
    %v3451 = vld [vmem:[#allocation7 + $0xb0] sm:$0xff]
    %v3452 = vld [vmem:[#allocation7 + $0xb8] sm:$0xff]
    %v3453 = vld [vmem:[#allocation7 + $0xc0] sm:$0xff]
    %v3454 = vld [vmem:[#allocation7 + $0xc8] sm:$0xff]
    %v3455 = vld [vmem:[#allocation7 + $0xd0] sm:$0xff]
    %v3456 = vld [vmem:[#allocation7 + $0xd8] sm:$0xff]
    %v3457 = vld [vmem:[#allocation7 + $0xe0] sm:$0xff]
    %v3458 = vld [vmem:[#allocation7 + $0xe8] sm:$0xff]
    %v3459 = vld [vmem:[#allocation7 + $0xf0] sm:$0xff]
    %v3460 = vld [vmem:[#allocation7 + $0xf8] sm:$0xff]
    %v3493 = vunpack.c.l.b16 %v3429
    %v3494 = vunpack.c.h.b16 %v3429
    %v3495 = vunpack.c.l.b16 %v3430
    %v3496 = vunpack.c.h.b16 %v3430
    %v3497 = vunpack.c.l.b16 %v3431
    %v3498 = vunpack.c.h.b16 %v3431
    %v3499 = vunpack.c.l.b16 %v3432
    %v3500 = vunpack.c.h.b16 %v3432
    %v3501 = vunpack.c.l.b16 %v3433
    %v3502 = vunpack.c.h.b16 %v3433
    %v3503 = vunpack.c.l.b16 %v3434
    %v3504 = vunpack.c.h.b16 %v3434
    %v3505 = vunpack.c.l.b16 %v3435
    %v3506 = vunpack.c.h.b16 %v3435
    %v3507 = vunpack.c.l.b16 %v3436
    %v3508 = vunpack.c.h.b16 %v3436
    %v3509 = vunpack.c.l.b16 %v3437
    %v3510 = vunpack.c.h.b16 %v3437
    %v3511 = vunpack.c.l.b16 %v3438
    %v3512 = vunpack.c.h.b16 %v3438
    %v3513 = vunpack.c.l.b16 %v3439
    %v3514 = vunpack.c.h.b16 %v3439
    %v3515 = vunpack.c.l.b16 %v3440
    %v3516 = vunpack.c.h.b16 %v3440
    %v3517 = vunpack.c.l.b16 %v3441
    %v3518 = vunpack.c.h.b16 %v3441
    %v3519 = vunpack.c.l.b16 %v3442
    %v3520 = vunpack.c.h.b16 %v3442
    %v3521 = vunpack.c.l.b16 %v3443
    %v3522 = vunpack.c.h.b16 %v3443
    %v3523 = vunpack.c.l.b16 %v3444
    %v3524 = vunpack.c.h.b16 %v3444
    %v3525 = vunpack.c.l.b16 %v3445
    %v3526 = vunpack.c.h.b16 %v3445
    %v3527 = vunpack.c.l.b16 %v3446
    %v3528 = vunpack.c.h.b16 %v3446
    %v3529 = vunpack.c.l.b16 %v3447
    %v3530 = vunpack.c.h.b16 %v3447
    %v3531 = vunpack.c.l.b16 %v3448
    %v3532 = vunpack.c.h.b16 %v3448
    %v3533 = vunpack.c.l.b16 %v3449
    %v3534 = vunpack.c.h.b16 %v3449
    %v3535 = vunpack.c.l.b16 %v3450
    %v3536 = vunpack.c.h.b16 %v3450
    %v3537 = vunpack.c.l.b16 %v3451
    %v3538 = vunpack.c.h.b16 %v3451
    %v3539 = vunpack.c.l.b16 %v3452
    %v3540 = vunpack.c.h.b16 %v3452
    %v3541 = vunpack.c.l.b16 %v3453
    %v3542 = vunpack.c.h.b16 %v3453
    %v3543 = vunpack.c.l.b16 %v3454
    %v3544 = vunpack.c.h.b16 %v3454
    %v3545 = vunpack.c.l.b16 %v3455
    %v3546 = vunpack.c.h.b16 %v3455
    %v3547 = vunpack.c.l.b16 %v3456
    %v3548 = vunpack.c.h.b16 %v3456
    %v3549 = vunpack.c.l.b16 %v3457
    %v3550 = vunpack.c.h.b16 %v3457
    %v3551 = vunpack.c.l.b16 %v3458
    %v3552 = vunpack.c.h.b16 %v3458
    %v3553 = vunpack.c.l.b16 %v3459
    %v3554 = vunpack.c.h.b16 %v3459
    %v3555 = vunpack.c.l.b16 %v3460
    %v3556 = vunpack.c.h.b16 %v3460
    %v3557 = vpack.c.b16 %v3497, %v3493
    %v3558 = vpack.c.b16 %v3498, %v3494
    %v3559 = vpack.c.b16 %v3499, %v3495
    %v3560 = vpack.c.b16 %v3500, %v3496
    %v3561 = vpack.c.b16 %v3505, %v3501
    %v3562 = vpack.c.b16 %v3506, %v3502
    %v3563 = vpack.c.b16 %v3507, %v3503
    %v3564 = vpack.c.b16 %v3508, %v3504
    %v3565 = vpack.c.b16 %v3513, %v3509
    %v3566 = vpack.c.b16 %v3514, %v3510
    %v3567 = vpack.c.b16 %v3515, %v3511
    %v3568 = vpack.c.b16 %v3516, %v3512
    %v3569 = vpack.c.b16 %v3521, %v3517
    %v3570 = vpack.c.b16 %v3522, %v3518
    %v3571 = vpack.c.b16 %v3523, %v3519
    %v3572 = vpack.c.b16 %v3524, %v3520
    %v3573 = vpack.c.b16 %v3529, %v3525
    %v3574 = vpack.c.b16 %v3530, %v3526
    %v3575 = vpack.c.b16 %v3531, %v3527
    %v3576 = vpack.c.b16 %v3532, %v3528
    %v3577 = vpack.c.b16 %v3537, %v3533
    %v3578 = vpack.c.b16 %v3538, %v3534
    %v3579 = vpack.c.b16 %v3539, %v3535
    %v3580 = vpack.c.b16 %v3540, %v3536
    %v3581 = vpack.c.b16 %v3545, %v3541
    %v3582 = vpack.c.b16 %v3546, %v3542
    %v3583 = vpack.c.b16 %v3547, %v3543
    %v3584 = vpack.c.b16 %v3548, %v3544
    %v3585 = vpack.c.b16 %v3553, %v3549
    %v3586 = vpack.c.b16 %v3554, %v3550
    %v3587 = vpack.c.b16 %v3555, %v3551
    %v3588 = vpack.c.b16 %v3556, %v3552
    %3621 = vmatprep.subr.bf16.mxu0 %v3558
    %3622 = vmatpush1.bf16.msra.mxu0 %v3557
    %3623 = vmatprep.subr.bf16.mxu0 %v3562
    %3624 = vmatpush1.bf16.msra.mxu0 %v3561
    %3625 = vmatprep.subr.bf16.mxu0 %v3566
    %3626 = vmatpush1.bf16.msra.mxu0 %v3565
    %3627 = vmatprep.subr.bf16.mxu0 %v3570
    %3628 = vmatpush1.bf16.msra.mxu0 %v3569
    %3629 = vmatprep.subr.bf16.mxu0 %v3574
    %3630 = vmatpush1.bf16.msra.mxu0 %v3573
    %3631 = vmatprep.subr.bf16.mxu0 %v3578
    %3632 = vmatpush1.bf16.msra.mxu0 %v3577
    %3633 = vmatprep.subr.bf16.mxu0 %v3582
    %3634 = vmatpush1.bf16.msra.mxu0 %v3581
    %3635 = vmatprep.subr.bf16.mxu0 %v3586
    %3636 = vmatpush1.bf16.msra.mxu0 %v3585
    %3637 = vmatprep.subr.bf16.mxu0 0
    %3638 = vmatpush1.bf16.msra.mxu0 0
    %3639 = vmatprep.subr.bf16.mxu0 0
    %3640 = vmatpush1.bf16.msra.mxu0 0
    %3641 = vmatprep.subr.bf16.mxu0 0
    %3642 = vmatpush1.bf16.msra.mxu0 0
    %3643 = vmatprep.subr.bf16.mxu0 0
    %3644 = vmatpush1.bf16.msra.mxu0 0
    %3645 = vmatprep.subr.bf16.mxu0 0
    %3646 = vmatpush1.bf16.msra.mxu0 0
    %3647 = vmatprep.subr.bf16.mxu0 0
    %3648 = vmatpush1.bf16.msra.mxu0 0
    %3649 = vmatprep.subr.bf16.mxu0 0
    %3650 = vmatpush1.bf16.msra.mxu0 0
    %3651 = vmatprep.subr.bf16.mxu0 0
    %3652 = vmatpush1.bf16.msra.mxu0 0
    %3653 = vmatprep.mubr.bf16.mxu0 0
    %3654 = vmatmul.mubr.bf16.gmra.mrb[0].mxu0 %v3113
    %v3655 = vpop.f32.mrb[0].mxu0
    %v3656 = vadd.f32 0.0, %v3655
    %v3657 = vpop.f32.mrb[0].mxu0
    %v3658 = vadd.f32 0.0, %v3657
    %v3659 = vpop.f32.mrb[0].mxu0
    %v3660 = vpop.f32.mrb[0].mxu0
    %3661 = vdwg.mxu0
    %3662 = vmatprep.subr.bf16.mxu0 %v3560
    %3663 = vmatpush1.bf16.msra.mxu0 %v3559
    %3664 = vmatprep.subr.bf16.mxu0 %v3564
    %3665 = vmatpush1.bf16.msra.mxu0 %v3563
    %3666 = vmatprep.subr.bf16.mxu0 %v3568
    %3667 = vmatpush1.bf16.msra.mxu0 %v3567
    %3668 = vmatprep.subr.bf16.mxu0 %v3572
    %3669 = vmatpush1.bf16.msra.mxu0 %v3571
    %3670 = vmatprep.subr.bf16.mxu0 %v3576
    %3671 = vmatpush1.bf16.msra.mxu0 %v3575
    %3672 = vmatprep.subr.bf16.mxu0 %v3580
    %3673 = vmatpush1.bf16.msra.mxu0 %v3579
    %3674 = vmatprep.subr.bf16.mxu0 %v3584
    %3675 = vmatpush1.bf16.msra.mxu0 %v3583
    %3676 = vmatprep.subr.bf16.mxu0 %v3588
    %3677 = vmatpush1.bf16.msra.mxu0 %v3587
    %3678 = vmatprep.subr.bf16.mxu0 0
    %3679 = vmatpush1.bf16.msra.mxu0 0
    %3680 = vmatprep.subr.bf16.mxu0 0
    %3681 = vmatpush1.bf16.msra.mxu0 0
    %3682 = vmatprep.subr.bf16.mxu0 0
    %3683 = vmatpush1.bf16.msra.mxu0 0
    %3684 = vmatprep.subr.bf16.mxu0 0
    %3685 = vmatpush1.bf16.msra.mxu0 0
    %3686 = vmatprep.subr.bf16.mxu0 0
    %3687 = vmatpush1.bf16.msra.mxu0 0
    %3688 = vmatprep.subr.bf16.mxu0 0
    %3689 = vmatpush1.bf16.msra.mxu0 0
    %3690 = vmatprep.subr.bf16.mxu0 0
    %3691 = vmatpush1.bf16.msra.mxu0 0
    %3692 = vmatprep.subr.bf16.mxu0 0
    %3693 = vmatpush1.bf16.msra.mxu0 0
    %3694 = vmatprep.mubr.bf16.mxu0 0
    %3695 = vmatmul.mubr.bf16.gmra.mrb[0].mxu0 %v3113
    %v3696 = vpop.f32.mrb[0].mxu0
    %v3697 = vadd.f32 0.0, %v3696
    %v3698 = vpop.f32.mrb[0].mxu0
    %v3699 = vadd.f32 0.0, %v3698
    %v3700 = vpop.f32.mrb[0].mxu0
    %v3701 = vpop.f32.mrb[0].mxu0
    %3702 = vdwg.mxu0
    %v3703 = vadd.f32 %v3425, %v3656
    %v3704 = vadd.f32 %v3426, %v3658
    %v3705 = vadd.f32 %v3427, %v3697
    %v3706 = vadd.f32 %v3428, %v3699
    %v3707 = vxor.u32 %v3703, 2147483648
    %v3708 = vxor.u32 %v3704, 2147483648
    %v3709 = vxor.u32 %v3705, 2147483648
    %v3710 = vmul.f32 %v3707, 1.442695
    %v3711 = vpow.pop %v3710
    %v3712 = vmul.f32 %v3708, 1.442695
    %v3713 = vpow.pop %v3712
    %v3714 = vmul.f32 %v3709, 1.442695
    %v3715 = vpow.pop %v3714
    %v3716 = vadd.f32 %v3711, 1.0
    %v3717 = vadd.f32 %v3713, 1.0
    %v3718 = vadd.f32 %v3715, 1.0
    %v3719 = vrcp.pop %v3716
    %v3720 = vmul.f32 1.0, %v3719
    %v3721 = vrcp.pop %v3717
    %v3722 = vmul.f32 1.0, %v3721
    %v3723 = vrcp.pop %v3718
    %v3724 = vmul.f32 1.0, %v3723
    %v3725 = vtanh.pop %v3706
    %v3726 = vmul.f32 %v3722, %v3112
    %v3727 = vmul.f32 %v3720, %v3725
    %v3728 = vadd.f32 %v3726, %v3727
    %v3729 = vtanh.pop %v3728
    %v3730 = vmul.f32 %v3724, %v3729
    %v3731 = vmul.f32 %v3730, %v2785
    %v3732 = vsub.f32 1.0, %v552
    %3734 = vset.pattern.permute.xlu0 0
    %3735 = vperm.xlu0 %3734, %v3732
    %v3736 = vpop.permute.xlu0 %3735
    %v3738 = vmul.f32 %v3109, %v3736
    %v3739 = vadd.f32 %v3731, %v3738
    %v3740 = vmul.f32 %v3728, %v2785
    %v3741 = vmul.f32 %v3112, %v3736
    %v3742 = vadd.f32 %v3740, %v3741
    %v3743 = vpack.c.bf16 %v3739, %v3739
    %3744 = vst [vmem:[#allocation9 + $0x1c] sm:$0xf] %v3743
    %v3745 = vld [vmem:[#allocation2 + $0xa0] sm:$0xff]
    %v3746 = vld [vmem:[#allocation2 + $0xa8] sm:$0xff]
    %v3747 = vld [vmem:[#allocation2 + $0xb0] sm:$0xff]
    %v3748 = vld [vmem:[#allocation2 + $0xb8] sm:$0xff]
    %v3749 = vpack.c.bf16 %v3421, %v3421
    %v3750 = vld [vmem:[#allocation4] sm:$0xff]
    %v3751 = vld [vmem:[#allocation4 + $0x8] sm:$0xff]
    %v3752 = vld [vmem:[#allocation4 + $0x10] sm:$0xff]
    %v3753 = vld [vmem:[#allocation4 + $0x18] sm:$0xff]
    %v3754 = vld [vmem:[#allocation4 + $0x20] sm:$0xff]
    %v3755 = vld [vmem:[#allocation4 + $0x28] sm:$0xff]
    %v3756 = vld [vmem:[#allocation4 + $0x30] sm:$0xff]
    %v3757 = vld [vmem:[#allocation4 + $0x38] sm:$0xff]
    %v3758 = vld [vmem:[#allocation4 + $0x40] sm:$0xff]
    %v3759 = vld [vmem:[#allocation4 + $0x48] sm:$0xff]
    %v3760 = vld [vmem:[#allocation4 + $0x50] sm:$0xff]
    %v3761 = vld [vmem:[#allocation4 + $0x58] sm:$0xff]
    %v3762 = vld [vmem:[#allocation4 + $0x60] sm:$0xff]
    %v3763 = vld [vmem:[#allocation4 + $0x68] sm:$0xff]
    %v3764 = vld [vmem:[#allocation4 + $0x70] sm:$0xff]
    %v3765 = vld [vmem:[#allocation4 + $0x78] sm:$0xff]
    %v3766 = vld [vmem:[#allocation4 + $0x80] sm:$0xff]
    %v3767 = vld [vmem:[#allocation4 + $0x88] sm:$0xff]
    %v3768 = vld [vmem:[#allocation4 + $0x90] sm:$0xff]
    %v3769 = vld [vmem:[#allocation4 + $0x98] sm:$0xff]
    %v3770 = vld [vmem:[#allocation4 + $0xa0] sm:$0xff]
    %v3771 = vld [vmem:[#allocation4 + $0xa8] sm:$0xff]
    %v3772 = vld [vmem:[#allocation4 + $0xb0] sm:$0xff]
    %v3773 = vld [vmem:[#allocation4 + $0xb8] sm:$0xff]
    %v3774 = vld [vmem:[#allocation4 + $0xc0] sm:$0xff]
    %v3775 = vld [vmem:[#allocation4 + $0xc8] sm:$0xff]
    %v3776 = vld [vmem:[#allocation4 + $0xd0] sm:$0xff]
    %v3777 = vld [vmem:[#allocation4 + $0xd8] sm:$0xff]
    %v3778 = vld [vmem:[#allocation4 + $0xe0] sm:$0xff]
    %v3779 = vld [vmem:[#allocation4 + $0xe8] sm:$0xff]
    %v3780 = vld [vmem:[#allocation4 + $0xf0] sm:$0xff]
    %v3781 = vld [vmem:[#allocation4 + $0xf8] sm:$0xff]
    %v3814 = vunpack.c.l.b16 %v3750
    %v3815 = vunpack.c.h.b16 %v3750
    %v3816 = vunpack.c.l.b16 %v3751
    %v3817 = vunpack.c.h.b16 %v3751
    %v3818 = vunpack.c.l.b16 %v3752
    %v3819 = vunpack.c.h.b16 %v3752
    %v3820 = vunpack.c.l.b16 %v3753
    %v3821 = vunpack.c.h.b16 %v3753
    %v3822 = vunpack.c.l.b16 %v3754
    %v3823 = vunpack.c.h.b16 %v3754
    %v3824 = vunpack.c.l.b16 %v3755
    %v3825 = vunpack.c.h.b16 %v3755
    %v3826 = vunpack.c.l.b16 %v3756
    %v3827 = vunpack.c.h.b16 %v3756
    %v3828 = vunpack.c.l.b16 %v3757
    %v3829 = vunpack.c.h.b16 %v3757
    %v3830 = vunpack.c.l.b16 %v3758
    %v3831 = vunpack.c.h.b16 %v3758
    %v3832 = vunpack.c.l.b16 %v3759
    %v3833 = vunpack.c.h.b16 %v3759
    %v3834 = vunpack.c.l.b16 %v3760
    %v3835 = vunpack.c.h.b16 %v3760
    %v3836 = vunpack.c.l.b16 %v3761
    %v3837 = vunpack.c.h.b16 %v3761
    %v3838 = vunpack.c.l.b16 %v3762
    %v3839 = vunpack.c.h.b16 %v3762
    %v3840 = vunpack.c.l.b16 %v3763
    %v3841 = vunpack.c.h.b16 %v3763
    %v3842 = vunpack.c.l.b16 %v3764
    %v3843 = vunpack.c.h.b16 %v3764
    %v3844 = vunpack.c.l.b16 %v3765
    %v3845 = vunpack.c.h.b16 %v3765
    %v3846 = vunpack.c.l.b16 %v3766
    %v3847 = vunpack.c.h.b16 %v3766
    %v3848 = vunpack.c.l.b16 %v3767
    %v3849 = vunpack.c.h.b16 %v3767
    %v3850 = vunpack.c.l.b16 %v3768
    %v3851 = vunpack.c.h.b16 %v3768
    %v3852 = vunpack.c.l.b16 %v3769
    %v3853 = vunpack.c.h.b16 %v3769
    %v3854 = vunpack.c.l.b16 %v3770
    %v3855 = vunpack.c.h.b16 %v3770
    %v3856 = vunpack.c.l.b16 %v3771
    %v3857 = vunpack.c.h.b16 %v3771
    %v3858 = vunpack.c.l.b16 %v3772
    %v3859 = vunpack.c.h.b16 %v3772
    %v3860 = vunpack.c.l.b16 %v3773
    %v3861 = vunpack.c.h.b16 %v3773
    %v3862 = vunpack.c.l.b16 %v3774
    %v3863 = vunpack.c.h.b16 %v3774
    %v3864 = vunpack.c.l.b16 %v3775
    %v3865 = vunpack.c.h.b16 %v3775
    %v3866 = vunpack.c.l.b16 %v3776
    %v3867 = vunpack.c.h.b16 %v3776
    %v3868 = vunpack.c.l.b16 %v3777
    %v3869 = vunpack.c.h.b16 %v3777
    %v3870 = vunpack.c.l.b16 %v3778
    %v3871 = vunpack.c.h.b16 %v3778
    %v3872 = vunpack.c.l.b16 %v3779
    %v3873 = vunpack.c.h.b16 %v3779
    %v3874 = vunpack.c.l.b16 %v3780
    %v3875 = vunpack.c.h.b16 %v3780
    %v3876 = vunpack.c.l.b16 %v3781
    %v3877 = vunpack.c.h.b16 %v3781
    %v3878 = vpack.c.b16 %v3818, %v3814
    %v3879 = vpack.c.b16 %v3819, %v3815
    %v3880 = vpack.c.b16 %v3820, %v3816
    %v3881 = vpack.c.b16 %v3821, %v3817
    %v3882 = vpack.c.b16 %v3826, %v3822
    %v3883 = vpack.c.b16 %v3827, %v3823
    %v3884 = vpack.c.b16 %v3828, %v3824
    %v3885 = vpack.c.b16 %v3829, %v3825
    %v3886 = vpack.c.b16 %v3834, %v3830
    %v3887 = vpack.c.b16 %v3835, %v3831
    %v3888 = vpack.c.b16 %v3836, %v3832
    %v3889 = vpack.c.b16 %v3837, %v3833
    %v3890 = vpack.c.b16 %v3842, %v3838
    %v3891 = vpack.c.b16 %v3843, %v3839
    %v3892 = vpack.c.b16 %v3844, %v3840
    %v3893 = vpack.c.b16 %v3845, %v3841
    %v3894 = vpack.c.b16 %v3850, %v3846
    %v3895 = vpack.c.b16 %v3851, %v3847
    %v3896 = vpack.c.b16 %v3852, %v3848
    %v3897 = vpack.c.b16 %v3853, %v3849
    %v3898 = vpack.c.b16 %v3858, %v3854
    %v3899 = vpack.c.b16 %v3859, %v3855
    %v3900 = vpack.c.b16 %v3860, %v3856
    %v3901 = vpack.c.b16 %v3861, %v3857
    %v3902 = vpack.c.b16 %v3866, %v3862
    %v3903 = vpack.c.b16 %v3867, %v3863
    %v3904 = vpack.c.b16 %v3868, %v3864
    %v3905 = vpack.c.b16 %v3869, %v3865
    %v3906 = vpack.c.b16 %v3874, %v3870
    %v3907 = vpack.c.b16 %v3875, %v3871
    %v3908 = vpack.c.b16 %v3876, %v3872
    %v3909 = vpack.c.b16 %v3877, %v3873
    %3942 = vmatprep.subr.bf16.mxu0 %v3879
    %3943 = vmatpush1.bf16.msra.mxu0 %v3878
    %3944 = vmatprep.subr.bf16.mxu0 %v3883
    %3945 = vmatpush1.bf16.msra.mxu0 %v3882
    %3946 = vmatprep.subr.bf16.mxu0 %v3887
    %3947 = vmatpush1.bf16.msra.mxu0 %v3886
    %3948 = vmatprep.subr.bf16.mxu0 %v3891
    %3949 = vmatpush1.bf16.msra.mxu0 %v3890
    %3950 = vmatprep.subr.bf16.mxu0 %v3895
    %3951 = vmatpush1.bf16.msra.mxu0 %v3894
    %3952 = vmatprep.subr.bf16.mxu0 %v3899
    %3953 = vmatpush1.bf16.msra.mxu0 %v3898
    %3954 = vmatprep.subr.bf16.mxu0 %v3903
    %3955 = vmatpush1.bf16.msra.mxu0 %v3902
    %3956 = vmatprep.subr.bf16.mxu0 %v3907
    %3957 = vmatpush1.bf16.msra.mxu0 %v3906
    %3958 = vmatprep.subr.bf16.mxu0 0
    %3959 = vmatpush1.bf16.msra.mxu0 0
    %3960 = vmatprep.subr.bf16.mxu0 0
    %3961 = vmatpush1.bf16.msra.mxu0 0
    %3962 = vmatprep.subr.bf16.mxu0 0
    %3963 = vmatpush1.bf16.msra.mxu0 0
    %3964 = vmatprep.subr.bf16.mxu0 0
    %3965 = vmatpush1.bf16.msra.mxu0 0
    %3966 = vmatprep.subr.bf16.mxu0 0
    %3967 = vmatpush1.bf16.msra.mxu0 0
    %3968 = vmatprep.subr.bf16.mxu0 0
    %3969 = vmatpush1.bf16.msra.mxu0 0
    %3970 = vmatprep.subr.bf16.mxu0 0
    %3971 = vmatpush1.bf16.msra.mxu0 0
    %3972 = vmatprep.subr.bf16.mxu0 0
    %3973 = vmatpush1.bf16.msra.mxu0 0
    %3974 = vmatprep.mubr.bf16.mxu0 0
    %3975 = vmatmul.mubr.bf16.gmra.mrb[0].mxu0 %v3749
    %v3976 = vpop.f32.mrb[0].mxu0
    %v3977 = vadd.f32 0.0, %v3976
    %v3978 = vpop.f32.mrb[0].mxu0
    %v3979 = vadd.f32 0.0, %v3978
    %v3980 = vpop.f32.mrb[0].mxu0
    %v3981 = vpop.f32.mrb[0].mxu0
    %3982 = vdwg.mxu0
    %3983 = vmatprep.subr.bf16.mxu0 %v3881
    %3984 = vmatpush1.bf16.msra.mxu0 %v3880
    %3985 = vmatprep.subr.bf16.mxu0 %v3885
    %3986 = vmatpush1.bf16.msra.mxu0 %v3884
    %3987 = vmatprep.subr.bf16.mxu0 %v3889
    %3988 = vmatpush1.bf16.msra.mxu0 %v3888
    %3989 = vmatprep.subr.bf16.mxu0 %v3893
    %3990 = vmatpush1.bf16.msra.mxu0 %v3892
    %3991 = vmatprep.subr.bf16.mxu0 %v3897
    %3992 = vmatpush1.bf16.msra.mxu0 %v3896
    %3993 = vmatprep.subr.bf16.mxu0 %v3901
    %3994 = vmatpush1.bf16.msra.mxu0 %v3900
    %3995 = vmatprep.subr.bf16.mxu0 %v3905
    %3996 = vmatpush1.bf16.msra.mxu0 %v3904
    %3997 = vmatprep.subr.bf16.mxu0 %v3909
    %3998 = vmatpush1.bf16.msra.mxu0 %v3908
    %3999 = vmatprep.subr.bf16.mxu0 0
    %4000 = vmatpush1.bf16.msra.mxu0 0
    %4001 = vmatprep.subr.bf16.mxu0 0
    %4002 = vmatpush1.bf16.msra.mxu0 0
    %4003 = vmatprep.subr.bf16.mxu0 0
    %4004 = vmatpush1.bf16.msra.mxu0 0
    %4005 = vmatprep.subr.bf16.mxu0 0
    %4006 = vmatpush1.bf16.msra.mxu0 0
    %4007 = vmatprep.subr.bf16.mxu0 0
    %4008 = vmatpush1.bf16.msra.mxu0 0
    %4009 = vmatprep.subr.bf16.mxu0 0
    %4010 = vmatpush1.bf16.msra.mxu0 0
    %4011 = vmatprep.subr.bf16.mxu0 0
    %4012 = vmatpush1.bf16.msra.mxu0 0
    %4013 = vmatprep.subr.bf16.mxu0 0
    %4014 = vmatpush1.bf16.msra.mxu0 0
    %4015 = vmatprep.mubr.bf16.mxu0 0
    %4016 = vmatmul.mubr.bf16.gmra.mrb[0].mxu0 %v3749
    %v4017 = vpop.f32.mrb[0].mxu0
    %v4018 = vadd.f32 0.0, %v4017
    %v4019 = vpop.f32.mrb[0].mxu0
    %v4020 = vadd.f32 0.0, %v4019
    %v4021 = vpop.f32.mrb[0].mxu0
    %v4022 = vpop.f32.mrb[0].mxu0
    %4023 = vdwg.mxu0
    %v4024 = vadd.f32 %v3745, %v3977
    %v4025 = vadd.f32 %v3746, %v3979
    %v4026 = vadd.f32 %v3747, %v4018
    %v4027 = vadd.f32 %v3748, %v4020
    %v4028 = vxor.u32 %v4024, 2147483648
    %v4029 = vxor.u32 %v4025, 2147483648
    %v4030 = vxor.u32 %v4026, 2147483648
    %v4031 = vmul.f32 %v4028, 1.442695
    %v4032 = vpow.pop %v4031
    %v4033 = vmul.f32 %v4029, 1.442695
    %v4034 = vpow.pop %v4033
    %v4035 = vmul.f32 %v4030, 1.442695
    %v4036 = vpow.pop %v4035
    %v4037 = vadd.f32 %v4032, 1.0
    %v4038 = vadd.f32 %v4034, 1.0
    %v4039 = vadd.f32 %v4036, 1.0
    %v4040 = vrcp.pop %v4037
    %v4041 = vmul.f32 1.0, %v4040
    %v4042 = vrcp.pop %v4038
    %v4043 = vmul.f32 1.0, %v4042
    %v4044 = vrcp.pop %v4039
    %v4045 = vmul.f32 1.0, %v4044
    %v4046 = vtanh.pop %v4027
    %v4047 = vmul.f32 %v4043, %v3419
    %v4048 = vmul.f32 %v4041, %v4046
    %v4049 = vadd.f32 %v4047, %v4048
    %v4050 = vtanh.pop %v4049
    %v4051 = vmul.f32 %v4045, %v4050
    %v4052 = vmul.f32 %v4051, %v2459
    %v4053 = vpack.c.bf16 %v4052, %v4052
    %4054 = vst [vmem:[#allocation9 + $0x28] sm:$0xf] %v4053
    %v4055 = vld [vmem:[#allocation3 + $0x40] sm:$0xff]
    %v4056 = vld [vmem:[#allocation3 + $0x48] sm:$0xff]
    %v4057 = vld [vmem:[#allocation3 + $0x50] sm:$0xff]
    %v4058 = vld [vmem:[#allocation3 + $0x58] sm:$0xff]
    %v4059 = vld [vmem:[#allocation7] sm:$0xff]
    %v4060 = vld [vmem:[#allocation7 + $0x8] sm:$0xff]
    %v4061 = vld [vmem:[#allocation7 + $0x10] sm:$0xff]
    %v4062 = vld [vmem:[#allocation7 + $0x18] sm:$0xff]
    %v4063 = vld [vmem:[#allocation7 + $0x20] sm:$0xff]
    %v4064 = vld [vmem:[#allocation7 + $0x28] sm:$0xff]
    %v4065 = vld [vmem:[#allocation7 + $0x30] sm:$0xff]
    %v4066 = vld [vmem:[#allocation7 + $0x38] sm:$0xff]
    %v4067 = vld [vmem:[#allocation7 + $0x40] sm:$0xff]
    %v4068 = vld [vmem:[#allocation7 + $0x48] sm:$0xff]
    %v4069 = vld [vmem:[#allocation7 + $0x50] sm:$0xff]
    %v4070 = vld [vmem:[#allocation7 + $0x58] sm:$0xff]
    %v4071 = vld [vmem:[#allocation7 + $0x60] sm:$0xff]
    %v4072 = vld [vmem:[#allocation7 + $0x68] sm:$0xff]
    %v4073 = vld [vmem:[#allocation7 + $0x70] sm:$0xff]
    %v4074 = vld [vmem:[#allocation7 + $0x78] sm:$0xff]
    %v4075 = vld [vmem:[#allocation7 + $0x80] sm:$0xff]
    %v4076 = vld [vmem:[#allocation7 + $0x88] sm:$0xff]
    %v4077 = vld [vmem:[#allocation7 + $0x90] sm:$0xff]
    %v4078 = vld [vmem:[#allocation7 + $0x98] sm:$0xff]
    %v4079 = vld [vmem:[#allocation7 + $0xa0] sm:$0xff]
    %v4080 = vld [vmem:[#allocation7 + $0xa8] sm:$0xff]
    %v4081 = vld [vmem:[#allocation7 + $0xb0] sm:$0xff]
    %v4082 = vld [vmem:[#allocation7 + $0xb8] sm:$0xff]
    %v4083 = vld [vmem:[#allocation7 + $0xc0] sm:$0xff]
    %v4084 = vld [vmem:[#allocation7 + $0xc8] sm:$0xff]
    %v4085 = vld [vmem:[#allocation7 + $0xd0] sm:$0xff]
    %v4086 = vld [vmem:[#allocation7 + $0xd8] sm:$0xff]
    %v4087 = vld [vmem:[#allocation7 + $0xe0] sm:$0xff]
    %v4088 = vld [vmem:[#allocation7 + $0xe8] sm:$0xff]
    %v4089 = vld [vmem:[#allocation7 + $0xf0] sm:$0xff]
    %v4090 = vld [vmem:[#allocation7 + $0xf8] sm:$0xff]
    %v4123 = vunpack.c.l.b16 %v4059
    %v4124 = vunpack.c.h.b16 %v4059
    %v4125 = vunpack.c.l.b16 %v4060
    %v4126 = vunpack.c.h.b16 %v4060
    %v4127 = vunpack.c.l.b16 %v4061
    %v4128 = vunpack.c.h.b16 %v4061
    %v4129 = vunpack.c.l.b16 %v4062
    %v4130 = vunpack.c.h.b16 %v4062
    %v4131 = vunpack.c.l.b16 %v4063
    %v4132 = vunpack.c.h.b16 %v4063
    %v4133 = vunpack.c.l.b16 %v4064
    %v4134 = vunpack.c.h.b16 %v4064
    %v4135 = vunpack.c.l.b16 %v4065
    %v4136 = vunpack.c.h.b16 %v4065
    %v4137 = vunpack.c.l.b16 %v4066
    %v4138 = vunpack.c.h.b16 %v4066
    %v4139 = vunpack.c.l.b16 %v4067
    %v4140 = vunpack.c.h.b16 %v4067
    %v4141 = vunpack.c.l.b16 %v4068
    %v4142 = vunpack.c.h.b16 %v4068
    %v4143 = vunpack.c.l.b16 %v4069
    %v4144 = vunpack.c.h.b16 %v4069
    %v4145 = vunpack.c.l.b16 %v4070
    %v4146 = vunpack.c.h.b16 %v4070
    %v4147 = vunpack.c.l.b16 %v4071
    %v4148 = vunpack.c.h.b16 %v4071
    %v4149 = vunpack.c.l.b16 %v4072
    %v4150 = vunpack.c.h.b16 %v4072
    %v4151 = vunpack.c.l.b16 %v4073
    %v4152 = vunpack.c.h.b16 %v4073
    %v4153 = vunpack.c.l.b16 %v4074
    %v4154 = vunpack.c.h.b16 %v4074
    %v4155 = vunpack.c.l.b16 %v4075
    %v4156 = vunpack.c.h.b16 %v4075
    %v4157 = vunpack.c.l.b16 %v4076
    %v4158 = vunpack.c.h.b16 %v4076
    %v4159 = vunpack.c.l.b16 %v4077
    %v4160 = vunpack.c.h.b16 %v4077
    %v4161 = vunpack.c.l.b16 %v4078
    %v4162 = vunpack.c.h.b16 %v4078
    %v4163 = vunpack.c.l.b16 %v4079
    %v4164 = vunpack.c.h.b16 %v4079
    %v4165 = vunpack.c.l.b16 %v4080
    %v4166 = vunpack.c.h.b16 %v4080
    %v4167 = vunpack.c.l.b16 %v4081
    %v4168 = vunpack.c.h.b16 %v4081
    %v4169 = vunpack.c.l.b16 %v4082
    %v4170 = vunpack.c.h.b16 %v4082
    %v4171 = vunpack.c.l.b16 %v4083
    %v4172 = vunpack.c.h.b16 %v4083
    %v4173 = vunpack.c.l.b16 %v4084
    %v4174 = vunpack.c.h.b16 %v4084
    %v4175 = vunpack.c.l.b16 %v4085
    %v4176 = vunpack.c.h.b16 %v4085
    %v4177 = vunpack.c.l.b16 %v4086
    %v4178 = vunpack.c.h.b16 %v4086
    %v4179 = vunpack.c.l.b16 %v4087
    %v4180 = vunpack.c.h.b16 %v4087
    %v4181 = vunpack.c.l.b16 %v4088
    %v4182 = vunpack.c.h.b16 %v4088
    %v4183 = vunpack.c.l.b16 %v4089
    %v4184 = vunpack.c.h.b16 %v4089
    %v4185 = vunpack.c.l.b16 %v4090
    %v4186 = vunpack.c.h.b16 %v4090
    %v4187 = vpack.c.b16 %v4127, %v4123
    %v4188 = vpack.c.b16 %v4128, %v4124
    %v4189 = vpack.c.b16 %v4129, %v4125
    %v4190 = vpack.c.b16 %v4130, %v4126
    %v4191 = vpack.c.b16 %v4135, %v4131
    %v4192 = vpack.c.b16 %v4136, %v4132
    %v4193 = vpack.c.b16 %v4137, %v4133
    %v4194 = vpack.c.b16 %v4138, %v4134
    %v4195 = vpack.c.b16 %v4143, %v4139
    %v4196 = vpack.c.b16 %v4144, %v4140
    %v4197 = vpack.c.b16 %v4145, %v4141
    %v4198 = vpack.c.b16 %v4146, %v4142
    %v4199 = vpack.c.b16 %v4151, %v4147
    %v4200 = vpack.c.b16 %v4152, %v4148
    %v4201 = vpack.c.b16 %v4153, %v4149
    %v4202 = vpack.c.b16 %v4154, %v4150
    %v4203 = vpack.c.b16 %v4159, %v4155
    %v4204 = vpack.c.b16 %v4160, %v4156
    %v4205 = vpack.c.b16 %v4161, %v4157
    %v4206 = vpack.c.b16 %v4162, %v4158
    %v4207 = vpack.c.b16 %v4167, %v4163
    %v4208 = vpack.c.b16 %v4168, %v4164
    %v4209 = vpack.c.b16 %v4169, %v4165
    %v4210 = vpack.c.b16 %v4170, %v4166
    %v4211 = vpack.c.b16 %v4175, %v4171
    %v4212 = vpack.c.b16 %v4176, %v4172
    %v4213 = vpack.c.b16 %v4177, %v4173
    %v4214 = vpack.c.b16 %v4178, %v4174
    %v4215 = vpack.c.b16 %v4183, %v4179
    %v4216 = vpack.c.b16 %v4184, %v4180
    %v4217 = vpack.c.b16 %v4185, %v4181
    %v4218 = vpack.c.b16 %v4186, %v4182
    %4251 = vmatprep.subr.bf16.mxu0 %v4188
    %4252 = vmatpush1.bf16.msra.mxu0 %v4187
    %4253 = vmatprep.subr.bf16.mxu0 %v4192
    %4254 = vmatpush1.bf16.msra.mxu0 %v4191
    %4255 = vmatprep.subr.bf16.mxu0 %v4196
    %4256 = vmatpush1.bf16.msra.mxu0 %v4195
    %4257 = vmatprep.subr.bf16.mxu0 %v4200
    %4258 = vmatpush1.bf16.msra.mxu0 %v4199
    %4259 = vmatprep.subr.bf16.mxu0 %v4204
    %4260 = vmatpush1.bf16.msra.mxu0 %v4203
    %4261 = vmatprep.subr.bf16.mxu0 %v4208
    %4262 = vmatpush1.bf16.msra.mxu0 %v4207
    %4263 = vmatprep.subr.bf16.mxu0 %v4212
    %4264 = vmatpush1.bf16.msra.mxu0 %v4211
    %4265 = vmatprep.subr.bf16.mxu0 %v4216
    %4266 = vmatpush1.bf16.msra.mxu0 %v4215
    %4267 = vmatprep.subr.bf16.mxu0 0
    %4268 = vmatpush1.bf16.msra.mxu0 0
    %4269 = vmatprep.subr.bf16.mxu0 0
    %4270 = vmatpush1.bf16.msra.mxu0 0
    %4271 = vmatprep.subr.bf16.mxu0 0
    %4272 = vmatpush1.bf16.msra.mxu0 0
    %4273 = vmatprep.subr.bf16.mxu0 0
    %4274 = vmatpush1.bf16.msra.mxu0 0
    %4275 = vmatprep.subr.bf16.mxu0 0
    %4276 = vmatpush1.bf16.msra.mxu0 0
    %4277 = vmatprep.subr.bf16.mxu0 0
    %4278 = vmatpush1.bf16.msra.mxu0 0
    %4279 = vmatprep.subr.bf16.mxu0 0
    %4280 = vmatpush1.bf16.msra.mxu0 0
    %4281 = vmatprep.subr.bf16.mxu0 0
    %4282 = vmatpush1.bf16.msra.mxu0 0
    %4283 = vmatprep.mubr.bf16.mxu0 0
    %4284 = vmatmul.mubr.bf16.gmra.mrb[0].mxu0 %v3743
    %v4285 = vpop.f32.mrb[0].mxu0
    %v4286 = vadd.f32 0.0, %v4285
    %v4287 = vpop.f32.mrb[0].mxu0
    %v4288 = vadd.f32 0.0, %v4287
    %v4289 = vpop.f32.mrb[0].mxu0
    %v4290 = vpop.f32.mrb[0].mxu0
    %4291 = vdwg.mxu0
    %4292 = vmatprep.subr.bf16.mxu0 %v4190
    %4293 = vmatpush1.bf16.msra.mxu0 %v4189
    %4294 = vmatprep.subr.bf16.mxu0 %v4194
    %4295 = vmatpush1.bf16.msra.mxu0 %v4193
    %4296 = vmatprep.subr.bf16.mxu0 %v4198
    %4297 = vmatpush1.bf16.msra.mxu0 %v4197
    %4298 = vmatprep.subr.bf16.mxu0 %v4202
    %4299 = vmatpush1.bf16.msra.mxu0 %v4201
    %4300 = vmatprep.subr.bf16.mxu0 %v4206
    %4301 = vmatpush1.bf16.msra.mxu0 %v4205
    %4302 = vmatprep.subr.bf16.mxu0 %v4210
    %4303 = vmatpush1.bf16.msra.mxu0 %v4209
    %4304 = vmatprep.subr.bf16.mxu0 %v4214
    %4305 = vmatpush1.bf16.msra.mxu0 %v4213
    %4306 = vmatprep.subr.bf16.mxu0 %v4218
    %4307 = vmatpush1.bf16.msra.mxu0 %v4217
    %4308 = vmatprep.subr.bf16.mxu0 0
    %4309 = vmatpush1.bf16.msra.mxu0 0
    %4310 = vmatprep.subr.bf16.mxu0 0
    %4311 = vmatpush1.bf16.msra.mxu0 0
    %4312 = vmatprep.subr.bf16.mxu0 0
    %4313 = vmatpush1.bf16.msra.mxu0 0
    %4314 = vmatprep.subr.bf16.mxu0 0
    %4315 = vmatpush1.bf16.msra.mxu0 0
    %4316 = vmatprep.subr.bf16.mxu0 0
    %4317 = vmatpush1.bf16.msra.mxu0 0
    %4318 = vmatprep.subr.bf16.mxu0 0
    %4319 = vmatpush1.bf16.msra.mxu0 0
    %4320 = vmatprep.subr.bf16.mxu0 0
    %4321 = vmatpush1.bf16.msra.mxu0 0
    %4322 = vmatprep.subr.bf16.mxu0 0
    %4323 = vmatpush1.bf16.msra.mxu0 0
    %4324 = vmatprep.mubr.bf16.mxu0 0
    %4325 = vmatmul.mubr.bf16.gmra.mrb[0].mxu0 %v3743
    %v4326 = vpop.f32.mrb[0].mxu0
    %v4327 = vadd.f32 0.0, %v4326
    %v4328 = vpop.f32.mrb[0].mxu0
    %v4329 = vadd.f32 0.0, %v4328
    %v4330 = vpop.f32.mrb[0].mxu0
    %v4331 = vpop.f32.mrb[0].mxu0
    %4332 = vdwg.mxu0
    %v4333 = vadd.f32 %v4055, %v4286
    %v4334 = vadd.f32 %v4056, %v4288
    %v4335 = vadd.f32 %v4057, %v4327
    %v4336 = vadd.f32 %v4058, %v4329
    %v4337 = vxor.u32 %v4333, 2147483648
    %v4338 = vxor.u32 %v4334, 2147483648
    %v4339 = vxor.u32 %v4335, 2147483648
    %v4340 = vmul.f32 %v4337, 1.442695
    %v4341 = vpow.pop %v4340
    %v4342 = vmul.f32 %v4338, 1.442695
    %v4343 = vpow.pop %v4342
    %v4344 = vmul.f32 %v4339, 1.442695
    %v4345 = vpow.pop %v4344
    %v4346 = vadd.f32 %v4341, 1.0
    %v4347 = vadd.f32 %v4343, 1.0
    %v4348 = vadd.f32 %v4345, 1.0
    %v4349 = vrcp.pop %v4346
    %v4350 = vmul.f32 1.0, %v4349
    %v4351 = vrcp.pop %v4347
    %v4352 = vmul.f32 1.0, %v4351
    %v4353 = vrcp.pop %v4348
    %v4354 = vmul.f32 1.0, %v4353
    %v4355 = vtanh.pop %v4336
    %v4356 = vmul.f32 %v4352, %v3742
    %v4357 = vmul.f32 %v4350, %v4355
    %v4358 = vadd.f32 %v4356, %v4357
    %v4359 = vtanh.pop %v4358
    %v4360 = vmul.f32 %v4354, %v4359
    %v4361 = vmul.f32 %v4360, %v2145
    %v4362 = vsub.f32 1.0, %v551
    %4364 = vset.pattern.permute.xlu0 0
    %4365 = vperm.xlu0 %4364, %v4362
    %v4366 = vpop.permute.xlu0 %4365
    %v4368 = vmul.f32 %v3739, %v4366
    %v4369 = vadd.f32 %v4361, %v4368
    %v4370 = vmul.f32 %v4358, %v2145
    %v4371 = vmul.f32 %v3742, %v4366
    %v4372 = vadd.f32 %v4370, %v4371
    %v4373 = vpack.c.bf16 %v4369, %v4369
    %4374 = vst [vmem:[#allocation9 + $0x14] sm:$0xf] %v4373
    %v4375 = vld [vmem:[#allocation2 + $0xc0] sm:$0xff]
    %v4376 = vld [vmem:[#allocation2 + $0xc8] sm:$0xff]
    %v4377 = vld [vmem:[#allocation2 + $0xd0] sm:$0xff]
    %v4378 = vld [vmem:[#allocation2 + $0xd8] sm:$0xff]
    %v4379 = vpack.c.bf16 %v4051, %v4051
    %v4380 = vld [vmem:[#allocation4] sm:$0xff]
    %v4381 = vld [vmem:[#allocation4 + $0x8] sm:$0xff]
    %v4382 = vld [vmem:[#allocation4 + $0x10] sm:$0xff]
    %v4383 = vld [vmem:[#allocation4 + $0x18] sm:$0xff]
    %v4384 = vld [vmem:[#allocation4 + $0x20] sm:$0xff]
    %v4385 = vld [vmem:[#allocation4 + $0x28] sm:$0xff]
    %v4386 = vld [vmem:[#allocation4 + $0x30] sm:$0xff]
    %v4387 = vld [vmem:[#allocation4 + $0x38] sm:$0xff]
    %v4388 = vld [vmem:[#allocation4 + $0x40] sm:$0xff]
    %v4389 = vld [vmem:[#allocation4 + $0x48] sm:$0xff]
    %v4390 = vld [vmem:[#allocation4 + $0x50] sm:$0xff]
    %v4391 = vld [vmem:[#allocation4 + $0x58] sm:$0xff]
    %v4392 = vld [vmem:[#allocation4 + $0x60] sm:$0xff]
    %v4393 = vld [vmem:[#allocation4 + $0x68] sm:$0xff]
    %v4394 = vld [vmem:[#allocation4 + $0x70] sm:$0xff]
    %v4395 = vld [vmem:[#allocation4 + $0x78] sm:$0xff]
    %v4396 = vld [vmem:[#allocation4 + $0x80] sm:$0xff]
    %v4397 = vld [vmem:[#allocation4 + $0x88] sm:$0xff]
    %v4398 = vld [vmem:[#allocation4 + $0x90] sm:$0xff]
    %v4399 = vld [vmem:[#allocation4 + $0x98] sm:$0xff]
    %v4400 = vld [vmem:[#allocation4 + $0xa0] sm:$0xff]
    %v4401 = vld [vmem:[#allocation4 + $0xa8] sm:$0xff]
    %v4402 = vld [vmem:[#allocation4 + $0xb0] sm:$0xff]
    %v4403 = vld [vmem:[#allocation4 + $0xb8] sm:$0xff]
    %v4404 = vld [vmem:[#allocation4 + $0xc0] sm:$0xff]
    %v4405 = vld [vmem:[#allocation4 + $0xc8] sm:$0xff]
    %v4406 = vld [vmem:[#allocation4 + $0xd0] sm:$0xff]
    %v4407 = vld [vmem:[#allocation4 + $0xd8] sm:$0xff]
    %v4408 = vld [vmem:[#allocation4 + $0xe0] sm:$0xff]
    %v4409 = vld [vmem:[#allocation4 + $0xe8] sm:$0xff]
    %v4410 = vld [vmem:[#allocation4 + $0xf0] sm:$0xff]
    %v4411 = vld [vmem:[#allocation4 + $0xf8] sm:$0xff]
    %v4444 = vunpack.c.l.b16 %v4380
    %v4445 = vunpack.c.h.b16 %v4380
    %v4446 = vunpack.c.l.b16 %v4381
    %v4447 = vunpack.c.h.b16 %v4381
    %v4448 = vunpack.c.l.b16 %v4382
    %v4449 = vunpack.c.h.b16 %v4382
    %v4450 = vunpack.c.l.b16 %v4383
    %v4451 = vunpack.c.h.b16 %v4383
    %v4452 = vunpack.c.l.b16 %v4384
    %v4453 = vunpack.c.h.b16 %v4384
    %v4454 = vunpack.c.l.b16 %v4385
    %v4455 = vunpack.c.h.b16 %v4385
    %v4456 = vunpack.c.l.b16 %v4386
    %v4457 = vunpack.c.h.b16 %v4386
    %v4458 = vunpack.c.l.b16 %v4387
    %v4459 = vunpack.c.h.b16 %v4387
    %v4460 = vunpack.c.l.b16 %v4388
    %v4461 = vunpack.c.h.b16 %v4388
    %v4462 = vunpack.c.l.b16 %v4389
    %v4463 = vunpack.c.h.b16 %v4389
    %v4464 = vunpack.c.l.b16 %v4390
    %v4465 = vunpack.c.h.b16 %v4390
    %v4466 = vunpack.c.l.b16 %v4391
    %v4467 = vunpack.c.h.b16 %v4391
    %v4468 = vunpack.c.l.b16 %v4392
    %v4469 = vunpack.c.h.b16 %v4392
    %v4470 = vunpack.c.l.b16 %v4393
    %v4471 = vunpack.c.h.b16 %v4393
    %v4472 = vunpack.c.l.b16 %v4394
    %v4473 = vunpack.c.h.b16 %v4394
    %v4474 = vunpack.c.l.b16 %v4395
    %v4475 = vunpack.c.h.b16 %v4395
    %v4476 = vunpack.c.l.b16 %v4396
    %v4477 = vunpack.c.h.b16 %v4396
    %v4478 = vunpack.c.l.b16 %v4397
    %v4479 = vunpack.c.h.b16 %v4397
    %v4480 = vunpack.c.l.b16 %v4398
    %v4481 = vunpack.c.h.b16 %v4398
    %v4482 = vunpack.c.l.b16 %v4399
    %v4483 = vunpack.c.h.b16 %v4399
    %v4484 = vunpack.c.l.b16 %v4400
    %v4485 = vunpack.c.h.b16 %v4400
    %v4486 = vunpack.c.l.b16 %v4401
    %v4487 = vunpack.c.h.b16 %v4401
    %v4488 = vunpack.c.l.b16 %v4402
    %v4489 = vunpack.c.h.b16 %v4402
    %v4490 = vunpack.c.l.b16 %v4403
    %v4491 = vunpack.c.h.b16 %v4403
    %v4492 = vunpack.c.l.b16 %v4404
    %v4493 = vunpack.c.h.b16 %v4404
    %v4494 = vunpack.c.l.b16 %v4405
    %v4495 = vunpack.c.h.b16 %v4405
    %v4496 = vunpack.c.l.b16 %v4406
    %v4497 = vunpack.c.h.b16 %v4406
    %v4498 = vunpack.c.l.b16 %v4407
    %v4499 = vunpack.c.h.b16 %v4407
    %v4500 = vunpack.c.l.b16 %v4408
    %v4501 = vunpack.c.h.b16 %v4408
    %v4502 = vunpack.c.l.b16 %v4409
    %v4503 = vunpack.c.h.b16 %v4409
    %v4504 = vunpack.c.l.b16 %v4410
    %v4505 = vunpack.c.h.b16 %v4410
    %v4506 = vunpack.c.l.b16 %v4411
    %v4507 = vunpack.c.h.b16 %v4411
    %v4508 = vpack.c.b16 %v4448, %v4444
    %v4509 = vpack.c.b16 %v4449, %v4445
    %v4510 = vpack.c.b16 %v4450, %v4446
    %v4511 = vpack.c.b16 %v4451, %v4447
    %v4512 = vpack.c.b16 %v4456, %v4452
    %v4513 = vpack.c.b16 %v4457, %v4453
    %v4514 = vpack.c.b16 %v4458, %v4454
    %v4515 = vpack.c.b16 %v4459, %v4455
    %v4516 = vpack.c.b16 %v4464, %v4460
    %v4517 = vpack.c.b16 %v4465, %v4461
    %v4518 = vpack.c.b16 %v4466, %v4462
    %v4519 = vpack.c.b16 %v4467, %v4463
    %v4520 = vpack.c.b16 %v4472, %v4468
    %v4521 = vpack.c.b16 %v4473, %v4469
    %v4522 = vpack.c.b16 %v4474, %v4470
    %v4523 = vpack.c.b16 %v4475, %v4471
    %v4524 = vpack.c.b16 %v4480, %v4476
    %v4525 = vpack.c.b16 %v4481, %v4477
    %v4526 = vpack.c.b16 %v4482, %v4478
    %v4527 = vpack.c.b16 %v4483, %v4479
    %v4528 = vpack.c.b16 %v4488, %v4484
    %v4529 = vpack.c.b16 %v4489, %v4485
    %v4530 = vpack.c.b16 %v4490, %v4486
    %v4531 = vpack.c.b16 %v4491, %v4487
    %v4532 = vpack.c.b16 %v4496, %v4492
    %v4533 = vpack.c.b16 %v4497, %v4493
    %v4534 = vpack.c.b16 %v4498, %v4494
    %v4535 = vpack.c.b16 %v4499, %v4495
    %v4536 = vpack.c.b16 %v4504, %v4500
    %v4537 = vpack.c.b16 %v4505, %v4501
    %v4538 = vpack.c.b16 %v4506, %v4502
    %v4539 = vpack.c.b16 %v4507, %v4503
    %4572 = vmatprep.subr.bf16.mxu0 %v4509
    %4573 = vmatpush1.bf16.msra.mxu0 %v4508
    %4574 = vmatprep.subr.bf16.mxu0 %v4513
    %4575 = vmatpush1.bf16.msra.mxu0 %v4512
    %4576 = vmatprep.subr.bf16.mxu0 %v4517
    %4577 = vmatpush1.bf16.msra.mxu0 %v4516
    %4578 = vmatprep.subr.bf16.mxu0 %v4521
    %4579 = vmatpush1.bf16.msra.mxu0 %v4520
    %4580 = vmatprep.subr.bf16.mxu0 %v4525
    %4581 = vmatpush1.bf16.msra.mxu0 %v4524
    %4582 = vmatprep.subr.bf16.mxu0 %v4529
    %4583 = vmatpush1.bf16.msra.mxu0 %v4528
    %4584 = vmatprep.subr.bf16.mxu0 %v4533
    %4585 = vmatpush1.bf16.msra.mxu0 %v4532
    %4586 = vmatprep.subr.bf16.mxu0 %v4537
    %4587 = vmatpush1.bf16.msra.mxu0 %v4536
    %4588 = vmatprep.subr.bf16.mxu0 0
    %4589 = vmatpush1.bf16.msra.mxu0 0
    %4590 = vmatprep.subr.bf16.mxu0 0
    %4591 = vmatpush1.bf16.msra.mxu0 0
    %4592 = vmatprep.subr.bf16.mxu0 0
    %4593 = vmatpush1.bf16.msra.mxu0 0
    %4594 = vmatprep.subr.bf16.mxu0 0
    %4595 = vmatpush1.bf16.msra.mxu0 0
    %4596 = vmatprep.subr.bf16.mxu0 0
    %4597 = vmatpush1.bf16.msra.mxu0 0
    %4598 = vmatprep.subr.bf16.mxu0 0
    %4599 = vmatpush1.bf16.msra.mxu0 0
    %4600 = vmatprep.subr.bf16.mxu0 0
    %4601 = vmatpush1.bf16.msra.mxu0 0
    %4602 = vmatprep.subr.bf16.mxu0 0
    %4603 = vmatpush1.bf16.msra.mxu0 0
    %4604 = vmatprep.mubr.bf16.mxu0 0
    %4605 = vmatmul.mubr.bf16.gmra.mrb[0].mxu0 %v4379
    %v4606 = vpop.f32.mrb[0].mxu0
    %v4607 = vadd.f32 0.0, %v4606
    %v4608 = vpop.f32.mrb[0].mxu0
    %v4609 = vadd.f32 0.0, %v4608
    %v4610 = vpop.f32.mrb[0].mxu0
    %v4611 = vpop.f32.mrb[0].mxu0
    %4612 = vdwg.mxu0
    %4613 = vmatprep.subr.bf16.mxu0 %v4511
    %4614 = vmatpush1.bf16.msra.mxu0 %v4510
    %4615 = vmatprep.subr.bf16.mxu0 %v4515
    %4616 = vmatpush1.bf16.msra.mxu0 %v4514
    %4617 = vmatprep.subr.bf16.mxu0 %v4519
    %4618 = vmatpush1.bf16.msra.mxu0 %v4518
    %4619 = vmatprep.subr.bf16.mxu0 %v4523
    %4620 = vmatpush1.bf16.msra.mxu0 %v4522
    %4621 = vmatprep.subr.bf16.mxu0 %v4527
    %4622 = vmatpush1.bf16.msra.mxu0 %v4526
    %4623 = vmatprep.subr.bf16.mxu0 %v4531
    %4624 = vmatpush1.bf16.msra.mxu0 %v4530
    %4625 = vmatprep.subr.bf16.mxu0 %v4535
    %4626 = vmatpush1.bf16.msra.mxu0 %v4534
    %4627 = vmatprep.subr.bf16.mxu0 %v4539
    %4628 = vmatpush1.bf16.msra.mxu0 %v4538
    %4629 = vmatprep.subr.bf16.mxu0 0
    %4630 = vmatpush1.bf16.msra.mxu0 0
    %4631 = vmatprep.subr.bf16.mxu0 0
    %4632 = vmatpush1.bf16.msra.mxu0 0
    %4633 = vmatprep.subr.bf16.mxu0 0
    %4634 = vmatpush1.bf16.msra.mxu0 0
    %4635 = vmatprep.subr.bf16.mxu0 0
    %4636 = vmatpush1.bf16.msra.mxu0 0
    %4637 = vmatprep.subr.bf16.mxu0 0
    %4638 = vmatpush1.bf16.msra.mxu0 0
    %4639 = vmatprep.subr.bf16.mxu0 0
    %4640 = vmatpush1.bf16.msra.mxu0 0
    %4641 = vmatprep.subr.bf16.mxu0 0
    %4642 = vmatpush1.bf16.msra.mxu0 0
    %4643 = vmatprep.subr.bf16.mxu0 0
    %4644 = vmatpush1.bf16.msra.mxu0 0
    %4645 = vmatprep.mubr.bf16.mxu0 0
    %4646 = vmatmul.mubr.bf16.gmra.mrb[0].mxu0 %v4379
    %v4647 = vpop.f32.mrb[0].mxu0
    %v4648 = vadd.f32 0.0, %v4647
    %v4649 = vpop.f32.mrb[0].mxu0
    %v4650 = vadd.f32 0.0, %v4649
    %v4651 = vpop.f32.mrb[0].mxu0
    %v4652 = vpop.f32.mrb[0].mxu0
    %4653 = vdwg.mxu0
    %v4654 = vadd.f32 %v4375, %v4607
    %v4655 = vadd.f32 %v4376, %v4609
    %v4656 = vadd.f32 %v4377, %v4648
    %v4657 = vadd.f32 %v4378, %v4650
    %v4658 = vxor.u32 %v4654, 2147483648
    %v4659 = vxor.u32 %v4655, 2147483648
    %v4660 = vxor.u32 %v4656, 2147483648
    %v4661 = vmul.f32 %v4658, 1.442695
    %v4662 = vpow.pop %v4661
    %v4663 = vmul.f32 %v4659, 1.442695
    %v4664 = vpow.pop %v4663
    %v4665 = vmul.f32 %v4660, 1.442695
    %v4666 = vpow.pop %v4665
    %v4667 = vadd.f32 %v4662, 1.0
    %v4668 = vadd.f32 %v4664, 1.0
    %v4669 = vadd.f32 %v4666, 1.0
    %v4670 = vrcp.pop %v4667
    %v4671 = vmul.f32 1.0, %v4670
    %v4672 = vrcp.pop %v4668
    %v4673 = vmul.f32 1.0, %v4672
    %v4674 = vrcp.pop %v4669
    %v4675 = vmul.f32 1.0, %v4674
    %v4676 = vtanh.pop %v4657
    %v4677 = vmul.f32 %v4673, %v4049
    %v4678 = vmul.f32 %v4671, %v4676
    %v4679 = vadd.f32 %v4677, %v4678
    %v4680 = vtanh.pop %v4679
    %v4681 = vmul.f32 %v4675, %v4680
    %v4682 = vmul.f32 %v4681, %v1819
    %v4683 = vpack.c.bf16 %v4682, %v4682
    %4684 = vst [vmem:[#allocation9 + $0x30] sm:$0xf] %v4683
    %v4685 = vld [vmem:[#allocation3 + $0x20] sm:$0xff]
    %v4686 = vld [vmem:[#allocation3 + $0x28] sm:$0xff]
    %v4687 = vld [vmem:[#allocation3 + $0x30] sm:$0xff]
    %v4688 = vld [vmem:[#allocation3 + $0x38] sm:$0xff]
    %v4689 = vld [vmem:[#allocation7] sm:$0xff]
    %v4690 = vld [vmem:[#allocation7 + $0x8] sm:$0xff]
    %v4691 = vld [vmem:[#allocation7 + $0x10] sm:$0xff]
    %v4692 = vld [vmem:[#allocation7 + $0x18] sm:$0xff]
    %v4693 = vld [vmem:[#allocation7 + $0x20] sm:$0xff]
    %v4694 = vld [vmem:[#allocation7 + $0x28] sm:$0xff]
    %v4695 = vld [vmem:[#allocation7 + $0x30] sm:$0xff]
    %v4696 = vld [vmem:[#allocation7 + $0x38] sm:$0xff]
    %v4697 = vld [vmem:[#allocation7 + $0x40] sm:$0xff]
    %v4698 = vld [vmem:[#allocation7 + $0x48] sm:$0xff]
    %v4699 = vld [vmem:[#allocation7 + $0x50] sm:$0xff]
    %v4700 = vld [vmem:[#allocation7 + $0x58] sm:$0xff]
    %v4701 = vld [vmem:[#allocation7 + $0x60] sm:$0xff]
    %v4702 = vld [vmem:[#allocation7 + $0x68] sm:$0xff]
    %v4703 = vld [vmem:[#allocation7 + $0x70] sm:$0xff]
    %v4704 = vld [vmem:[#allocation7 + $0x78] sm:$0xff]
    %v4705 = vld [vmem:[#allocation7 + $0x80] sm:$0xff]
    %v4706 = vld [vmem:[#allocation7 + $0x88] sm:$0xff]
    %v4707 = vld [vmem:[#allocation7 + $0x90] sm:$0xff]
    %v4708 = vld [vmem:[#allocation7 + $0x98] sm:$0xff]
    %v4709 = vld [vmem:[#allocation7 + $0xa0] sm:$0xff]
    %v4710 = vld [vmem:[#allocation7 + $0xa8] sm:$0xff]
    %v4711 = vld [vmem:[#allocation7 + $0xb0] sm:$0xff]
    %v4712 = vld [vmem:[#allocation7 + $0xb8] sm:$0xff]
    %v4713 = vld [vmem:[#allocation7 + $0xc0] sm:$0xff]
    %v4714 = vld [vmem:[#allocation7 + $0xc8] sm:$0xff]
    %v4715 = vld [vmem:[#allocation7 + $0xd0] sm:$0xff]
    %v4716 = vld [vmem:[#allocation7 + $0xd8] sm:$0xff]
    %v4717 = vld [vmem:[#allocation7 + $0xe0] sm:$0xff]
    %v4718 = vld [vmem:[#allocation7 + $0xe8] sm:$0xff]
    %v4719 = vld [vmem:[#allocation7 + $0xf0] sm:$0xff]
    %v4720 = vld [vmem:[#allocation7 + $0xf8] sm:$0xff]
    %v4753 = vunpack.c.l.b16 %v4689
    %v4754 = vunpack.c.h.b16 %v4689
    %v4755 = vunpack.c.l.b16 %v4690
    %v4756 = vunpack.c.h.b16 %v4690
    %v4757 = vunpack.c.l.b16 %v4691
    %v4758 = vunpack.c.h.b16 %v4691
    %v4759 = vunpack.c.l.b16 %v4692
    %v4760 = vunpack.c.h.b16 %v4692
    %v4761 = vunpack.c.l.b16 %v4693
    %v4762 = vunpack.c.h.b16 %v4693
    %v4763 = vunpack.c.l.b16 %v4694
    %v4764 = vunpack.c.h.b16 %v4694
    %v4765 = vunpack.c.l.b16 %v4695
    %v4766 = vunpack.c.h.b16 %v4695
    %v4767 = vunpack.c.l.b16 %v4696
    %v4768 = vunpack.c.h.b16 %v4696
    %v4769 = vunpack.c.l.b16 %v4697
    %v4770 = vunpack.c.h.b16 %v4697
    %v4771 = vunpack.c.l.b16 %v4698
    %v4772 = vunpack.c.h.b16 %v4698
    %v4773 = vunpack.c.l.b16 %v4699
    %v4774 = vunpack.c.h.b16 %v4699
    %v4775 = vunpack.c.l.b16 %v4700
    %v4776 = vunpack.c.h.b16 %v4700
    %v4777 = vunpack.c.l.b16 %v4701
    %v4778 = vunpack.c.h.b16 %v4701
    %v4779 = vunpack.c.l.b16 %v4702
    %v4780 = vunpack.c.h.b16 %v4702
    %v4781 = vunpack.c.l.b16 %v4703
    %v4782 = vunpack.c.h.b16 %v4703
    %v4783 = vunpack.c.l.b16 %v4704
    %v4784 = vunpack.c.h.b16 %v4704
    %v4785 = vunpack.c.l.b16 %v4705
    %v4786 = vunpack.c.h.b16 %v4705
    %v4787 = vunpack.c.l.b16 %v4706
    %v4788 = vunpack.c.h.b16 %v4706
    %v4789 = vunpack.c.l.b16 %v4707
    %v4790 = vunpack.c.h.b16 %v4707
    %v4791 = vunpack.c.l.b16 %v4708
    %v4792 = vunpack.c.h.b16 %v4708
    %v4793 = vunpack.c.l.b16 %v4709
    %v4794 = vunpack.c.h.b16 %v4709
    %v4795 = vunpack.c.l.b16 %v4710
    %v4796 = vunpack.c.h.b16 %v4710
    %v4797 = vunpack.c.l.b16 %v4711
    %v4798 = vunpack.c.h.b16 %v4711
    %v4799 = vunpack.c.l.b16 %v4712
    %v4800 = vunpack.c.h.b16 %v4712
    %v4801 = vunpack.c.l.b16 %v4713
    %v4802 = vunpack.c.h.b16 %v4713
    %v4803 = vunpack.c.l.b16 %v4714
    %v4804 = vunpack.c.h.b16 %v4714
    %v4805 = vunpack.c.l.b16 %v4715
    %v4806 = vunpack.c.h.b16 %v4715
    %v4807 = vunpack.c.l.b16 %v4716
    %v4808 = vunpack.c.h.b16 %v4716
    %v4809 = vunpack.c.l.b16 %v4717
    %v4810 = vunpack.c.h.b16 %v4717
    %v4811 = vunpack.c.l.b16 %v4718
    %v4812 = vunpack.c.h.b16 %v4718
    %v4813 = vunpack.c.l.b16 %v4719
    %v4814 = vunpack.c.h.b16 %v4719
    %v4815 = vunpack.c.l.b16 %v4720
    %v4816 = vunpack.c.h.b16 %v4720
    %v4817 = vpack.c.b16 %v4757, %v4753
    %v4818 = vpack.c.b16 %v4758, %v4754
    %v4819 = vpack.c.b16 %v4759, %v4755
    %v4820 = vpack.c.b16 %v4760, %v4756
    %v4821 = vpack.c.b16 %v4765, %v4761
    %v4822 = vpack.c.b16 %v4766, %v4762
    %v4823 = vpack.c.b16 %v4767, %v4763
    %v4824 = vpack.c.b16 %v4768, %v4764
    %v4825 = vpack.c.b16 %v4773, %v4769
    %v4826 = vpack.c.b16 %v4774, %v4770
    %v4827 = vpack.c.b16 %v4775, %v4771
    %v4828 = vpack.c.b16 %v4776, %v4772
    %v4829 = vpack.c.b16 %v4781, %v4777
    %v4830 = vpack.c.b16 %v4782, %v4778
    %v4831 = vpack.c.b16 %v4783, %v4779
    %v4832 = vpack.c.b16 %v4784, %v4780
    %v4833 = vpack.c.b16 %v4789, %v4785
    %v4834 = vpack.c.b16 %v4790, %v4786
    %v4835 = vpack.c.b16 %v4791, %v4787
    %v4836 = vpack.c.b16 %v4792, %v4788
    %v4837 = vpack.c.b16 %v4797, %v4793
    %v4838 = vpack.c.b16 %v4798, %v4794
    %v4839 = vpack.c.b16 %v4799, %v4795
    %v4840 = vpack.c.b16 %v4800, %v4796
    %v4841 = vpack.c.b16 %v4805, %v4801
    %v4842 = vpack.c.b16 %v4806, %v4802
    %v4843 = vpack.c.b16 %v4807, %v4803
    %v4844 = vpack.c.b16 %v4808, %v4804
    %v4845 = vpack.c.b16 %v4813, %v4809
    %v4846 = vpack.c.b16 %v4814, %v4810
    %v4847 = vpack.c.b16 %v4815, %v4811
    %v4848 = vpack.c.b16 %v4816, %v4812
    %4881 = vmatprep.subr.bf16.mxu0 %v4818
    %4882 = vmatpush1.bf16.msra.mxu0 %v4817
    %4883 = vmatprep.subr.bf16.mxu0 %v4822
    %4884 = vmatpush1.bf16.msra.mxu0 %v4821
    %4885 = vmatprep.subr.bf16.mxu0 %v4826
    %4886 = vmatpush1.bf16.msra.mxu0 %v4825
    %4887 = vmatprep.subr.bf16.mxu0 %v4830
    %4888 = vmatpush1.bf16.msra.mxu0 %v4829
    %4889 = vmatprep.subr.bf16.mxu0 %v4834
    %4890 = vmatpush1.bf16.msra.mxu0 %v4833
    %4891 = vmatprep.subr.bf16.mxu0 %v4838
    %4892 = vmatpush1.bf16.msra.mxu0 %v4837
    %4893 = vmatprep.subr.bf16.mxu0 %v4842
    %4894 = vmatpush1.bf16.msra.mxu0 %v4841
    %4895 = vmatprep.subr.bf16.mxu0 %v4846
    %4896 = vmatpush1.bf16.msra.mxu0 %v4845
    %4897 = vmatprep.subr.bf16.mxu0 0
    %4898 = vmatpush1.bf16.msra.mxu0 0
    %4899 = vmatprep.subr.bf16.mxu0 0
    %4900 = vmatpush1.bf16.msra.mxu0 0
    %4901 = vmatprep.subr.bf16.mxu0 0
    %4902 = vmatpush1.bf16.msra.mxu0 0
    %4903 = vmatprep.subr.bf16.mxu0 0
    %4904 = vmatpush1.bf16.msra.mxu0 0
    %4905 = vmatprep.subr.bf16.mxu0 0
    %4906 = vmatpush1.bf16.msra.mxu0 0
    %4907 = vmatprep.subr.bf16.mxu0 0
    %4908 = vmatpush1.bf16.msra.mxu0 0
    %4909 = vmatprep.subr.bf16.mxu0 0
    %4910 = vmatpush1.bf16.msra.mxu0 0
    %4911 = vmatprep.subr.bf16.mxu0 0
    %4912 = vmatpush1.bf16.msra.mxu0 0
    %4913 = vmatprep.mubr.bf16.mxu0 0
    %4914 = vmatmul.mubr.bf16.gmra.mrb[0].mxu0 %v4373
    %v4915 = vpop.f32.mrb[0].mxu0
    %v4916 = vadd.f32 0.0, %v4915
    %v4917 = vpop.f32.mrb[0].mxu0
    %v4918 = vadd.f32 0.0, %v4917
    %v4919 = vpop.f32.mrb[0].mxu0
    %v4920 = vpop.f32.mrb[0].mxu0
    %4921 = vdwg.mxu0
    %4922 = vmatprep.subr.bf16.mxu0 %v4820
    %4923 = vmatpush1.bf16.msra.mxu0 %v4819
    %4924 = vmatprep.subr.bf16.mxu0 %v4824
    %4925 = vmatpush1.bf16.msra.mxu0 %v4823
    %4926 = vmatprep.subr.bf16.mxu0 %v4828
    %4927 = vmatpush1.bf16.msra.mxu0 %v4827
    %4928 = vmatprep.subr.bf16.mxu0 %v4832
    %4929 = vmatpush1.bf16.msra.mxu0 %v4831
    %4930 = vmatprep.subr.bf16.mxu0 %v4836
    %4931 = vmatpush1.bf16.msra.mxu0 %v4835
    %4932 = vmatprep.subr.bf16.mxu0 %v4840
    %4933 = vmatpush1.bf16.msra.mxu0 %v4839
    %4934 = vmatprep.subr.bf16.mxu0 %v4844
    %4935 = vmatpush1.bf16.msra.mxu0 %v4843
    %4936 = vmatprep.subr.bf16.mxu0 %v4848
    %4937 = vmatpush1.bf16.msra.mxu0 %v4847
    %4938 = vmatprep.subr.bf16.mxu0 0
    %4939 = vmatpush1.bf16.msra.mxu0 0
    %4940 = vmatprep.subr.bf16.mxu0 0
    %4941 = vmatpush1.bf16.msra.mxu0 0
    %4942 = vmatprep.subr.bf16.mxu0 0
    %4943 = vmatpush1.bf16.msra.mxu0 0
    %4944 = vmatprep.subr.bf16.mxu0 0
    %4945 = vmatpush1.bf16.msra.mxu0 0
    %4946 = vmatprep.subr.bf16.mxu0 0
    %4947 = vmatpush1.bf16.msra.mxu0 0
    %4948 = vmatprep.subr.bf16.mxu0 0
    %4949 = vmatpush1.bf16.msra.mxu0 0
    %4950 = vmatprep.subr.bf16.mxu0 0
    %4951 = vmatpush1.bf16.msra.mxu0 0
    %4952 = vmatprep.subr.bf16.mxu0 0
    %4953 = vmatpush1.bf16.msra.mxu0 0
    %4954 = vmatprep.mubr.bf16.mxu0 0
    %4955 = vmatmul.mubr.bf16.gmra.mrb[0].mxu0 %v4373
    %v4956 = vpop.f32.mrb[0].mxu0
    %v4957 = vadd.f32 0.0, %v4956
    %v4958 = vpop.f32.mrb[0].mxu0
    %v4959 = vadd.f32 0.0, %v4958
    %v4960 = vpop.f32.mrb[0].mxu0
    %v4961 = vpop.f32.mrb[0].mxu0
    %4962 = vdwg.mxu0
    %v4963 = vadd.f32 %v4685, %v4916
    %v4964 = vadd.f32 %v4686, %v4918
    %v4965 = vadd.f32 %v4687, %v4957
    %v4966 = vadd.f32 %v4688, %v4959
    %v4967 = vxor.u32 %v4963, 2147483648
    %v4968 = vxor.u32 %v4964, 2147483648
    %v4969 = vxor.u32 %v4965, 2147483648
    %v4970 = vmul.f32 %v4967, 1.442695
    %v4971 = vpow.pop %v4970
    %v4972 = vmul.f32 %v4968, 1.442695
    %v4973 = vpow.pop %v4972
    %v4974 = vmul.f32 %v4969, 1.442695
    %v4975 = vpow.pop %v4974
    %v4976 = vadd.f32 %v4971, 1.0
    %v4977 = vadd.f32 %v4973, 1.0
    %v4978 = vadd.f32 %v4975, 1.0
    %v4979 = vrcp.pop %v4976
    %v4980 = vmul.f32 1.0, %v4979
    %v4981 = vrcp.pop %v4977
    %v4982 = vmul.f32 1.0, %v4981
    %v4983 = vrcp.pop %v4978
    %v4984 = vmul.f32 1.0, %v4983
    %v4985 = vtanh.pop %v4966
    %v4986 = vmul.f32 %v4982, %v4372
    %v4987 = vmul.f32 %v4980, %v4985
    %v4988 = vadd.f32 %v4986, %v4987
    %v4989 = vtanh.pop %v4988
    %v4990 = vmul.f32 %v4984, %v4989
    %v4991 = vmul.f32 %v4990, %v1505
    %v4992 = vsub.f32 1.0, %v550
    %4994 = vset.pattern.permute.xlu0 0
    %4995 = vperm.xlu0 %4994, %v4992
    %v4996 = vpop.permute.xlu0 %4995
    %v4998 = vmul.f32 %v4369, %v4996
    %v4999 = vadd.f32 %v4991, %v4998
    %v5000 = vmul.f32 %v4988, %v1505
    %v5001 = vmul.f32 %v4372, %v4996
    %v5002 = vadd.f32 %v5000, %v5001
    %v5003 = vpack.c.bf16 %v4999, %v4999
    %5004 = vst [vmem:[#allocation9 + $0xc] sm:$0xf] %v5003
    %v5005 = vld [vmem:[#allocation2 + $0xe0] sm:$0xff]
    %v5006 = vld [vmem:[#allocation2 + $0xe8] sm:$0xff]
    %v5007 = vld [vmem:[#allocation2 + $0xf0] sm:$0xff]
    %v5008 = vld [vmem:[#allocation2 + $0xf8] sm:$0xff]
    %v5009 = vpack.c.bf16 %v4681, %v4681
    %v5010 = vld [vmem:[#allocation4] sm:$0xff]
    %v5011 = vld [vmem:[#allocation4 + $0x8] sm:$0xff]
    %v5012 = vld [vmem:[#allocation4 + $0x10] sm:$0xff]
    %v5013 = vld [vmem:[#allocation4 + $0x18] sm:$0xff]
    %v5014 = vld [vmem:[#allocation4 + $0x20] sm:$0xff]
    %v5015 = vld [vmem:[#allocation4 + $0x28] sm:$0xff]
    %v5016 = vld [vmem:[#allocation4 + $0x30] sm:$0xff]
    %v5017 = vld [vmem:[#allocation4 + $0x38] sm:$0xff]
    %v5018 = vld [vmem:[#allocation4 + $0x40] sm:$0xff]
    %v5019 = vld [vmem:[#allocation4 + $0x48] sm:$0xff]
    %v5020 = vld [vmem:[#allocation4 + $0x50] sm:$0xff]
    %v5021 = vld [vmem:[#allocation4 + $0x58] sm:$0xff]
    %v5022 = vld [vmem:[#allocation4 + $0x60] sm:$0xff]
    %v5023 = vld [vmem:[#allocation4 + $0x68] sm:$0xff]
    %v5024 = vld [vmem:[#allocation4 + $0x70] sm:$0xff]
    %v5025 = vld [vmem:[#allocation4 + $0x78] sm:$0xff]
    %v5026 = vld [vmem:[#allocation4 + $0x80] sm:$0xff]
    %v5027 = vld [vmem:[#allocation4 + $0x88] sm:$0xff]
    %v5028 = vld [vmem:[#allocation4 + $0x90] sm:$0xff]
    %v5029 = vld [vmem:[#allocation4 + $0x98] sm:$0xff]
    %v5030 = vld [vmem:[#allocation4 + $0xa0] sm:$0xff]
    %v5031 = vld [vmem:[#allocation4 + $0xa8] sm:$0xff]
    %v5032 = vld [vmem:[#allocation4 + $0xb0] sm:$0xff]
    %v5033 = vld [vmem:[#allocation4 + $0xb8] sm:$0xff]
    %v5034 = vld [vmem:[#allocation4 + $0xc0] sm:$0xff]
    %v5035 = vld [vmem:[#allocation4 + $0xc8] sm:$0xff]
    %v5036 = vld [vmem:[#allocation4 + $0xd0] sm:$0xff]
    %v5037 = vld [vmem:[#allocation4 + $0xd8] sm:$0xff]
    %v5038 = vld [vmem:[#allocation4 + $0xe0] sm:$0xff]
    %v5039 = vld [vmem:[#allocation4 + $0xe8] sm:$0xff]
    %v5040 = vld [vmem:[#allocation4 + $0xf0] sm:$0xff]
    %v5041 = vld [vmem:[#allocation4 + $0xf8] sm:$0xff]
    %v5074 = vunpack.c.l.b16 %v5010
    %v5075 = vunpack.c.h.b16 %v5010
    %v5076 = vunpack.c.l.b16 %v5011
    %v5077 = vunpack.c.h.b16 %v5011
    %v5078 = vunpack.c.l.b16 %v5012
    %v5079 = vunpack.c.h.b16 %v5012
    %v5080 = vunpack.c.l.b16 %v5013
    %v5081 = vunpack.c.h.b16 %v5013
    %v5082 = vunpack.c.l.b16 %v5014
    %v5083 = vunpack.c.h.b16 %v5014
    %v5084 = vunpack.c.l.b16 %v5015
    %v5085 = vunpack.c.h.b16 %v5015
    %v5086 = vunpack.c.l.b16 %v5016
    %v5087 = vunpack.c.h.b16 %v5016
    %v5088 = vunpack.c.l.b16 %v5017
    %v5089 = vunpack.c.h.b16 %v5017
    %v5090 = vunpack.c.l.b16 %v5018
    %v5091 = vunpack.c.h.b16 %v5018
    %v5092 = vunpack.c.l.b16 %v5019
    %v5093 = vunpack.c.h.b16 %v5019
    %v5094 = vunpack.c.l.b16 %v5020
    %v5095 = vunpack.c.h.b16 %v5020
    %v5096 = vunpack.c.l.b16 %v5021
    %v5097 = vunpack.c.h.b16 %v5021
    %v5098 = vunpack.c.l.b16 %v5022
    %v5099 = vunpack.c.h.b16 %v5022
    %v5100 = vunpack.c.l.b16 %v5023
    %v5101 = vunpack.c.h.b16 %v5023
    %v5102 = vunpack.c.l.b16 %v5024
    %v5103 = vunpack.c.h.b16 %v5024
    %v5104 = vunpack.c.l.b16 %v5025
    %v5105 = vunpack.c.h.b16 %v5025
    %v5106 = vunpack.c.l.b16 %v5026
    %v5107 = vunpack.c.h.b16 %v5026
    %v5108 = vunpack.c.l.b16 %v5027
    %v5109 = vunpack.c.h.b16 %v5027
    %v5110 = vunpack.c.l.b16 %v5028
    %v5111 = vunpack.c.h.b16 %v5028
    %v5112 = vunpack.c.l.b16 %v5029
    %v5113 = vunpack.c.h.b16 %v5029
    %v5114 = vunpack.c.l.b16 %v5030
    %v5115 = vunpack.c.h.b16 %v5030
    %v5116 = vunpack.c.l.b16 %v5031
    %v5117 = vunpack.c.h.b16 %v5031
    %v5118 = vunpack.c.l.b16 %v5032
    %v5119 = vunpack.c.h.b16 %v5032
    %v5120 = vunpack.c.l.b16 %v5033
    %v5121 = vunpack.c.h.b16 %v5033
    %v5122 = vunpack.c.l.b16 %v5034
    %v5123 = vunpack.c.h.b16 %v5034
    %v5124 = vunpack.c.l.b16 %v5035
    %v5125 = vunpack.c.h.b16 %v5035
    %v5126 = vunpack.c.l.b16 %v5036
    %v5127 = vunpack.c.h.b16 %v5036
    %v5128 = vunpack.c.l.b16 %v5037
    %v5129 = vunpack.c.h.b16 %v5037
    %v5130 = vunpack.c.l.b16 %v5038
    %v5131 = vunpack.c.h.b16 %v5038
    %v5132 = vunpack.c.l.b16 %v5039
    %v5133 = vunpack.c.h.b16 %v5039
    %v5134 = vunpack.c.l.b16 %v5040
    %v5135 = vunpack.c.h.b16 %v5040
    %v5136 = vunpack.c.l.b16 %v5041
    %v5137 = vunpack.c.h.b16 %v5041
    %v5138 = vpack.c.b16 %v5078, %v5074
    %v5139 = vpack.c.b16 %v5079, %v5075
    %v5140 = vpack.c.b16 %v5080, %v5076
    %v5141 = vpack.c.b16 %v5081, %v5077
    %v5142 = vpack.c.b16 %v5086, %v5082
    %v5143 = vpack.c.b16 %v5087, %v5083
    %v5144 = vpack.c.b16 %v5088, %v5084
    %v5145 = vpack.c.b16 %v5089, %v5085
    %v5146 = vpack.c.b16 %v5094, %v5090
    %v5147 = vpack.c.b16 %v5095, %v5091
    %v5148 = vpack.c.b16 %v5096, %v5092
    %v5149 = vpack.c.b16 %v5097, %v5093
    %v5150 = vpack.c.b16 %v5102, %v5098
    %v5151 = vpack.c.b16 %v5103, %v5099
    %v5152 = vpack.c.b16 %v5104, %v5100
    %v5153 = vpack.c.b16 %v5105, %v5101
    %v5154 = vpack.c.b16 %v5110, %v5106
    %v5155 = vpack.c.b16 %v5111, %v5107
    %v5156 = vpack.c.b16 %v5112, %v5108
    %v5157 = vpack.c.b16 %v5113, %v5109
    %v5158 = vpack.c.b16 %v5118, %v5114
    %v5159 = vpack.c.b16 %v5119, %v5115
    %v5160 = vpack.c.b16 %v5120, %v5116
    %v5161 = vpack.c.b16 %v5121, %v5117
    %v5162 = vpack.c.b16 %v5126, %v5122
    %v5163 = vpack.c.b16 %v5127, %v5123
    %v5164 = vpack.c.b16 %v5128, %v5124
    %v5165 = vpack.c.b16 %v5129, %v5125
    %v5166 = vpack.c.b16 %v5134, %v5130
    %v5167 = vpack.c.b16 %v5135, %v5131
    %v5168 = vpack.c.b16 %v5136, %v5132
    %v5169 = vpack.c.b16 %v5137, %v5133
    %5202 = vmatprep.subr.bf16.mxu0 %v5139
    %5203 = vmatpush1.bf16.msra.mxu0 %v5138
    %5204 = vmatprep.subr.bf16.mxu0 %v5143
    %5205 = vmatpush1.bf16.msra.mxu0 %v5142
    %5206 = vmatprep.subr.bf16.mxu0 %v5147
    %5207 = vmatpush1.bf16.msra.mxu0 %v5146
    %5208 = vmatprep.subr.bf16.mxu0 %v5151
    %5209 = vmatpush1.bf16.msra.mxu0 %v5150
    %5210 = vmatprep.subr.bf16.mxu0 %v5155
    %5211 = vmatpush1.bf16.msra.mxu0 %v5154
    %5212 = vmatprep.subr.bf16.mxu0 %v5159
    %5213 = vmatpush1.bf16.msra.mxu0 %v5158
    %5214 = vmatprep.subr.bf16.mxu0 %v5163
    %5215 = vmatpush1.bf16.msra.mxu0 %v5162
    %5216 = vmatprep.subr.bf16.mxu0 %v5167
    %5217 = vmatpush1.bf16.msra.mxu0 %v5166
    %5218 = vmatprep.subr.bf16.mxu0 0
    %5219 = vmatpush1.bf16.msra.mxu0 0
    %5220 = vmatprep.subr.bf16.mxu0 0
    %5221 = vmatpush1.bf16.msra.mxu0 0
    %5222 = vmatprep.subr.bf16.mxu0 0
    %5223 = vmatpush1.bf16.msra.mxu0 0
    %5224 = vmatprep.subr.bf16.mxu0 0
    %5225 = vmatpush1.bf16.msra.mxu0 0
    %5226 = vmatprep.subr.bf16.mxu0 0
    %5227 = vmatpush1.bf16.msra.mxu0 0
    %5228 = vmatprep.subr.bf16.mxu0 0
    %5229 = vmatpush1.bf16.msra.mxu0 0
    %5230 = vmatprep.subr.bf16.mxu0 0
    %5231 = vmatpush1.bf16.msra.mxu0 0
    %5232 = vmatprep.subr.bf16.mxu0 0
    %5233 = vmatpush1.bf16.msra.mxu0 0
    %5234 = vmatprep.mubr.bf16.mxu0 0
    %5235 = vmatmul.mubr.bf16.gmra.mrb[0].mxu0 %v5009
    %v5236 = vpop.f32.mrb[0].mxu0
    %v5237 = vadd.f32 0.0, %v5236
    %v5238 = vpop.f32.mrb[0].mxu0
    %v5239 = vadd.f32 0.0, %v5238
    %v5240 = vpop.f32.mrb[0].mxu0
    %v5241 = vpop.f32.mrb[0].mxu0
    %5242 = vdwg.mxu0
    %5243 = vmatprep.subr.bf16.mxu0 %v5141
    %5244 = vmatpush1.bf16.msra.mxu0 %v5140
    %5245 = vmatprep.subr.bf16.mxu0 %v5145
    %5246 = vmatpush1.bf16.msra.mxu0 %v5144
    %5247 = vmatprep.subr.bf16.mxu0 %v5149
    %5248 = vmatpush1.bf16.msra.mxu0 %v5148
    %5249 = vmatprep.subr.bf16.mxu0 %v5153
    %5250 = vmatpush1.bf16.msra.mxu0 %v5152
    %5251 = vmatprep.subr.bf16.mxu0 %v5157
    %5252 = vmatpush1.bf16.msra.mxu0 %v5156
    %5253 = vmatprep.subr.bf16.mxu0 %v5161
    %5254 = vmatpush1.bf16.msra.mxu0 %v5160
    %5255 = vmatprep.subr.bf16.mxu0 %v5165
    %5256 = vmatpush1.bf16.msra.mxu0 %v5164
    %5257 = vmatprep.subr.bf16.mxu0 %v5169
    %5258 = vmatpush1.bf16.msra.mxu0 %v5168
    %5259 = vmatprep.subr.bf16.mxu0 0
    %5260 = vmatpush1.bf16.msra.mxu0 0
    %5261 = vmatprep.subr.bf16.mxu0 0
    %5262 = vmatpush1.bf16.msra.mxu0 0
    %5263 = vmatprep.subr.bf16.mxu0 0
    %5264 = vmatpush1.bf16.msra.mxu0 0
    %5265 = vmatprep.subr.bf16.mxu0 0
    %5266 = vmatpush1.bf16.msra.mxu0 0
    %5267 = vmatprep.subr.bf16.mxu0 0
    %5268 = vmatpush1.bf16.msra.mxu0 0
    %5269 = vmatprep.subr.bf16.mxu0 0
    %5270 = vmatpush1.bf16.msra.mxu0 0
    %5271 = vmatprep.subr.bf16.mxu0 0
    %5272 = vmatpush1.bf16.msra.mxu0 0
    %5273 = vmatprep.subr.bf16.mxu0 0
    %5274 = vmatpush1.bf16.msra.mxu0 0
    %5275 = vmatprep.mubr.bf16.mxu0 0
    %5276 = vmatmul.mubr.bf16.gmra.mrb[0].mxu0 %v5009
    %v5277 = vpop.f32.mrb[0].mxu0
    %v5278 = vadd.f32 0.0, %v5277
    %v5279 = vpop.f32.mrb[0].mxu0
    %v5280 = vadd.f32 0.0, %v5279
    %v5281 = vpop.f32.mrb[0].mxu0
    %v5282 = vpop.f32.mrb[0].mxu0
    %5283 = vdwg.mxu0
    %v5284 = vadd.f32 %v5005, %v5237
    %v5285 = vadd.f32 %v5006, %v5239
    %v5286 = vadd.f32 %v5007, %v5278
    %v5287 = vadd.f32 %v5008, %v5280
    %v5288 = vxor.u32 %v5284, 2147483648
    %v5289 = vxor.u32 %v5285, 2147483648
    %v5290 = vxor.u32 %v5286, 2147483648
    %v5291 = vmul.f32 %v5288, 1.442695
    %v5292 = vpow.pop %v5291
    %v5293 = vmul.f32 %v5289, 1.442695
    %v5294 = vpow.pop %v5293
    %v5295 = vmul.f32 %v5290, 1.442695
    %v5296 = vpow.pop %v5295
    %v5297 = vadd.f32 %v5292, 1.0
    %v5298 = vadd.f32 %v5294, 1.0
    %v5299 = vadd.f32 %v5296, 1.0
    %v5300 = vrcp.pop %v5297
    %v5301 = vmul.f32 1.0, %v5300
    %v5302 = vrcp.pop %v5298
    %v5303 = vmul.f32 1.0, %v5302
    %v5304 = vrcp.pop %v5299
    %v5305 = vmul.f32 1.0, %v5304
    %v5306 = vtanh.pop %v5287
    %v5307 = vmul.f32 %v5303, %v4679
    %v5308 = vmul.f32 %v5301, %v5306
    %v5309 = vadd.f32 %v5307, %v5308
    %v5310 = vtanh.pop %v5309
    %v5311 = vmul.f32 %v5305, %v5310
    %v5312 = vmul.f32 %v5311, %v1180
    %v5313 = vpack.c.bf16 %v5312, %v5312
    %5314 = vst [vmem:[#allocation9 + $0x38] sm:$0xf] %v5313
    %v5315 = vld [vmem:[#allocation3] sm:$0xff]
    %v5316 = vld [vmem:[#allocation3 + $0x8] sm:$0xff]
    %v5317 = vld [vmem:[#allocation3 + $0x10] sm:$0xff]
    %v5318 = vld [vmem:[#allocation3 + $0x18] sm:$0xff]
    %v5319 = vld [vmem:[#allocation7] sm:$0xff]
    %v5320 = vld [vmem:[#allocation7 + $0x8] sm:$0xff]
    %v5321 = vld [vmem:[#allocation7 + $0x10] sm:$0xff]
    %v5322 = vld [vmem:[#allocation7 + $0x18] sm:$0xff]
    %v5323 = vld [vmem:[#allocation7 + $0x20] sm:$0xff]
    %v5324 = vld [vmem:[#allocation7 + $0x28] sm:$0xff]
    %v5325 = vld [vmem:[#allocation7 + $0x30] sm:$0xff]
    %v5326 = vld [vmem:[#allocation7 + $0x38] sm:$0xff]
    %v5327 = vld [vmem:[#allocation7 + $0x40] sm:$0xff]
    %v5328 = vld [vmem:[#allocation7 + $0x48] sm:$0xff]
    %v5329 = vld [vmem:[#allocation7 + $0x50] sm:$0xff]
    %v5330 = vld [vmem:[#allocation7 + $0x58] sm:$0xff]
    %v5331 = vld [vmem:[#allocation7 + $0x60] sm:$0xff]
    %v5332 = vld [vmem:[#allocation7 + $0x68] sm:$0xff]
    %v5333 = vld [vmem:[#allocation7 + $0x70] sm:$0xff]
    %v5334 = vld [vmem:[#allocation7 + $0x78] sm:$0xff]
    %v5335 = vld [vmem:[#allocation7 + $0x80] sm:$0xff]
    %v5336 = vld [vmem:[#allocation7 + $0x88] sm:$0xff]
    %v5337 = vld [vmem:[#allocation7 + $0x90] sm:$0xff]
    %v5338 = vld [vmem:[#allocation7 + $0x98] sm:$0xff]
    %v5339 = vld [vmem:[#allocation7 + $0xa0] sm:$0xff]
    %v5340 = vld [vmem:[#allocation7 + $0xa8] sm:$0xff]
    %v5341 = vld [vmem:[#allocation7 + $0xb0] sm:$0xff]
    %v5342 = vld [vmem:[#allocation7 + $0xb8] sm:$0xff]
    %v5343 = vld [vmem:[#allocation7 + $0xc0] sm:$0xff]
    %v5344 = vld [vmem:[#allocation7 + $0xc8] sm:$0xff]
    %v5345 = vld [vmem:[#allocation7 + $0xd0] sm:$0xff]
    %v5346 = vld [vmem:[#allocation7 + $0xd8] sm:$0xff]
    %v5347 = vld [vmem:[#allocation7 + $0xe0] sm:$0xff]
    %v5348 = vld [vmem:[#allocation7 + $0xe8] sm:$0xff]
    %v5349 = vld [vmem:[#allocation7 + $0xf0] sm:$0xff]
    %v5350 = vld [vmem:[#allocation7 + $0xf8] sm:$0xff]
    %v5383 = vunpack.c.l.b16 %v5319
    %v5384 = vunpack.c.h.b16 %v5319
    %v5385 = vunpack.c.l.b16 %v5320
    %v5386 = vunpack.c.h.b16 %v5320
    %v5387 = vunpack.c.l.b16 %v5321
    %v5388 = vunpack.c.h.b16 %v5321
    %v5389 = vunpack.c.l.b16 %v5322
    %v5390 = vunpack.c.h.b16 %v5322
    %v5391 = vunpack.c.l.b16 %v5323
    %v5392 = vunpack.c.h.b16 %v5323
    %v5393 = vunpack.c.l.b16 %v5324
    %v5394 = vunpack.c.h.b16 %v5324
    %v5395 = vunpack.c.l.b16 %v5325
    %v5396 = vunpack.c.h.b16 %v5325
    %v5397 = vunpack.c.l.b16 %v5326
    %v5398 = vunpack.c.h.b16 %v5326
    %v5399 = vunpack.c.l.b16 %v5327
    %v5400 = vunpack.c.h.b16 %v5327
    %v5401 = vunpack.c.l.b16 %v5328
    %v5402 = vunpack.c.h.b16 %v5328
    %v5403 = vunpack.c.l.b16 %v5329
    %v5404 = vunpack.c.h.b16 %v5329
    %v5405 = vunpack.c.l.b16 %v5330
    %v5406 = vunpack.c.h.b16 %v5330
    %v5407 = vunpack.c.l.b16 %v5331
    %v5408 = vunpack.c.h.b16 %v5331
    %v5409 = vunpack.c.l.b16 %v5332
    %v5410 = vunpack.c.h.b16 %v5332
    %v5411 = vunpack.c.l.b16 %v5333
    %v5412 = vunpack.c.h.b16 %v5333
    %v5413 = vunpack.c.l.b16 %v5334
    %v5414 = vunpack.c.h.b16 %v5334
    %v5415 = vunpack.c.l.b16 %v5335
    %v5416 = vunpack.c.h.b16 %v5335
    %v5417 = vunpack.c.l.b16 %v5336
    %v5418 = vunpack.c.h.b16 %v5336
    %v5419 = vunpack.c.l.b16 %v5337
    %v5420 = vunpack.c.h.b16 %v5337
    %v5421 = vunpack.c.l.b16 %v5338
    %v5422 = vunpack.c.h.b16 %v5338
    %v5423 = vunpack.c.l.b16 %v5339
    %v5424 = vunpack.c.h.b16 %v5339
    %v5425 = vunpack.c.l.b16 %v5340
    %v5426 = vunpack.c.h.b16 %v5340
    %v5427 = vunpack.c.l.b16 %v5341
    %v5428 = vunpack.c.h.b16 %v5341
    %v5429 = vunpack.c.l.b16 %v5342
    %v5430 = vunpack.c.h.b16 %v5342
    %v5431 = vunpack.c.l.b16 %v5343
    %v5432 = vunpack.c.h.b16 %v5343
    %v5433 = vunpack.c.l.b16 %v5344
    %v5434 = vunpack.c.h.b16 %v5344
    %v5435 = vunpack.c.l.b16 %v5345
    %v5436 = vunpack.c.h.b16 %v5345
    %v5437 = vunpack.c.l.b16 %v5346
    %v5438 = vunpack.c.h.b16 %v5346
    %v5439 = vunpack.c.l.b16 %v5347
    %v5440 = vunpack.c.h.b16 %v5347
    %v5441 = vunpack.c.l.b16 %v5348
    %v5442 = vunpack.c.h.b16 %v5348
    %v5443 = vunpack.c.l.b16 %v5349
    %v5444 = vunpack.c.h.b16 %v5349
    %v5445 = vunpack.c.l.b16 %v5350
    %v5446 = vunpack.c.h.b16 %v5350
    %v5447 = vpack.c.b16 %v5387, %v5383
    %v5448 = vpack.c.b16 %v5388, %v5384
    %v5449 = vpack.c.b16 %v5389, %v5385
    %v5450 = vpack.c.b16 %v5390, %v5386
    %v5451 = vpack.c.b16 %v5395, %v5391
    %v5452 = vpack.c.b16 %v5396, %v5392
    %v5453 = vpack.c.b16 %v5397, %v5393
    %v5454 = vpack.c.b16 %v5398, %v5394
    %v5455 = vpack.c.b16 %v5403, %v5399
    %v5456 = vpack.c.b16 %v5404, %v5400
    %v5457 = vpack.c.b16 %v5405, %v5401
    %v5458 = vpack.c.b16 %v5406, %v5402
    %v5459 = vpack.c.b16 %v5411, %v5407
    %v5460 = vpack.c.b16 %v5412, %v5408
    %v5461 = vpack.c.b16 %v5413, %v5409
    %v5462 = vpack.c.b16 %v5414, %v5410
    %v5463 = vpack.c.b16 %v5419, %v5415
    %v5464 = vpack.c.b16 %v5420, %v5416
    %v5465 = vpack.c.b16 %v5421, %v5417
    %v5466 = vpack.c.b16 %v5422, %v5418
    %v5467 = vpack.c.b16 %v5427, %v5423
    %v5468 = vpack.c.b16 %v5428, %v5424
    %v5469 = vpack.c.b16 %v5429, %v5425
    %v5470 = vpack.c.b16 %v5430, %v5426
    %v5471 = vpack.c.b16 %v5435, %v5431
    %v5472 = vpack.c.b16 %v5436, %v5432
    %v5473 = vpack.c.b16 %v5437, %v5433
    %v5474 = vpack.c.b16 %v5438, %v5434
    %v5475 = vpack.c.b16 %v5443, %v5439
    %v5476 = vpack.c.b16 %v5444, %v5440
    %v5477 = vpack.c.b16 %v5445, %v5441
    %v5478 = vpack.c.b16 %v5446, %v5442
    %5511 = vmatprep.subr.bf16.mxu0 %v5448
    %5512 = vmatpush1.bf16.msra.mxu0 %v5447
    %5513 = vmatprep.subr.bf16.mxu0 %v5452
    %5514 = vmatpush1.bf16.msra.mxu0 %v5451
    %5515 = vmatprep.subr.bf16.mxu0 %v5456
    %5516 = vmatpush1.bf16.msra.mxu0 %v5455
    %5517 = vmatprep.subr.bf16.mxu0 %v5460
    %5518 = vmatpush1.bf16.msra.mxu0 %v5459
    %5519 = vmatprep.subr.bf16.mxu0 %v5464
    %5520 = vmatpush1.bf16.msra.mxu0 %v5463
    %5521 = vmatprep.subr.bf16.mxu0 %v5468
    %5522 = vmatpush1.bf16.msra.mxu0 %v5467
    %5523 = vmatprep.subr.bf16.mxu0 %v5472
    %5524 = vmatpush1.bf16.msra.mxu0 %v5471
    %5525 = vmatprep.subr.bf16.mxu0 %v5476
    %5526 = vmatpush1.bf16.msra.mxu0 %v5475
    %5527 = vmatprep.subr.bf16.mxu0 0
    %5528 = vmatpush1.bf16.msra.mxu0 0
    %5529 = vmatprep.subr.bf16.mxu0 0
    %5530 = vmatpush1.bf16.msra.mxu0 0
    %5531 = vmatprep.subr.bf16.mxu0 0
    %5532 = vmatpush1.bf16.msra.mxu0 0
    %5533 = vmatprep.subr.bf16.mxu0 0
    %5534 = vmatpush1.bf16.msra.mxu0 0
    %5535 = vmatprep.subr.bf16.mxu0 0
    %5536 = vmatpush1.bf16.msra.mxu0 0
    %5537 = vmatprep.subr.bf16.mxu0 0
    %5538 = vmatpush1.bf16.msra.mxu0 0
    %5539 = vmatprep.subr.bf16.mxu0 0
    %5540 = vmatpush1.bf16.msra.mxu0 0
    %5541 = vmatprep.subr.bf16.mxu0 0
    %5542 = vmatpush1.bf16.msra.mxu0 0
    %5543 = vmatprep.mubr.bf16.mxu0 0
    %5544 = vmatmul.mubr.bf16.gmra.mrb[0].mxu0 %v5003
    %v5545 = vpop.f32.mrb[0].mxu0
    %v5546 = vadd.f32 0.0, %v5545
    %v5547 = vpop.f32.mrb[0].mxu0
    %v5548 = vadd.f32 0.0, %v5547
    %v5549 = vpop.f32.mrb[0].mxu0
    %v5550 = vpop.f32.mrb[0].mxu0
    %5551 = vdwg.mxu0
    %5552 = vmatprep.subr.bf16.mxu0 %v5450
    %5553 = vmatpush1.bf16.msra.mxu0 %v5449
    %5554 = vmatprep.subr.bf16.mxu0 %v5454
    %5555 = vmatpush1.bf16.msra.mxu0 %v5453
    %5556 = vmatprep.subr.bf16.mxu0 %v5458
    %5557 = vmatpush1.bf16.msra.mxu0 %v5457
    %5558 = vmatprep.subr.bf16.mxu0 %v5462
    %5559 = vmatpush1.bf16.msra.mxu0 %v5461
    %5560 = vmatprep.subr.bf16.mxu0 %v5466
    %5561 = vmatpush1.bf16.msra.mxu0 %v5465
    %5562 = vmatprep.subr.bf16.mxu0 %v5470
    %5563 = vmatpush1.bf16.msra.mxu0 %v5469
    %5564 = vmatprep.subr.bf16.mxu0 %v5474
    %5565 = vmatpush1.bf16.msra.mxu0 %v5473
    %5566 = vmatprep.subr.bf16.mxu0 %v5478
    %5567 = vmatpush1.bf16.msra.mxu0 %v5477
    %5568 = vmatprep.subr.bf16.mxu0 0
    %5569 = vmatpush1.bf16.msra.mxu0 0
    %5570 = vmatprep.subr.bf16.mxu0 0
    %5571 = vmatpush1.bf16.msra.mxu0 0
    %5572 = vmatprep.subr.bf16.mxu0 0
    %5573 = vmatpush1.bf16.msra.mxu0 0
    %5574 = vmatprep.subr.bf16.mxu0 0
    %5575 = vmatpush1.bf16.msra.mxu0 0
    %5576 = vmatprep.subr.bf16.mxu0 0
    %5577 = vmatpush1.bf16.msra.mxu0 0
    %5578 = vmatprep.subr.bf16.mxu0 0
    %5579 = vmatpush1.bf16.msra.mxu0 0
    %5580 = vmatprep.subr.bf16.mxu0 0
    %5581 = vmatpush1.bf16.msra.mxu0 0
    %5582 = vmatprep.subr.bf16.mxu0 0
    %5583 = vmatpush1.bf16.msra.mxu0 0
    %5584 = vmatprep.mubr.bf16.mxu0 0
    %5585 = vmatmul.mubr.bf16.gmra.mrb[0].mxu0 %v5003
    %v5586 = vpop.f32.mrb[0].mxu0
    %v5587 = vadd.f32 0.0, %v5586
    %v5588 = vpop.f32.mrb[0].mxu0
    %v5589 = vadd.f32 0.0, %v5588
    %v5590 = vpop.f32.mrb[0].mxu0
    %v5591 = vpop.f32.mrb[0].mxu0
    %5592 = vdwg.mxu0
    %v5593 = vadd.f32 %v5315, %v5546
    %v5594 = vadd.f32 %v5316, %v5548
    %v5595 = vadd.f32 %v5317, %v5587
    %v5596 = vadd.f32 %v5318, %v5589
    %v5597 = vxor.u32 %v5593, 2147483648
    %v5598 = vxor.u32 %v5594, 2147483648
    %v5599 = vxor.u32 %v5595, 2147483648
    %v5600 = vmul.f32 %v5597, 1.442695
    %v5601 = vpow.pop %v5600
    %v5602 = vmul.f32 %v5598, 1.442695
    %v5603 = vpow.pop %v5602
    %v5604 = vmul.f32 %v5599, 1.442695
    %v5605 = vpow.pop %v5604
    %v5606 = vadd.f32 %v5601, 1.0
    %v5607 = vadd.f32 %v5603, 1.0
    %v5608 = vadd.f32 %v5605, 1.0
    %v5609 = vrcp.pop %v5606
    %v5610 = vmul.f32 1.0, %v5609
    %v5611 = vrcp.pop %v5607
    %v5612 = vmul.f32 1.0, %v5611
    %v5613 = vrcp.pop %v5608
    %v5614 = vmul.f32 1.0, %v5613
    %v5615 = vtanh.pop %v5596
    %v5616 = vmul.f32 %v5612, %v5002
    %v5617 = vmul.f32 %v5610, %v5615
    %v5618 = vadd.f32 %v5616, %v5617
    %v5619 = vtanh.pop %v5618
    %v5620 = vmul.f32 %v5614, %v5619
    %v5621 = vmul.f32 %v5620, %v866
    %v5622 = vsub.f32 1.0, %v549
    %5624 = vset.pattern.permute.xlu0 0
    %5625 = vperm.xlu0 %5624, %v5622
    %v5626 = vpop.permute.xlu0 %5625
    %v5628 = vmul.f32 %v4999, %v5626
    %v5629 = vadd.f32 %v5621, %v5628
    %v5630 = vpack.c.bf16 %v5629, %v5629
    %5631 = vst [vmem:[#allocation9 + $0x4] sm:$0xf] %v5630
    // Predicated region
    $region42: #{tpu_custom_call.1} parent=1 // pred_check
      _
    $region43: #{tpu_custom_call.1} parent=1 // pred_check_branch
      %5633 = sbr.rel (0) target = $region45
    $region44: #{tpu_custom_call.1} parent=1 // pred_region
      %s5635 = ssub.s32 1024, 1024
      %5636 = vsyncadd [#allocation6], %s5635
      %s5637 = sshll.u32 [#allocation9], 4
      %s5638 = int_to_ptr.vmem [resolvable:$true] %s5637
      %5643 = dma.vmem_to_hbm [thread:$0]  %s5638, 1024, %s8, [#allocation6], 128, 128, 8
    $region45: #{tpu_custom_call.1} parent=1 // pred_fallthru
      _
    // Predicated region
    $region46: #{tpu_custom_call.1} parent=1 // pred_check
      _
    $region47: #{tpu_custom_call.1} parent=1 // pred_check_branch
      %5645 = sbr.rel (0) target = $region49
    $region48: #{tpu_custom_call.1} parent=1 // pred_region
      %5646 = dma.done [#allocation6], 1024
    $region49: #{tpu_custom_call.1} parent=1 // pred_fallthru
      _
    %5647 = vsyncpa [#allocation5], 1
    %5648 = vsyncpa [#allocation8], 1
    %5649 = vsyncpa [#allocation6], 1

</llo_original>
